<compile_context>
chip_gen: v6e
topology: v6e:2x2x1
jax: 0.10.0
libtpu: 0.0.40
codegen_flags: <defaults>
</compile_context>

<pallas_src>
import functools

import jax
import jax.numpy as jnp
from jax.experimental import pallas as pl
from jax.experimental.pallas import tpu as pltpu


def _align8(x: int) -> int:
    return (x + 7) // 8 * 8


# ----------------------------------------------------------------------------
# Pallas kernel: whole sequence in one invocation, xi carried as a loop value.
# ----------------------------------------------------------------------------
def psiu_seq_kernel(
    slab_ref,     # (R, wide) f32  packed parameter slab (resident)
    xi0_ref,      # (1, n_xi)      initial hidden state
    w_ref,        # (T, n)         all exogenous inputs
    u_ref,        # out (T, m)     control outputs (single writeback)
    xi_out_ref,   # out (1, n_xi)  final hidden state
    wterm_ref,    # scratch (T, wide) f32 — batched w-dependent term
    *,
    n: int,
    m: int,
    n_xi: int,
    l: int,
    offs,         # static row offsets into the slab
):
    f32 = jnp.float32
    ox, ow, oe, od, oy, ob = offs
    wide = l + n_xi + m
    T = w_ref.shape[0]

    # ---- hoisted: one load of the tiny parameter slab + all value slices ----
    P = slab_ref[...].astype(f32)
    Wx = P[ox:ox + n_xi, 0:wide]          # [C1.T | (Einv F).T | C2.T], base cols / Lambda
    Ww = P[ow:ow + n, 0:wide]             # [D12.T | (Einv B2).T | D22.T], base cols / Lambda
    We = P[oe:oe + l, 0:n_xi + m]         # [(Einv B1).T | D21.T]
    d11ts = P[od:od + l, 0:l]             # D11.T scaled: row i, col j = D11[j,i]/Lambda[j]
    eye = P[oy:oy + l, 0:l]               # identity rows (one-hot eps accumulation)
    bu = P[ob:ob + 1, 0:m]                # bias

    # ---- batched w term for ALL steps: one MXU dot, off the recurrence path ----
    wterm_ref[...] = jnp.dot(w_ref[...].astype(f32), Ww, preferred_element_type=f32)

    def step(t, xi):
        # One xi dot yields BOTH the pre-activation base and xi's contribution
        # to the fused [xi_next | u] output; add the precomputed w term.
        p = (jnp.dot(xi, Wx, preferred_element_type=f32)
             + wterm_ref[pl.ds(t, 1), :])                     # (1, wide)
        acc = p[:, 0:l]                                       # already scaled by 1/Lambda
        eps = jnp.zeros((1, l), f32)

        # Strictly-lower-triangular nonlinear solve: static unroll, axpy form.
        # No divide, no cross-lane reduction, no trailing vector tanh.
        for i in range(l):
            e_i = jnp.tanh(acc[0, i])
            acc = acc + e_i * d11ts[i:i + 1, :]               # on the serial chain
            eps = eps + e_i * eye[i:i + 1, :]                 # off-chain filler FMA

        out = p[:, l:wide] + jnp.dot(eps, We, preferred_element_type=f32)
        u = 8.0 + (12.8 - 8.0) * jax.nn.sigmoid(out[:, n_xi:n_xi + m] + bu)
        u_ref[pl.ds(t, 1), :] = u.astype(u_ref.dtype)         # VMEM row store
        return out[:, 0:n_xi]                                 # xi_next carried in vregs

    xi0 = xi0_ref[...].astype(f32)
    xi_last = jax.lax.fori_loop(0, T, step, xi0, unroll=T <= 16)
    xi_out_ref[...] = xi_last.astype(xi_out_ref.dtype)


# ----------------------------------------------------------------------------
# Parameter construction (set_model_param equivalent) — plain JAX glue
# ----------------------------------------------------------------------------
def make_params(key, n, m, n_xi, l, std=0.1):
    keys = jax.random.split(key, 8)
    X = jax.random.normal(keys[0], (2 * n_xi + l, 2 * n_xi + l), jnp.float32) * std
    Y = jax.random.normal(keys[1], (n_xi, n_xi), jnp.float32) * std
    B2 = jax.random.normal(keys[2], (n_xi, n), jnp.float32) * std
    C2 = jax.random.normal(keys[3], (m, n_xi), jnp.float32) * std
    D21 = jax.random.normal(keys[4], (m, l), jnp.float32) * std
    D22 = jax.random.normal(keys[5], (m, n), jnp.float32) * std
    D12 = jax.random.normal(keys[6], (l, n), jnp.float32) * std
    bu = jax.random.normal(keys[7], (m,), jnp.float32)

    epsilon = 0.001
    H = X.T @ X + epsilon * jnp.eye(2 * n_xi + l, dtype=jnp.float32)
    h1, h2, h3 = H[:n_xi], H[n_xi:n_xi + l], H[n_xi + l:]
    H11 = h1[:, :n_xi]
    H21, H22 = h2[:, :n_xi], h2[:, n_xi:n_xi + l]
    H31, H32, H33 = h3[:, :n_xi], h3[:, n_xi:n_xi + l], h3[:, n_xi + l:]

    P = H33
    F = H31
    B1 = H32
    E = 0.5 * (H11 + P + Y - Y.T)
    Lambda = 0.5 * jnp.diag(H22)
    D11 = -jnp.tril(H22, k=-1)
    C1 = -H21
    Einv = jnp.linalg.inv(E)

    return dict(F=F, B1=B1, B2=B2, C1=C1, C2=C2, D11=D11, D12=D12,
                D21=D21, D22=D22, Lambda=Lambda, Einv=Einv, bu=bu)


# ----------------------------------------------------------------------------
# One-time operand packing: fold Einv and 1/Lambda, fuse + transpose weights,
# build ONE f32 slab (single resident DMA).
# ----------------------------------------------------------------------------
def pack_operands(params, n, m, n_xi, l):
    f32 = jnp.float32
    Einv = params["Einv"].astype(f32)
    EF = Einv @ params["F"].astype(f32)
    EB1 = Einv @ params["B1"].astype(f32)
    EB2 = Einv @ params["B2"].astype(f32)
    inv_lam = (1.0 / params["Lambda"]).astype(f32)                    # (l,)

    wide = l + n_xi + m
    Wx = jnp.concatenate([params["C1"].T, EF.T, params["C2"].T], axis=1)     # (n_xi, wide)
    Ww = jnp.concatenate([params["D12"].T, EB2.T, params["D22"].T], axis=1)  # (n, wide)
    # Fold 1/Lambda into the pre-activation-base columns (first l columns).
    scale = jnp.concatenate([inv_lam, jnp.ones(n_xi + m, f32)])
    Wx = Wx * scale[None, :]
    Ww = Ww * scale[None, :]
    We = jnp.concatenate([EB1.T, params["D21"].T], axis=1)                   # (l, n_xi+m)
    D11Ts = params["D11"].T * inv_lam[None, :]                               # (l, l)
    Eye = jnp.eye(l, dtype=f32)                                              # (l, l)
    bu = params["bu"].reshape(1, m)

    blocks, offsets, row = [], [], 0
    for a in (Wx, Ww, We, D11Ts, Eye, bu):
        a = jnp.asarray(a, f32)
        rows8 = _align8(a.shape[0])
        blocks.append(jnp.pad(a, ((0, rows8 - a.shape[0]), (0, wide - a.shape[1]))))
        offsets.append(row)
        row += rows8
    slab = jnp.concatenate(blocks, axis=0)                                   # (48, wide)
    return slab, tuple(offsets)


# ----------------------------------------------------------------------------
# Wrapper: whole sequence in ONE pallas_call (T=1 == a single module step)
# ----------------------------------------------------------------------------
def psiu_sequence_pallas(slab, offs, xi0, w_seq, n, m, n_xi, l):
    f32 = jnp.float32
    T = w_seq.shape[0]
    wide = l + n_xi + m
    w2 = w_seq.reshape(T, n).astype(f32)
    xi0_2 = xi0.reshape(1, n_xi).astype(f32)

    kernel = functools.partial(psiu_seq_kernel, n=n, m=m, n_xi=n_xi, l=l, offs=offs)
    grid_spec = pltpu.PrefetchScalarGridSpec(
        num_scalar_prefetch=0,
        grid=(1,),                                            # single invocation
        in_specs=[
            pl.BlockSpec(slab.shape, lambda i: (0, 0)),       # parameter slab, resident
            pl.BlockSpec((1, n_xi), lambda i: (0, 0)),        # xi0
            pl.BlockSpec((T, n), lambda i: (0, 0)),           # all w steps, resident
        ],
        out_specs=[
            pl.BlockSpec((T, m), lambda i: (0, 0)),           # all u steps, one writeback
            pl.BlockSpec((1, n_xi), lambda i: (0, 0)),        # final xi
        ],
        scratch_shapes=[pltpu.VMEM((T, wide), f32)],          # batched w-term
    )
    u2, xi_last = pl.pallas_call(
        kernel,
        out_shape=(jax.ShapeDtypeStruct((T, m), f32),
                   jax.ShapeDtypeStruct((1, n_xi), f32)),
        grid_spec=grid_spec,
        compiler_params=pltpu.CompilerParams(
            dimension_semantics=("arbitrary",)),
    )(slab, xi0_2, w2)
    return u2, xi_last.reshape(n_xi)


def noise_reconstruction_forward(slab, offs, t, omega, n, m, n_xi, l):
    """NoiseReconstruction.forward(t, omega) with omega = (x_old, u_old)."""
    del t  # unused by the cell, as in the PyTorch signature
    xi_old, w_old = omega
    u, xi_next = psiu_sequence_pallas(slab, offs, xi_old, w_old.reshape(1, n),
                                      n, m, n_xi, l)
    return u.reshape(m), xi_next


# ----------------------------------------------------------------------------
# Pure-JAX reference (mirrors the PyTorch forward exactly) for validation
# ----------------------------------------------------------------------------
def psiu_step_ref(params, w, xi):
    l = params["Lambda"].shape[0]
    eps = jnp.zeros(l, jnp.float32)
    for i in range(l):
        v = params["C1"][i, :] @ xi + params["D11"][i, :] @ eps + params["D12"][i, :] @ w
        eps = eps.at[i].set(jnp.tanh(v / params["Lambda"][i]))
    E_xi = params["F"] @ xi + params["B1"] @ eps + params["B2"] @ w
    xi_next = params["Einv"] @ E_xi
    u = params["C2"] @ xi + params["D21"] @ eps + params["D22"] @ w + params["bu"]
    return 8.0 + (12.8 - 8.0) * jax.nn.sigmoid(u), xi_next


def psiu_sequence_ref(params, w_seq, xi0):
    xi = xi0
    us = []
    for t in range(w_seq.shape[0]):
        u, xi = psiu_step_ref(params, w_seq[t], xi)
        us.append(u)
    return jnp.stack(us), xi


if __name__ == "__main__":
    n, m, n_xi, l = 4, 2, 8, 8
    T = 8

    key = jax.random.PRNGKey(0)
    kp, kw, kxi = jax.random.split(key, 3)
    params = make_params(kp, n, m, n_xi, l, std=0.1)
    slab, offs = pack_operands(params, n, m, n_xi, l)   # built ONCE, reused

    w_seq = jax.random.normal(kw, (T, n), jnp.float32)      # exogenous inputs
    xi0 = jax.random.normal(kxi, (n_xi,), jnp.float32)      # initial hidden state

    # --- multi-step: whole recurrence inside ONE pallas_call ---
    u_seq, xi_last = psiu_sequence_pallas(slab, offs, xi0, w_seq, n, m, n_xi, l)
    u_seq = jax.block_until_ready(u_seq)
    xi_last = jax.block_until_ready(xi_last)

    u_seq_ref, xi_last_ref = psiu_sequence_ref(params, w_seq, xi0)
    assert jnp.allclose(u_seq, u_seq_ref, atol=1e-4, rtol=1e-4), (u_seq, u_seq_ref)
    assert jnp.allclose(xi_last, xi_last_ref, atol=1e-4, rtol=1e-4), (xi_last, xi_last_ref)

    # --- single step: exact NoiseReconstruction.forward(t, omega) semantics ---
    u1, xi1 = noise_reconstruction_forward(slab, offs, 0.0, (xi0, w_seq[0]),
                                           n, m, n_xi, l)
    u1 = jax.block_until_ready(u1)
    xi1 = jax.block_until_ready(xi1)
    u1_ref, xi1_ref = psiu_step_ref(params, w_seq[0], xi0)
    assert jnp.allclose(u1, u1_ref, atol=1e-4, rtol=1e-4), (u1, u1_ref)
    assert jnp.allclose(xi1, xi1_ref, atol=1e-4, rtol=1e-4), (xi1, xi1_ref)

    print("KERNEL_OK")
</pallas_src>

<mosaic_0001>
module attributes {stable_mosaic.version = 11 : i64} {
  func.func @psiu_seq_kernel(%arg0: i32, %arg1: memref<48x18xf32, #tpu.memory_space<vmem>>, %arg2: memref<1x8xf32, #tpu.memory_space<vmem>>, %arg3: memref<8x4xf32, #tpu.memory_space<vmem>>, %arg4: memref<8x2xf32, #tpu.memory_space<vmem>>, %arg5: memref<1x8xf32, #tpu.memory_space<vmem>>, %arg6: memref<8x18xf32, #tpu.memory_space<vmem>>) attributes {dimension_semantics = [#tpu.dimension_semantics<arbitrary>], iteration_bounds = array<i64: 1>, scalar_prefetch = 0 : i64, scratch_operands = 1 : i64, tpu.core_type = #tpu.core_type<tc>, window_params = [{pipeline_mode = #tpu.pipeline_mode<synchronous>, transform_indices = @transform_0, window_bounds = array<i64: 48, 18>}, {pipeline_mode = #tpu.pipeline_mode<synchronous>, transform_indices = @transform_1, window_bounds = array<i64: 1, 8>}, {pipeline_mode = #tpu.pipeline_mode<synchronous>, transform_indices = @transform_2, window_bounds = array<i64: 8, 4>}, {pipeline_mode = #tpu.pipeline_mode<synchronous>, transform_indices = @transform_3, window_bounds = array<i64: 8, 2>}, {pipeline_mode = #tpu.pipeline_mode<synchronous>, transform_indices = @transform_4, window_bounds = array<i64: 1, 8>}]} {
    %c0 = arith.constant 0 : index
    %c0_0 = arith.constant 0 : index
    %0 = vector.load %arg1[%c0, %c0_0] : memref<48x18xf32, #tpu.memory_space<vmem>>, vector<48x18xf32>
    %1 = vector.extract_strided_slice %0 {offsets = [0, 0], sizes = [8, 18], strides = [1, 1]} : vector<48x18xf32> to vector<8x18xf32>
    %2 = vector.extract_strided_slice %0 {offsets = [8, 0], sizes = [4, 18], strides = [1, 1]} : vector<48x18xf32> to vector<4x18xf32>
    %3 = vector.extract_strided_slice %0 {offsets = [16, 0], sizes = [8, 10], strides = [1, 1]} : vector<48x18xf32> to vector<8x10xf32>
    %4 = vector.extract_strided_slice %0 {offsets = [24, 0], sizes = [8, 8], strides = [1, 1]} : vector<48x18xf32> to vector<8x8xf32>
    %5 = vector.extract_strided_slice %0 {offsets = [32, 0], sizes = [8, 8], strides = [1, 1]} : vector<48x18xf32> to vector<8x8xf32>
    %6 = vector.extract_strided_slice %0 {offsets = [40, 0], sizes = [1, 2], strides = [1, 1]} : vector<48x18xf32> to vector<1x2xf32>
    %c0_1 = arith.constant 0 : index
    %c0_2 = arith.constant 0 : index
    %7 = vector.load %arg3[%c0_1, %c0_2] : memref<8x4xf32, #tpu.memory_space<vmem>>, vector<8x4xf32>
    %cst = arith.constant dense<0.000000e+00> : vector<8x18xf32>
    %8 = tpu.matmul %7, %2, %cst {dimension_numbers = #tpu.dot_dimension_numbers<[1], [0], [0], [1], [0, 0, 1, 1], [], []>} : vector<8x4xf32>, vector<4x18xf32>, vector<8x18xf32> -> vector<8x18xf32>
    %c0_3 = arith.constant 0 : index
    %c0_4 = arith.constant 0 : index
    %9 = vector.load %arg6[%c0_3, %c0_4] : memref<8x18xf32, #tpu.memory_space<vmem>>, vector<8x18xf32>
    tpu.vector_store %arg6[%c0_3, %c0_4], %8 {strides = array<i32>} : memref<8x18xf32, #tpu.memory_space<vmem>>, vector<8x18xf32>,
    %c0_5 = arith.constant 0 : index
    %c0_6 = arith.constant 0 : index
    %10 = vector.load %arg2[%c0_5, %c0_6] : memref<1x8xf32, #tpu.memory_space<vmem>>, vector<1x8xf32>
    %c0_i32 = arith.constant 0 : i32
    %cst_7 = arith.constant dense<0.000000e+00> : vector<1x18xf32>
    %11 = tpu.matmul %10, %1, %cst_7 {dimension_numbers = #tpu.dot_dimension_numbers<[1], [0], [0], [1], [0, 0, 1, 1], [], []>} : vector<1x8xf32>, vector<8x18xf32>, vector<1x18xf32> -> vector<1x18xf32>
    %12 = arith.index_cast %c0_i32 : i32 to index
    %c0_8 = arith.constant 0 : index
    %13 = vector.load %arg6[%12, %c0_8] : memref<8x18xf32, #tpu.memory_space<vmem>>, vector<1x18xf32>
    %14 = arith.addf %11, %13 : vector<1x18xf32>
    %15 = vector.extract_strided_slice %14 {offsets = [0, 0], sizes = [1, 8], strides = [1, 1]} : vector<1x18xf32> to vector<1x8xf32>
    %cst_9 = arith.constant 0.000000e+00 : f32
    %16 = vector.broadcast %cst_9 : f32 to vector<1x8xf32>
    %17 = vector.extract_strided_slice %15 {offsets = [0, 0], sizes = [1, 1], strides = [1, 1]} : vector<1x8xf32> to vector<1x1xf32>
    %18 = vector.extract %17[0, 0] : f32 from vector<1x1xf32>
    %19 = math.tanh %18 : f32
    %20 = vector.extract_strided_slice %4 {offsets = [0, 0], sizes = [1, 8], strides = [1, 1]} : vector<8x8xf32> to vector<1x8xf32>
    %21 = vector.broadcast %19 : f32 to vector<1x8xf32>
    %22 = arith.mulf %21, %20 : vector<1x8xf32>
    %23 = arith.addf %15, %22 : vector<1x8xf32>
    %24 = vector.extract_strided_slice %5 {offsets = [0, 0], sizes = [1, 8], strides = [1, 1]} : vector<8x8xf32> to vector<1x8xf32>
    %25 = vector.broadcast %19 : f32 to vector<1x8xf32>
    %26 = arith.mulf %25, %24 : vector<1x8xf32>
    %27 = arith.addf %16, %26 : vector<1x8xf32>
    %28 = vector.extract_strided_slice %23 {offsets = [0, 1], sizes = [1, 1], strides = [1, 1]} : vector<1x8xf32> to vector<1x1xf32>
    %29 = vector.extract %28[0, 0] : f32 from vector<1x1xf32>
    %30 = math.tanh %29 : f32
    %31 = vector.extract_strided_slice %4 {offsets = [1, 0], sizes = [1, 8], strides = [1, 1]} : vector<8x8xf32> to vector<1x8xf32>
    %32 = vector.broadcast %30 : f32 to vector<1x8xf32>
    %33 = arith.mulf %32, %31 : vector<1x8xf32>
    %34 = arith.addf %23, %33 : vector<1x8xf32>
    %35 = vector.extract_strided_slice %5 {offsets = [1, 0], sizes = [1, 8], strides = [1, 1]} : vector<8x8xf32> to vector<1x8xf32>
    %36 = vector.broadcast %30 : f32 to vector<1x8xf32>
    %37 = arith.mulf %36, %35 : vector<1x8xf32>
    %38 = arith.addf %27, %37 : vector<1x8xf32>
    %39 = vector.extract_strided_slice %34 {offsets = [0, 2], sizes = [1, 1], strides = [1, 1]} : vector<1x8xf32> to vector<1x1xf32>
    %40 = vector.extract %39[0, 0] : f32 from vector<1x1xf32>
    %41 = math.tanh %40 : f32
    %42 = vector.extract_strided_slice %4 {offsets = [2, 0], sizes = [1, 8], strides = [1, 1]} : vector<8x8xf32> to vector<1x8xf32>
    %43 = vector.broadcast %41 : f32 to vector<1x8xf32>
    %44 = arith.mulf %43, %42 : vector<1x8xf32>
    %45 = arith.addf %34, %44 : vector<1x8xf32>
    %46 = vector.extract_strided_slice %5 {offsets = [2, 0], sizes = [1, 8], strides = [1, 1]} : vector<8x8xf32> to vector<1x8xf32>
    %47 = vector.broadcast %41 : f32 to vector<1x8xf32>
    %48 = arith.mulf %47, %46 : vector<1x8xf32>
    %49 = arith.addf %38, %48 : vector<1x8xf32>
    %50 = vector.extract_strided_slice %45 {offsets = [0, 3], sizes = [1, 1], strides = [1, 1]} : vector<1x8xf32> to vector<1x1xf32>
    %51 = vector.extract %50[0, 0] : f32 from vector<1x1xf32>
    %52 = math.tanh %51 : f32
    %53 = vector.extract_strided_slice %4 {offsets = [3, 0], sizes = [1, 8], strides = [1, 1]} : vector<8x8xf32> to vector<1x8xf32>
    %54 = vector.broadcast %52 : f32 to vector<1x8xf32>
    %55 = arith.mulf %54, %53 : vector<1x8xf32>
    %56 = arith.addf %45, %55 : vector<1x8xf32>
    %57 = vector.extract_strided_slice %5 {offsets = [3, 0], sizes = [1, 8], strides = [1, 1]} : vector<8x8xf32> to vector<1x8xf32>
    %58 = vector.broadcast %52 : f32 to vector<1x8xf32>
    %59 = arith.mulf %58, %57 : vector<1x8xf32>
    %60 = arith.addf %49, %59 : vector<1x8xf32>
    %61 = vector.extract_strided_slice %56 {offsets = [0, 4], sizes = [1, 1], strides = [1, 1]} : vector<1x8xf32> to vector<1x1xf32>
    %62 = vector.extract %61[0, 0] : f32 from vector<1x1xf32>
    %63 = math.tanh %62 : f32
    %64 = vector.extract_strided_slice %4 {offsets = [4, 0], sizes = [1, 8], strides = [1, 1]} : vector<8x8xf32> to vector<1x8xf32>
    %65 = vector.broadcast %63 : f32 to vector<1x8xf32>
    %66 = arith.mulf %65, %64 : vector<1x8xf32>
    %67 = arith.addf %56, %66 : vector<1x8xf32>
    %68 = vector.extract_strided_slice %5 {offsets = [4, 0], sizes = [1, 8], strides = [1, 1]} : vector<8x8xf32> to vector<1x8xf32>
    %69 = vector.broadcast %63 : f32 to vector<1x8xf32>
    %70 = arith.mulf %69, %68 : vector<1x8xf32>
    %71 = arith.addf %60, %70 : vector<1x8xf32>
    %72 = vector.extract_strided_slice %67 {offsets = [0, 5], sizes = [1, 1], strides = [1, 1]} : vector<1x8xf32> to vector<1x1xf32>
    %73 = vector.extract %72[0, 0] : f32 from vector<1x1xf32>
    %74 = math.tanh %73 : f32
    %75 = vector.extract_strided_slice %4 {offsets = [5, 0], sizes = [1, 8], strides = [1, 1]} : vector<8x8xf32> to vector<1x8xf32>
    %76 = vector.broadcast %74 : f32 to vector<1x8xf32>
    %77 = arith.mulf %76, %75 : vector<1x8xf32>
    %78 = arith.addf %67, %77 : vector<1x8xf32>
    %79 = vector.extract_strided_slice %5 {offsets = [5, 0], sizes = [1, 8], strides = [1, 1]} : vector<8x8xf32> to vector<1x8xf32>
    %80 = vector.broadcast %74 : f32 to vector<1x8xf32>
    %81 = arith.mulf %80, %79 : vector<1x8xf32>
    %82 = arith.addf %71, %81 : vector<1x8xf32>
    %83 = vector.extract_strided_slice %78 {offsets = [0, 6], sizes = [1, 1], strides = [1, 1]} : vector<1x8xf32> to vector<1x1xf32>
    %84 = vector.extract %83[0, 0] : f32 from vector<1x1xf32>
    %85 = math.tanh %84 : f32
    %86 = vector.extract_strided_slice %4 {offsets = [6, 0], sizes = [1, 8], strides = [1, 1]} : vector<8x8xf32> to vector<1x8xf32>
    %87 = vector.broadcast %85 : f32 to vector<1x8xf32>
    %88 = arith.mulf %87, %86 : vector<1x8xf32>
    %89 = arith.addf %78, %88 : vector<1x8xf32>
    %90 = vector.extract_strided_slice %5 {offsets = [6, 0], sizes = [1, 8], strides = [1, 1]} : vector<8x8xf32> to vector<1x8xf32>
    %91 = vector.broadcast %85 : f32 to vector<1x8xf32>
    %92 = arith.mulf %91, %90 : vector<1x8xf32>
    %93 = arith.addf %82, %92 : vector<1x8xf32>
    %94 = vector.extract_strided_slice %89 {offsets = [0, 7], sizes = [1, 1], strides = [1, 1]} : vector<1x8xf32> to vector<1x1xf32>
    %95 = vector.extract %94[0, 0] : f32 from vector<1x1xf32>
    %96 = math.tanh %95 : f32
    %97 = vector.extract_strided_slice %5 {offsets = [7, 0], sizes = [1, 8], strides = [1, 1]} : vector<8x8xf32> to vector<1x8xf32>
    %98 = vector.broadcast %96 : f32 to vector<1x8xf32>
    %99 = arith.mulf %98, %97 : vector<1x8xf32>
    %100 = arith.addf %93, %99 : vector<1x8xf32>
    %101 = vector.extract_strided_slice %14 {offsets = [0, 8], sizes = [1, 10], strides = [1, 1]} : vector<1x18xf32> to vector<1x10xf32>
    %cst_10 = arith.constant dense<0.000000e+00> : vector<1x10xf32>
    %102 = tpu.matmul %100, %3, %cst_10 {dimension_numbers = #tpu.dot_dimension_numbers<[1], [0], [0], [1], [0, 0, 1, 1], [], []>} : vector<1x8xf32>, vector<8x10xf32>, vector<1x10xf32> -> vector<1x10xf32>
    %103 = arith.addf %101, %102 : vector<1x10xf32>
    %104 = vector.extract_strided_slice %103 {offsets = [0, 8], sizes = [1, 2], strides = [1, 1]} : vector<1x10xf32> to vector<1x2xf32>
    %105 = arith.addf %104, %6 : vector<1x2xf32>
    %106 = arith.negf %105 : vector<1x2xf32>
    %107 = math.exp %106 : vector<1x2xf32>
    %cst_11 = arith.constant 1.000000e+00 : f32
    %108 = vector.broadcast %cst_11 : f32 to vector<1x2xf32>
    %109 = arith.addf %108, %107 : vector<1x2xf32>
    %110 = arith.divf %108, %109 : vector<1x2xf32>
    %cst_12 = arith.constant 4.800000e+00 : f32
    %111 = vector.broadcast %cst_12 : f32 to vector<1x2xf32>
    %112 = arith.mulf %111, %110 : vector<1x2xf32>
    %cst_13 = arith.constant 8.000000e+00 : f32
    %113 = vector.broadcast %cst_13 : f32 to vector<1x2xf32>
    %114 = arith.addf %113, %112 : vector<1x2xf32>
    %115 = arith.index_cast %c0_i32 : i32 to index
    %c0_14 = arith.constant 0 : index
    %116 = vector.load %arg4[%115, %c0_14] : memref<8x2xf32, #tpu.memory_space<vmem>>, vector<1x2xf32>
    tpu.vector_store %arg4[%115, %c0_14], %114 {strides = array<i32>} : memref<8x2xf32, #tpu.memory_space<vmem>>, vector<1x2xf32>,
    %117 = vector.extract_strided_slice %103 {offsets = [0, 0], sizes = [1, 8], strides = [1, 1]} : vector<1x10xf32> to vector<1x8xf32>
    %c1_i32 = arith.constant 1 : i32
    %cst_15 = arith.constant dense<0.000000e+00> : vector<1x18xf32>
    %118 = tpu.matmul %117, %1, %cst_15 {dimension_numbers = #tpu.dot_dimension_numbers<[1], [0], [0], [1], [0, 0, 1, 1], [], []>} : vector<1x8xf32>, vector<8x18xf32>, vector<1x18xf32> -> vector<1x18xf32>
    %119 = arith.index_cast %c1_i32 : i32 to index
    %c0_16 = arith.constant 0 : index
    %120 = vector.load %arg6[%119, %c0_16] : memref<8x18xf32, #tpu.memory_space<vmem>>, vector<1x18xf32>
    %121 = arith.addf %118, %120 : vector<1x18xf32>
    %122 = vector.extract_strided_slice %121 {offsets = [0, 0], sizes = [1, 8], strides = [1, 1]} : vector<1x18xf32> to vector<1x8xf32>
    %cst_17 = arith.constant 0.000000e+00 : f32
    %123 = vector.broadcast %cst_17 : f32 to vector<1x8xf32>
    %124 = vector.extract_strided_slice %122 {offsets = [0, 0], sizes = [1, 1], strides = [1, 1]} : vector<1x8xf32> to vector<1x1xf32>
    %125 = vector.extract %124[0, 0] : f32 from vector<1x1xf32>
    %126 = math.tanh %125 : f32
    %127 = vector.extract_strided_slice %4 {offsets = [0, 0], sizes = [1, 8], strides = [1, 1]} : vector<8x8xf32> to vector<1x8xf32>
    %128 = vector.broadcast %126 : f32 to vector<1x8xf32>
    %129 = arith.mulf %128, %127 : vector<1x8xf32>
    %130 = arith.addf %122, %129 : vector<1x8xf32>
    %131 = vector.extract_strided_slice %5 {offsets = [0, 0], sizes = [1, 8], strides = [1, 1]} : vector<8x8xf32> to vector<1x8xf32>
    %132 = vector.broadcast %126 : f32 to vector<1x8xf32>
    %133 = arith.mulf %132, %131 : vector<1x8xf32>
    %134 = arith.addf %123, %133 : vector<1x8xf32>
    %135 = vector.extract_strided_slice %130 {offsets = [0, 1], sizes = [1, 1], strides = [1, 1]} : vector<1x8xf32> to vector<1x1xf32>
    %136 = vector.extract %135[0, 0] : f32 from vector<1x1xf32>
    %137 = math.tanh %136 : f32
    %138 = vector.extract_strided_slice %4 {offsets = [1, 0], sizes = [1, 8], strides = [1, 1]} : vector<8x8xf32> to vector<1x8xf32>
    %139 = vector.broadcast %137 : f32 to vector<1x8xf32>
    %140 = arith.mulf %139, %138 : vector<1x8xf32>
    %141 = arith.addf %130, %140 : vector<1x8xf32>
    %142 = vector.extract_strided_slice %5 {offsets = [1, 0], sizes = [1, 8], strides = [1, 1]} : vector<8x8xf32> to vector<1x8xf32>
    %143 = vector.broadcast %137 : f32 to vector<1x8xf32>
    %144 = arith.mulf %143, %142 : vector<1x8xf32>
    %145 = arith.addf %134, %144 : vector<1x8xf32>
    %146 = vector.extract_strided_slice %141 {offsets = [0, 2], sizes = [1, 1], strides = [1, 1]} : vector<1x8xf32> to vector<1x1xf32>
    %147 = vector.extract %146[0, 0] : f32 from vector<1x1xf32>
    %148 = math.tanh %147 : f32
    %149 = vector.extract_strided_slice %4 {offsets = [2, 0], sizes = [1, 8], strides = [1, 1]} : vector<8x8xf32> to vector<1x8xf32>
    %150 = vector.broadcast %148 : f32 to vector<1x8xf32>
    %151 = arith.mulf %150, %149 : vector<1x8xf32>
    %152 = arith.addf %141, %151 : vector<1x8xf32>
    %153 = vector.extract_strided_slice %5 {offsets = [2, 0], sizes = [1, 8], strides = [1, 1]} : vector<8x8xf32> to vector<1x8xf32>
    %154 = vector.broadcast %148 : f32 to vector<1x8xf32>
    %155 = arith.mulf %154, %153 : vector<1x8xf32>
    %156 = arith.addf %145, %155 : vector<1x8xf32>
    %157 = vector.extract_strided_slice %152 {offsets = [0, 3], sizes = [1, 1], strides = [1, 1]} : vector<1x8xf32> to vector<1x1xf32>
    %158 = vector.extract %157[0, 0] : f32 from vector<1x1xf32>
    %159 = math.tanh %158 : f32
    %160 = vector.extract_strided_slice %4 {offsets = [3, 0], sizes = [1, 8], strides = [1, 1]} : vector<8x8xf32> to vector<1x8xf32>
    %161 = vector.broadcast %159 : f32 to vector<1x8xf32>
    %162 = arith.mulf %161, %160 : vector<1x8xf32>
    %163 = arith.addf %152, %162 : vector<1x8xf32>
    %164 = vector.extract_strided_slice %5 {offsets = [3, 0], sizes = [1, 8], strides = [1, 1]} : vector<8x8xf32> to vector<1x8xf32>
    %165 = vector.broadcast %159 : f32 to vector<1x8xf32>
    %166 = arith.mulf %165, %164 : vector<1x8xf32>
    %167 = arith.addf %156, %166 : vector<1x8xf32>
    %168 = vector.extract_strided_slice %163 {offsets = [0, 4], sizes = [1, 1], strides = [1, 1]} : vector<1x8xf32> to vector<1x1xf32>
    %169 = vector.extract %168[0, 0] : f32 from vector<1x1xf32>
    %170 = math.tanh %169 : f32
    %171 = vector.extract_strided_slice %4 {offsets = [4, 0], sizes = [1, 8], strides = [1, 1]} : vector<8x8xf32> to vector<1x8xf32>
    %172 = vector.broadcast %170 : f32 to vector<1x8xf32>
    %173 = arith.mulf %172, %171 : vector<1x8xf32>
    %174 = arith.addf %163, %173 : vector<1x8xf32>
    %175 = vector.extract_strided_slice %5 {offsets = [4, 0], sizes = [1, 8], strides = [1, 1]} : vector<8x8xf32> to vector<1x8xf32>
    %176 = vector.broadcast %170 : f32 to vector<1x8xf32>
    %177 = arith.mulf %176, %175 : vector<1x8xf32>
    %178 = arith.addf %167, %177 : vector<1x8xf32>
    %179 = vector.extract_strided_slice %174 {offsets = [0, 5], sizes = [1, 1], strides = [1, 1]} : vector<1x8xf32> to vector<1x1xf32>
    %180 = vector.extract %179[0, 0] : f32 from vector<1x1xf32>
    %181 = math.tanh %180 : f32
    %182 = vector.extract_strided_slice %4 {offsets = [5, 0], sizes = [1, 8], strides = [1, 1]} : vector<8x8xf32> to vector<1x8xf32>
    %183 = vector.broadcast %181 : f32 to vector<1x8xf32>
    %184 = arith.mulf %183, %182 : vector<1x8xf32>
    %185 = arith.addf %174, %184 : vector<1x8xf32>
    %186 = vector.extract_strided_slice %5 {offsets = [5, 0], sizes = [1, 8], strides = [1, 1]} : vector<8x8xf32> to vector<1x8xf32>
    %187 = vector.broadcast %181 : f32 to vector<1x8xf32>
    %188 = arith.mulf %187, %186 : vector<1x8xf32>
    %189 = arith.addf %178, %188 : vector<1x8xf32>
    %190 = vector.extract_strided_slice %185 {offsets = [0, 6], sizes = [1, 1], strides = [1, 1]} : vector<1x8xf32> to vector<1x1xf32>
    %191 = vector.extract %190[0, 0] : f32 from vector<1x1xf32>
    %192 = math.tanh %191 : f32
    %193 = vector.extract_strided_slice %4 {offsets = [6, 0], sizes = [1, 8], strides = [1, 1]} : vector<8x8xf32> to vector<1x8xf32>
    %194 = vector.broadcast %192 : f32 to vector<1x8xf32>
    %195 = arith.mulf %194, %193 : vector<1x8xf32>
    %196 = arith.addf %185, %195 : vector<1x8xf32>
    %197 = vector.extract_strided_slice %5 {offsets = [6, 0], sizes = [1, 8], strides = [1, 1]} : vector<8x8xf32> to vector<1x8xf32>
    %198 = vector.broadcast %192 : f32 to vector<1x8xf32>
    %199 = arith.mulf %198, %197 : vector<1x8xf32>
    %200 = arith.addf %189, %199 : vector<1x8xf32>
    %201 = vector.extract_strided_slice %196 {offsets = [0, 7], sizes = [1, 1], strides = [1, 1]} : vector<1x8xf32> to vector<1x1xf32>
    %202 = vector.extract %201[0, 0] : f32 from vector<1x1xf32>
    %203 = math.tanh %202 : f32
    %204 = vector.extract_strided_slice %5 {offsets = [7, 0], sizes = [1, 8], strides = [1, 1]} : vector<8x8xf32> to vector<1x8xf32>
    %205 = vector.broadcast %203 : f32 to vector<1x8xf32>
    %206 = arith.mulf %205, %204 : vector<1x8xf32>
    %207 = arith.addf %200, %206 : vector<1x8xf32>
    %208 = vector.extract_strided_slice %121 {offsets = [0, 8], sizes = [1, 10], strides = [1, 1]} : vector<1x18xf32> to vector<1x10xf32>
    %cst_18 = arith.constant dense<0.000000e+00> : vector<1x10xf32>
    %209 = tpu.matmul %207, %3, %cst_18 {dimension_numbers = #tpu.dot_dimension_numbers<[1], [0], [0], [1], [0, 0, 1, 1], [], []>} : vector<1x8xf32>, vector<8x10xf32>, vector<1x10xf32> -> vector<1x10xf32>
    %210 = arith.addf %208, %209 : vector<1x10xf32>
    %211 = vector.extract_strided_slice %210 {offsets = [0, 8], sizes = [1, 2], strides = [1, 1]} : vector<1x10xf32> to vector<1x2xf32>
    %212 = arith.addf %211, %6 : vector<1x2xf32>
    %213 = arith.negf %212 : vector<1x2xf32>
    %214 = math.exp %213 : vector<1x2xf32>
    %cst_19 = arith.constant 1.000000e+00 : f32
    %215 = vector.broadcast %cst_19 : f32 to vector<1x2xf32>
    %216 = arith.addf %215, %214 : vector<1x2xf32>
    %217 = arith.divf %215, %216 : vector<1x2xf32>
    %cst_20 = arith.constant 4.800000e+00 : f32
    %218 = vector.broadcast %cst_20 : f32 to vector<1x2xf32>
    %219 = arith.mulf %218, %217 : vector<1x2xf32>
    %cst_21 = arith.constant 8.000000e+00 : f32
    %220 = vector.broadcast %cst_21 : f32 to vector<1x2xf32>
    %221 = arith.addf %220, %219 : vector<1x2xf32>
    %222 = arith.index_cast %c1_i32 : i32 to index
    %c0_22 = arith.constant 0 : index
    %223 = vector.load %arg4[%222, %c0_22] : memref<8x2xf32, #tpu.memory_space<vmem>>, vector<1x2xf32>
    tpu.vector_store %arg4[%222, %c0_22], %221 {strides = array<i32>} : memref<8x2xf32, #tpu.memory_space<vmem>>, vector<1x2xf32>,
    %224 = vector.extract_strided_slice %210 {offsets = [0, 0], sizes = [1, 8], strides = [1, 1]} : vector<1x10xf32> to vector<1x8xf32>
    %c2_i32 = arith.constant 2 : i32
    %cst_23 = arith.constant dense<0.000000e+00> : vector<1x18xf32>
    %225 = tpu.matmul %224, %1, %cst_23 {dimension_numbers = #tpu.dot_dimension_numbers<[1], [0], [0], [1], [0, 0, 1, 1], [], []>} : vector<1x8xf32>, vector<8x18xf32>, vector<1x18xf32> -> vector<1x18xf32>
    %226 = arith.index_cast %c2_i32 : i32 to index
    %c0_24 = arith.constant 0 : index
    %227 = vector.load %arg6[%226, %c0_24] : memref<8x18xf32, #tpu.memory_space<vmem>>, vector<1x18xf32>
    %228 = arith.addf %225, %227 : vector<1x18xf32>
    %229 = vector.extract_strided_slice %228 {offsets = [0, 0], sizes = [1, 8], strides = [1, 1]} : vector<1x18xf32> to vector<1x8xf32>
    %cst_25 = arith.constant 0.000000e+00 : f32
    %230 = vector.broadcast %cst_25 : f32 to vector<1x8xf32>
    %231 = vector.extract_strided_slice %229 {offsets = [0, 0], sizes = [1, 1], strides = [1, 1]} : vector<1x8xf32> to vector<1x1xf32>
    %232 = vector.extract %231[0, 0] : f32 from vector<1x1xf32>
    %233 = math.tanh %232 : f32
    %234 = vector.extract_strided_slice %4 {offsets = [0, 0], sizes = [1, 8], strides = [1, 1]} : vector<8x8xf32> to vector<1x8xf32>
    %235 = vector.broadcast %233 : f32 to vector<1x8xf32>
    %236 = arith.mulf %235, %234 : vector<1x8xf32>
    %237 = arith.addf %229, %236 : vector<1x8xf32>
    %238 = vector.extract_strided_slice %5 {offsets = [0, 0], sizes = [1, 8], strides = [1, 1]} : vector<8x8xf32> to vector<1x8xf32>
    %239 = vector.broadcast %233 : f32 to vector<1x8xf32>
    %240 = arith.mulf %239, %238 : vector<1x8xf32>
    %241 = arith.addf %230, %240 : vector<1x8xf32>
    %242 = vector.extract_strided_slice %237 {offsets = [0, 1], sizes = [1, 1], strides = [1, 1]} : vector<1x8xf32> to vector<1x1xf32>
    %243 = vector.extract %242[0, 0] : f32 from vector<1x1xf32>
    %244 = math.tanh %243 : f32
    %245 = vector.extract_strided_slice %4 {offsets = [1, 0], sizes = [1, 8], strides = [1, 1]} : vector<8x8xf32> to vector<1x8xf32>
    %246 = vector.broadcast %244 : f32 to vector<1x8xf32>
    %247 = arith.mulf %246, %245 : vector<1x8xf32>
    %248 = arith.addf %237, %247 : vector<1x8xf32>
    %249 = vector.extract_strided_slice %5 {offsets = [1, 0], sizes = [1, 8], strides = [1, 1]} : vector<8x8xf32> to vector<1x8xf32>
    %250 = vector.broadcast %244 : f32 to vector<1x8xf32>
    %251 = arith.mulf %250, %249 : vector<1x8xf32>
    %252 = arith.addf %241, %251 : vector<1x8xf32>
    %253 = vector.extract_strided_slice %248 {offsets = [0, 2], sizes = [1, 1], strides = [1, 1]} : vector<1x8xf32> to vector<1x1xf32>
    %254 = vector.extract %253[0, 0] : f32 from vector<1x1xf32>
    %255 = math.tanh %254 : f32
    %256 = vector.extract_strided_slice %4 {offsets = [2, 0], sizes = [1, 8], strides = [1, 1]} : vector<8x8xf32> to vector<1x8xf32>
    %257 = vector.broadcast %255 : f32 to vector<1x8xf32>
    %258 = arith.mulf %257, %256 : vector<1x8xf32>
    %259 = arith.addf %248, %258 : vector<1x8xf32>
    %260 = vector.extract_strided_slice %5 {offsets = [2, 0], sizes = [1, 8], strides = [1, 1]} : vector<8x8xf32> to vector<1x8xf32>
    %261 = vector.broadcast %255 : f32 to vector<1x8xf32>
    %262 = arith.mulf %261, %260 : vector<1x8xf32>
    %263 = arith.addf %252, %262 : vector<1x8xf32>
    %264 = vector.extract_strided_slice %259 {offsets = [0, 3], sizes = [1, 1], strides = [1, 1]} : vector<1x8xf32> to vector<1x1xf32>
    %265 = vector.extract %264[0, 0] : f32 from vector<1x1xf32>
    %266 = math.tanh %265 : f32
    %267 = vector.extract_strided_slice %4 {offsets = [3, 0], sizes = [1, 8], strides = [1, 1]} : vector<8x8xf32> to vector<1x8xf32>
    %268 = vector.broadcast %266 : f32 to vector<1x8xf32>
    %269 = arith.mulf %268, %267 : vector<1x8xf32>
    %270 = arith.addf %259, %269 : vector<1x8xf32>
    %271 = vector.extract_strided_slice %5 {offsets = [3, 0], sizes = [1, 8], strides = [1, 1]} : vector<8x8xf32> to vector<1x8xf32>
    %272 = vector.broadcast %266 : f32 to vector<1x8xf32>
    %273 = arith.mulf %272, %271 : vector<1x8xf32>
    %274 = arith.addf %263, %273 : vector<1x8xf32>
    %275 = vector.extract_strided_slice %270 {offsets = [0, 4], sizes = [1, 1], strides = [1, 1]} : vector<1x8xf32> to vector<1x1xf32>
    %276 = vector.extract %275[0, 0] : f32 from vector<1x1xf32>
    %277 = math.tanh %276 : f32
    %278 = vector.extract_strided_slice %4 {offsets = [4, 0], sizes = [1, 8], strides = [1, 1]} : vector<8x8xf32> to vector<1x8xf32>
    %279 = vector.broadcast %277 : f32 to vector<1x8xf32>
    %280 = arith.mulf %279, %278 : vector<1x8xf32>
    %281 = arith.addf %270, %280 : vector<1x8xf32>
    %282 = vector.extract_strided_slice %5 {offsets = [4, 0], sizes = [1, 8], strides = [1, 1]} : vector<8x8xf32> to vector<1x8xf32>
    %283 = vector.broadcast %277 : f32 to vector<1x8xf32>
    %284 = arith.mulf %283, %282 : vector<1x8xf32>
    %285 = arith.addf %274, %284 : vector<1x8xf32>
    %286 = vector.extract_strided_slice %281 {offsets = [0, 5], sizes = [1, 1], strides = [1, 1]} : vector<1x8xf32> to vector<1x1xf32>
    %287 = vector.extract %286[0, 0] : f32 from vector<1x1xf32>
    %288 = math.tanh %287 : f32
    %289 = vector.extract_strided_slice %4 {offsets = [5, 0], sizes = [1, 8], strides = [1, 1]} : vector<8x8xf32> to vector<1x8xf32>
    %290 = vector.broadcast %288 : f32 to vector<1x8xf32>
    %291 = arith.mulf %290, %289 : vector<1x8xf32>
    %292 = arith.addf %281, %291 : vector<1x8xf32>
    %293 = vector.extract_strided_slice %5 {offsets = [5, 0], sizes = [1, 8], strides = [1, 1]} : vector<8x8xf32> to vector<1x8xf32>
    %294 = vector.broadcast %288 : f32 to vector<1x8xf32>
    %295 = arith.mulf %294, %293 : vector<1x8xf32>
    %296 = arith.addf %285, %295 : vector<1x8xf32>
    %297 = vector.extract_strided_slice %292 {offsets = [0, 6], sizes = [1, 1], strides = [1, 1]} : vector<1x8xf32> to vector<1x1xf32>
    %298 = vector.extract %297[0, 0] : f32 from vector<1x1xf32>
    %299 = math.tanh %298 : f32
    %300 = vector.extract_strided_slice %4 {offsets = [6, 0], sizes = [1, 8], strides = [1, 1]} : vector<8x8xf32> to vector<1x8xf32>
    %301 = vector.broadcast %299 : f32 to vector<1x8xf32>
    %302 = arith.mulf %301, %300 : vector<1x8xf32>
    %303 = arith.addf %292, %302 : vector<1x8xf32>
    %304 = vector.extract_strided_slice %5 {offsets = [6, 0], sizes = [1, 8], strides = [1, 1]} : vector<8x8xf32> to vector<1x8xf32>
    %305 = vector.broadcast %299 : f32 to vector<1x8xf32>
    %306 = arith.mulf %305, %304 : vector<1x8xf32>
    %307 = arith.addf %296, %306 : vector<1x8xf32>
    %308 = vector.extract_strided_slice %303 {offsets = [0, 7], sizes = [1, 1], strides = [1, 1]} : vector<1x8xf32> to vector<1x1xf32>
    %309 = vector.extract %308[0, 0] : f32 from vector<1x1xf32>
    %310 = math.tanh %309 : f32
    %311 = vector.extract_strided_slice %5 {offsets = [7, 0], sizes = [1, 8], strides = [1, 1]} : vector<8x8xf32> to vector<1x8xf32>
    %312 = vector.broadcast %310 : f32 to vector<1x8xf32>
    %313 = arith.mulf %312, %311 : vector<1x8xf32>
    %314 = arith.addf %307, %313 : vector<1x8xf32>
    %315 = vector.extract_strided_slice %228 {offsets = [0, 8], sizes = [1, 10], strides = [1, 1]} : vector<1x18xf32> to vector<1x10xf32>
    %cst_26 = arith.constant dense<0.000000e+00> : vector<1x10xf32>
    %316 = tpu.matmul %314, %3, %cst_26 {dimension_numbers = #tpu.dot_dimension_numbers<[1], [0], [0], [1], [0, 0, 1, 1], [], []>} : vector<1x8xf32>, vector<8x10xf32>, vector<1x10xf32> -> vector<1x10xf32>
    %317 = arith.addf %315, %316 : vector<1x10xf32>
    %318 = vector.extract_strided_slice %317 {offsets = [0, 8], sizes = [1, 2], strides = [1, 1]} : vector<1x10xf32> to vector<1x2xf32>
    %319 = arith.addf %318, %6 : vector<1x2xf32>
    %320 = arith.negf %319 : vector<1x2xf32>
    %321 = math.exp %320 : vector<1x2xf32>
    %cst_27 = arith.constant 1.000000e+00 : f32
    %322 = vector.broadcast %cst_27 : f32 to vector<1x2xf32>
    %323 = arith.addf %322, %321 : vector<1x2xf32>
    %324 = arith.divf %322, %323 : vector<1x2xf32>
    %cst_28 = arith.constant 4.800000e+00 : f32
    %325 = vector.broadcast %cst_28 : f32 to vector<1x2xf32>
    %326 = arith.mulf %325, %324 : vector<1x2xf32>
    %cst_29 = arith.constant 8.000000e+00 : f32
    %327 = vector.broadcast %cst_29 : f32 to vector<1x2xf32>
    %328 = arith.addf %327, %326 : vector<1x2xf32>
    %329 = arith.index_cast %c2_i32 : i32 to index
    %c0_30 = arith.constant 0 : index
    %330 = vector.load %arg4[%329, %c0_30] : memref<8x2xf32, #tpu.memory_space<vmem>>, vector<1x2xf32>
    tpu.vector_store %arg4[%329, %c0_30], %328 {strides = array<i32>} : memref<8x2xf32, #tpu.memory_space<vmem>>, vector<1x2xf32>,
    %331 = vector.extract_strided_slice %317 {offsets = [0, 0], sizes = [1, 8], strides = [1, 1]} : vector<1x10xf32> to vector<1x8xf32>
    %c3_i32 = arith.constant 3 : i32
    %cst_31 = arith.constant dense<0.000000e+00> : vector<1x18xf32>
    %332 = tpu.matmul %331, %1, %cst_31 {dimension_numbers = #tpu.dot_dimension_numbers<[1], [0], [0], [1], [0, 0, 1, 1], [], []>} : vector<1x8xf32>, vector<8x18xf32>, vector<1x18xf32> -> vector<1x18xf32>
    %333 = arith.index_cast %c3_i32 : i32 to index
    %c0_32 = arith.constant 0 : index
    %334 = vector.load %arg6[%333, %c0_32] : memref<8x18xf32, #tpu.memory_space<vmem>>, vector<1x18xf32>
    %335 = arith.addf %332, %334 : vector<1x18xf32>
    %336 = vector.extract_strided_slice %335 {offsets = [0, 0], sizes = [1, 8], strides = [1, 1]} : vector<1x18xf32> to vector<1x8xf32>
    %cst_33 = arith.constant 0.000000e+00 : f32
    %337 = vector.broadcast %cst_33 : f32 to vector<1x8xf32>
    %338 = vector.extract_strided_slice %336 {offsets = [0, 0], sizes = [1, 1], strides = [1, 1]} : vector<1x8xf32> to vector<1x1xf32>
    %339 = vector.extract %338[0, 0] : f32 from vector<1x1xf32>
    %340 = math.tanh %339 : f32
    %341 = vector.extract_strided_slice %4 {offsets = [0, 0], sizes = [1, 8], strides = [1, 1]} : vector<8x8xf32> to vector<1x8xf32>
    %342 = vector.broadcast %340 : f32 to vector<1x8xf32>
    %343 = arith.mulf %342, %341 : vector<1x8xf32>
    %344 = arith.addf %336, %343 : vector<1x8xf32>
    %345 = vector.extract_strided_slice %5 {offsets = [0, 0], sizes = [1, 8], strides = [1, 1]} : vector<8x8xf32> to vector<1x8xf32>
    %346 = vector.broadcast %340 : f32 to vector<1x8xf32>
    %347 = arith.mulf %346, %345 : vector<1x8xf32>
    %348 = arith.addf %337, %347 : vector<1x8xf32>
    %349 = vector.extract_strided_slice %344 {offsets = [0, 1], sizes = [1, 1], strides = [1, 1]} : vector<1x8xf32> to vector<1x1xf32>
    %350 = vector.extract %349[0, 0] : f32 from vector<1x1xf32>
    %351 = math.tanh %350 : f32
    %352 = vector.extract_strided_slice %4 {offsets = [1, 0], sizes = [1, 8], strides = [1, 1]} : vector<8x8xf32> to vector<1x8xf32>
    %353 = vector.broadcast %351 : f32 to vector<1x8xf32>
    %354 = arith.mulf %353, %352 : vector<1x8xf32>
    %355 = arith.addf %344, %354 : vector<1x8xf32>
    %356 = vector.extract_strided_slice %5 {offsets = [1, 0], sizes = [1, 8], strides = [1, 1]} : vector<8x8xf32> to vector<1x8xf32>
    %357 = vector.broadcast %351 : f32 to vector<1x8xf32>
    %358 = arith.mulf %357, %356 : vector<1x8xf32>
    %359 = arith.addf %348, %358 : vector<1x8xf32>
    %360 = vector.extract_strided_slice %355 {offsets = [0, 2], sizes = [1, 1], strides = [1, 1]} : vector<1x8xf32> to vector<1x1xf32>
    %361 = vector.extract %360[0, 0] : f32 from vector<1x1xf32>
    %362 = math.tanh %361 : f32
    %363 = vector.extract_strided_slice %4 {offsets = [2, 0], sizes = [1, 8], strides = [1, 1]} : vector<8x8xf32> to vector<1x8xf32>
    %364 = vector.broadcast %362 : f32 to vector<1x8xf32>
    %365 = arith.mulf %364, %363 : vector<1x8xf32>
    %366 = arith.addf %355, %365 : vector<1x8xf32>
    %367 = vector.extract_strided_slice %5 {offsets = [2, 0], sizes = [1, 8], strides = [1, 1]} : vector<8x8xf32> to vector<1x8xf32>
    %368 = vector.broadcast %362 : f32 to vector<1x8xf32>
    %369 = arith.mulf %368, %367 : vector<1x8xf32>
    %370 = arith.addf %359, %369 : vector<1x8xf32>
    %371 = vector.extract_strided_slice %366 {offsets = [0, 3], sizes = [1, 1], strides = [1, 1]} : vector<1x8xf32> to vector<1x1xf32>
    %372 = vector.extract %371[0, 0] : f32 from vector<1x1xf32>
    %373 = math.tanh %372 : f32
    %374 = vector.extract_strided_slice %4 {offsets = [3, 0], sizes = [1, 8], strides = [1, 1]} : vector<8x8xf32> to vector<1x8xf32>
    %375 = vector.broadcast %373 : f32 to vector<1x8xf32>
    %376 = arith.mulf %375, %374 : vector<1x8xf32>
    %377 = arith.addf %366, %376 : vector<1x8xf32>
    %378 = vector.extract_strided_slice %5 {offsets = [3, 0], sizes = [1, 8], strides = [1, 1]} : vector<8x8xf32> to vector<1x8xf32>
    %379 = vector.broadcast %373 : f32 to vector<1x8xf32>
    %380 = arith.mulf %379, %378 : vector<1x8xf32>
    %381 = arith.addf %370, %380 : vector<1x8xf32>
    %382 = vector.extract_strided_slice %377 {offsets = [0, 4], sizes = [1, 1], strides = [1, 1]} : vector<1x8xf32> to vector<1x1xf32>
    %383 = vector.extract %382[0, 0] : f32 from vector<1x1xf32>
    %384 = math.tanh %383 : f32
    %385 = vector.extract_strided_slice %4 {offsets = [4, 0], sizes = [1, 8], strides = [1, 1]} : vector<8x8xf32> to vector<1x8xf32>
    %386 = vector.broadcast %384 : f32 to vector<1x8xf32>
    %387 = arith.mulf %386, %385 : vector<1x8xf32>
    %388 = arith.addf %377, %387 : vector<1x8xf32>
    %389 = vector.extract_strided_slice %5 {offsets = [4, 0], sizes = [1, 8], strides = [1, 1]} : vector<8x8xf32> to vector<1x8xf32>
    %390 = vector.broadcast %384 : f32 to vector<1x8xf32>
    %391 = arith.mulf %390, %389 : vector<1x8xf32>
    %392 = arith.addf %381, %391 : vector<1x8xf32>
    %393 = vector.extract_strided_slice %388 {offsets = [0, 5], sizes = [1, 1], strides = [1, 1]} : vector<1x8xf32> to vector<1x1xf32>
    %394 = vector.extract %393[0, 0] : f32 from vector<1x1xf32>
    %395 = math.tanh %394 : f32
    %396 = vector.extract_strided_slice %4 {offsets = [5, 0], sizes = [1, 8], strides = [1, 1]} : vector<8x8xf32> to vector<1x8xf32>
    %397 = vector.broadcast %395 : f32 to vector<1x8xf32>
    %398 = arith.mulf %397, %396 : vector<1x8xf32>
    %399 = arith.addf %388, %398 : vector<1x8xf32>
    %400 = vector.extract_strided_slice %5 {offsets = [5, 0], sizes = [1, 8], strides = [1, 1]} : vector<8x8xf32> to vector<1x8xf32>
    %401 = vector.broadcast %395 : f32 to vector<1x8xf32>
    %402 = arith.mulf %401, %400 : vector<1x8xf32>
    %403 = arith.addf %392, %402 : vector<1x8xf32>
    %404 = vector.extract_strided_slice %399 {offsets = [0, 6], sizes = [1, 1], strides = [1, 1]} : vector<1x8xf32> to vector<1x1xf32>
    %405 = vector.extract %404[0, 0] : f32 from vector<1x1xf32>
    %406 = math.tanh %405 : f32
    %407 = vector.extract_strided_slice %4 {offsets = [6, 0], sizes = [1, 8], strides = [1, 1]} : vector<8x8xf32> to vector<1x8xf32>
    %408 = vector.broadcast %406 : f32 to vector<1x8xf32>
    %409 = arith.mulf %408, %407 : vector<1x8xf32>
    %410 = arith.addf %399, %409 : vector<1x8xf32>
    %411 = vector.extract_strided_slice %5 {offsets = [6, 0], sizes = [1, 8], strides = [1, 1]} : vector<8x8xf32> to vector<1x8xf32>
    %412 = vector.broadcast %406 : f32 to vector<1x8xf32>
    %413 = arith.mulf %412, %411 : vector<1x8xf32>
    %414 = arith.addf %403, %413 : vector<1x8xf32>
    %415 = vector.extract_strided_slice %410 {offsets = [0, 7], sizes = [1, 1], strides = [1, 1]} : vector<1x8xf32> to vector<1x1xf32>
    %416 = vector.extract %415[0, 0] : f32 from vector<1x1xf32>
    %417 = math.tanh %416 : f32
    %418 = vector.extract_strided_slice %5 {offsets = [7, 0], sizes = [1, 8], strides = [1, 1]} : vector<8x8xf32> to vector<1x8xf32>
    %419 = vector.broadcast %417 : f32 to vector<1x8xf32>
    %420 = arith.mulf %419, %418 : vector<1x8xf32>
    %421 = arith.addf %414, %420 : vector<1x8xf32>
    %422 = vector.extract_strided_slice %335 {offsets = [0, 8], sizes = [1, 10], strides = [1, 1]} : vector<1x18xf32> to vector<1x10xf32>
    %cst_34 = arith.constant dense<0.000000e+00> : vector<1x10xf32>
    %423 = tpu.matmul %421, %3, %cst_34 {dimension_numbers = #tpu.dot_dimension_numbers<[1], [0], [0], [1], [0, 0, 1, 1], [], []>} : vector<1x8xf32>, vector<8x10xf32>, vector<1x10xf32> -> vector<1x10xf32>
    %424 = arith.addf %422, %423 : vector<1x10xf32>
    %425 = vector.extract_strided_slice %424 {offsets = [0, 8], sizes = [1, 2], strides = [1, 1]} : vector<1x10xf32> to vector<1x2xf32>
    %426 = arith.addf %425, %6 : vector<1x2xf32>
    %427 = arith.negf %426 : vector<1x2xf32>
    %428 = math.exp %427 : vector<1x2xf32>
    %cst_35 = arith.constant 1.000000e+00 : f32
    %429 = vector.broadcast %cst_35 : f32 to vector<1x2xf32>
    %430 = arith.addf %429, %428 : vector<1x2xf32>
    %431 = arith.divf %429, %430 : vector<1x2xf32>
    %cst_36 = arith.constant 4.800000e+00 : f32
    %432 = vector.broadcast %cst_36 : f32 to vector<1x2xf32>
    %433 = arith.mulf %432, %431 : vector<1x2xf32>
    %cst_37 = arith.constant 8.000000e+00 : f32
    %434 = vector.broadcast %cst_37 : f32 to vector<1x2xf32>
    %435 = arith.addf %434, %433 : vector<1x2xf32>
    %436 = arith.index_cast %c3_i32 : i32 to index
    %c0_38 = arith.constant 0 : index
    %437 = vector.load %arg4[%436, %c0_38] : memref<8x2xf32, #tpu.memory_space<vmem>>, vector<1x2xf32>
    tpu.vector_store %arg4[%436, %c0_38], %435 {strides = array<i32>} : memref<8x2xf32, #tpu.memory_space<vmem>>, vector<1x2xf32>,
    %438 = vector.extract_strided_slice %424 {offsets = [0, 0], sizes = [1, 8], strides = [1, 1]} : vector<1x10xf32> to vector<1x8xf32>
    %c4_i32 = arith.constant 4 : i32
    %cst_39 = arith.constant dense<0.000000e+00> : vector<1x18xf32>
    %439 = tpu.matmul %438, %1, %cst_39 {dimension_numbers = #tpu.dot_dimension_numbers<[1], [0], [0], [1], [0, 0, 1, 1], [], []>} : vector<1x8xf32>, vector<8x18xf32>, vector<1x18xf32> -> vector<1x18xf32>
    %440 = arith.index_cast %c4_i32 : i32 to index
    %c0_40 = arith.constant 0 : index
    %441 = vector.load %arg6[%440, %c0_40] : memref<8x18xf32, #tpu.memory_space<vmem>>, vector<1x18xf32>
    %442 = arith.addf %439, %441 : vector<1x18xf32>
    %443 = vector.extract_strided_slice %442 {offsets = [0, 0], sizes = [1, 8], strides = [1, 1]} : vector<1x18xf32> to vector<1x8xf32>
    %cst_41 = arith.constant 0.000000e+00 : f32
    %444 = vector.broadcast %cst_41 : f32 to vector<1x8xf32>
    %445 = vector.extract_strided_slice %443 {offsets = [0, 0], sizes = [1, 1], strides = [1, 1]} : vector<1x8xf32> to vector<1x1xf32>
    %446 = vector.extract %445[0, 0] : f32 from vector<1x1xf32>
    %447 = math.tanh %446 : f32
    %448 = vector.extract_strided_slice %4 {offsets = [0, 0], sizes = [1, 8], strides = [1, 1]} : vector<8x8xf32> to vector<1x8xf32>
    %449 = vector.broadcast %447 : f32 to vector<1x8xf32>
    %450 = arith.mulf %449, %448 : vector<1x8xf32>
    %451 = arith.addf %443, %450 : vector<1x8xf32>
    %452 = vector.extract_strided_slice %5 {offsets = [0, 0], sizes = [1, 8], strides = [1, 1]} : vector<8x8xf32> to vector<1x8xf32>
    %453 = vector.broadcast %447 : f32 to vector<1x8xf32>
    %454 = arith.mulf %453, %452 : vector<1x8xf32>
    %455 = arith.addf %444, %454 : vector<1x8xf32>
    %456 = vector.extract_strided_slice %451 {offsets = [0, 1], sizes = [1, 1], strides = [1, 1]} : vector<1x8xf32> to vector<1x1xf32>
    %457 = vector.extract %456[0, 0] : f32 from vector<1x1xf32>
    %458 = math.tanh %457 : f32
    %459 = vector.extract_strided_slice %4 {offsets = [1, 0], sizes = [1, 8], strides = [1, 1]} : vector<8x8xf32> to vector<1x8xf32>
    %460 = vector.broadcast %458 : f32 to vector<1x8xf32>
    %461 = arith.mulf %460, %459 : vector<1x8xf32>
    %462 = arith.addf %451, %461 : vector<1x8xf32>
    %463 = vector.extract_strided_slice %5 {offsets = [1, 0], sizes = [1, 8], strides = [1, 1]} : vector<8x8xf32> to vector<1x8xf32>
    %464 = vector.broadcast %458 : f32 to vector<1x8xf32>
    %465 = arith.mulf %464, %463 : vector<1x8xf32>
    %466 = arith.addf %455, %465 : vector<1x8xf32>
    %467 = vector.extract_strided_slice %462 {offsets = [0, 2], sizes = [1, 1], strides = [1, 1]} : vector<1x8xf32> to vector<1x1xf32>
    %468 = vector.extract %467[0, 0] : f32 from vector<1x1xf32>
    %469 = math.tanh %468 : f32
    %470 = vector.extract_strided_slice %4 {offsets = [2, 0], sizes = [1, 8], strides = [1, 1]} : vector<8x8xf32> to vector<1x8xf32>
    %471 = vector.broadcast %469 : f32 to vector<1x8xf32>
    %472 = arith.mulf %471, %470 : vector<1x8xf32>
    %473 = arith.addf %462, %472 : vector<1x8xf32>
    %474 = vector.extract_strided_slice %5 {offsets = [2, 0], sizes = [1, 8], strides = [1, 1]} : vector<8x8xf32> to vector<1x8xf32>
    %475 = vector.broadcast %469 : f32 to vector<1x8xf32>
    %476 = arith.mulf %475, %474 : vector<1x8xf32>
    %477 = arith.addf %466, %476 : vector<1x8xf32>
    %478 = vector.extract_strided_slice %473 {offsets = [0, 3], sizes = [1, 1], strides = [1, 1]} : vector<1x8xf32> to vector<1x1xf32>
    %479 = vector.extract %478[0, 0] : f32 from vector<1x1xf32>
    %480 = math.tanh %479 : f32
    %481 = vector.extract_strided_slice %4 {offsets = [3, 0], sizes = [1, 8], strides = [1, 1]} : vector<8x8xf32> to vector<1x8xf32>
    %482 = vector.broadcast %480 : f32 to vector<1x8xf32>
    %483 = arith.mulf %482, %481 : vector<1x8xf32>
    %484 = arith.addf %473, %483 : vector<1x8xf32>
    %485 = vector.extract_strided_slice %5 {offsets = [3, 0], sizes = [1, 8], strides = [1, 1]} : vector<8x8xf32> to vector<1x8xf32>
    %486 = vector.broadcast %480 : f32 to vector<1x8xf32>
    %487 = arith.mulf %486, %485 : vector<1x8xf32>
    %488 = arith.addf %477, %487 : vector<1x8xf32>
    %489 = vector.extract_strided_slice %484 {offsets = [0, 4], sizes = [1, 1], strides = [1, 1]} : vector<1x8xf32> to vector<1x1xf32>
    %490 = vector.extract %489[0, 0] : f32 from vector<1x1xf32>
    %491 = math.tanh %490 : f32
    %492 = vector.extract_strided_slice %4 {offsets = [4, 0], sizes = [1, 8], strides = [1, 1]} : vector<8x8xf32> to vector<1x8xf32>
    %493 = vector.broadcast %491 : f32 to vector<1x8xf32>
    %494 = arith.mulf %493, %492 : vector<1x8xf32>
    %495 = arith.addf %484, %494 : vector<1x8xf32>
    %496 = vector.extract_strided_slice %5 {offsets = [4, 0], sizes = [1, 8], strides = [1, 1]} : vector<8x8xf32> to vector<1x8xf32>
    %497 = vector.broadcast %491 : f32 to vector<1x8xf32>
    %498 = arith.mulf %497, %496 : vector<1x8xf32>
    %499 = arith.addf %488, %498 : vector<1x8xf32>
    %500 = vector.extract_strided_slice %495 {offsets = [0, 5], sizes = [1, 1], strides = [1, 1]} : vector<1x8xf32> to vector<1x1xf32>
    %501 = vector.extract %500[0, 0] : f32 from vector<1x1xf32>
    %502 = math.tanh %501 : f32
    %503 = vector.extract_strided_slice %4 {offsets = [5, 0], sizes = [1, 8], strides = [1, 1]} : vector<8x8xf32> to vector<1x8xf32>
    %504 = vector.broadcast %502 : f32 to vector<1x8xf32>
    %505 = arith.mulf %504, %503 : vector<1x8xf32>
    %506 = arith.addf %495, %505 : vector<1x8xf32>
    %507 = vector.extract_strided_slice %5 {offsets = [5, 0], sizes = [1, 8], strides = [1, 1]} : vector<8x8xf32> to vector<1x8xf32>
    %508 = vector.broadcast %502 : f32 to vector<1x8xf32>
    %509 = arith.mulf %508, %507 : vector<1x8xf32>
    %510 = arith.addf %499, %509 : vector<1x8xf32>
    %511 = vector.extract_strided_slice %506 {offsets = [0, 6], sizes = [1, 1], strides = [1, 1]} : vector<1x8xf32> to vector<1x1xf32>
    %512 = vector.extract %511[0, 0] : f32 from vector<1x1xf32>
    %513 = math.tanh %512 : f32
    %514 = vector.extract_strided_slice %4 {offsets = [6, 0], sizes = [1, 8], strides = [1, 1]} : vector<8x8xf32> to vector<1x8xf32>
    %515 = vector.broadcast %513 : f32 to vector<1x8xf32>
    %516 = arith.mulf %515, %514 : vector<1x8xf32>
    %517 = arith.addf %506, %516 : vector<1x8xf32>
    %518 = vector.extract_strided_slice %5 {offsets = [6, 0], sizes = [1, 8], strides = [1, 1]} : vector<8x8xf32> to vector<1x8xf32>
    %519 = vector.broadcast %513 : f32 to vector<1x8xf32>
    %520 = arith.mulf %519, %518 : vector<1x8xf32>
    %521 = arith.addf %510, %520 : vector<1x8xf32>
    %522 = vector.extract_strided_slice %517 {offsets = [0, 7], sizes = [1, 1], strides = [1, 1]} : vector<1x8xf32> to vector<1x1xf32>
    %523 = vector.extract %522[0, 0] : f32 from vector<1x1xf32>
    %524 = math.tanh %523 : f32
    %525 = vector.extract_strided_slice %5 {offsets = [7, 0], sizes = [1, 8], strides = [1, 1]} : vector<8x8xf32> to vector<1x8xf32>
    %526 = vector.broadcast %524 : f32 to vector<1x8xf32>
    %527 = arith.mulf %526, %525 : vector<1x8xf32>
    %528 = arith.addf %521, %527 : vector<1x8xf32>
    %529 = vector.extract_strided_slice %442 {offsets = [0, 8], sizes = [1, 10], strides = [1, 1]} : vector<1x18xf32> to vector<1x10xf32>
    %cst_42 = arith.constant dense<0.000000e+00> : vector<1x10xf32>
    %530 = tpu.matmul %528, %3, %cst_42 {dimension_numbers = #tpu.dot_dimension_numbers<[1], [0], [0], [1], [0, 0, 1, 1], [], []>} : vector<1x8xf32>, vector<8x10xf32>, vector<1x10xf32> -> vector<1x10xf32>
    %531 = arith.addf %529, %530 : vector<1x10xf32>
    %532 = vector.extract_strided_slice %531 {offsets = [0, 8], sizes = [1, 2], strides = [1, 1]} : vector<1x10xf32> to vector<1x2xf32>
    %533 = arith.addf %532, %6 : vector<1x2xf32>
    %534 = arith.negf %533 : vector<1x2xf32>
    %535 = math.exp %534 : vector<1x2xf32>
    %cst_43 = arith.constant 1.000000e+00 : f32
    %536 = vector.broadcast %cst_43 : f32 to vector<1x2xf32>
    %537 = arith.addf %536, %535 : vector<1x2xf32>
    %538 = arith.divf %536, %537 : vector<1x2xf32>
    %cst_44 = arith.constant 4.800000e+00 : f32
    %539 = vector.broadcast %cst_44 : f32 to vector<1x2xf32>
    %540 = arith.mulf %539, %538 : vector<1x2xf32>
    %cst_45 = arith.constant 8.000000e+00 : f32
    %541 = vector.broadcast %cst_45 : f32 to vector<1x2xf32>
    %542 = arith.addf %541, %540 : vector<1x2xf32>
    %543 = arith.index_cast %c4_i32 : i32 to index
    %c0_46 = arith.constant 0 : index
    %544 = vector.load %arg4[%543, %c0_46] : memref<8x2xf32, #tpu.memory_space<vmem>>, vector<1x2xf32>
    tpu.vector_store %arg4[%543, %c0_46], %542 {strides = array<i32>} : memref<8x2xf32, #tpu.memory_space<vmem>>, vector<1x2xf32>,
    %545 = vector.extract_strided_slice %531 {offsets = [0, 0], sizes = [1, 8], strides = [1, 1]} : vector<1x10xf32> to vector<1x8xf32>
    %c5_i32 = arith.constant 5 : i32
    %cst_47 = arith.constant dense<0.000000e+00> : vector<1x18xf32>
    %546 = tpu.matmul %545, %1, %cst_47 {dimension_numbers = #tpu.dot_dimension_numbers<[1], [0], [0], [1], [0, 0, 1, 1], [], []>} : vector<1x8xf32>, vector<8x18xf32>, vector<1x18xf32> -> vector<1x18xf32>
    %547 = arith.index_cast %c5_i32 : i32 to index
    %c0_48 = arith.constant 0 : index
    %548 = vector.load %arg6[%547, %c0_48] : memref<8x18xf32, #tpu.memory_space<vmem>>, vector<1x18xf32>
    %549 = arith.addf %546, %548 : vector<1x18xf32>
    %550 = vector.extract_strided_slice %549 {offsets = [0, 0], sizes = [1, 8], strides = [1, 1]} : vector<1x18xf32> to vector<1x8xf32>
    %cst_49 = arith.constant 0.000000e+00 : f32
    %551 = vector.broadcast %cst_49 : f32 to vector<1x8xf32>
    %552 = vector.extract_strided_slice %550 {offsets = [0, 0], sizes = [1, 1], strides = [1, 1]} : vector<1x8xf32> to vector<1x1xf32>
    %553 = vector.extract %552[0, 0] : f32 from vector<1x1xf32>
    %554 = math.tanh %553 : f32
    %555 = vector.extract_strided_slice %4 {offsets = [0, 0], sizes = [1, 8], strides = [1, 1]} : vector<8x8xf32> to vector<1x8xf32>
    %556 = vector.broadcast %554 : f32 to vector<1x8xf32>
    %557 = arith.mulf %556, %555 : vector<1x8xf32>
    %558 = arith.addf %550, %557 : vector<1x8xf32>
    %559 = vector.extract_strided_slice %5 {offsets = [0, 0], sizes = [1, 8], strides = [1, 1]} : vector<8x8xf32> to vector<1x8xf32>
    %560 = vector.broadcast %554 : f32 to vector<1x8xf32>
    %561 = arith.mulf %560, %559 : vector<1x8xf32>
    %562 = arith.addf %551, %561 : vector<1x8xf32>
    %563 = vector.extract_strided_slice %558 {offsets = [0, 1], sizes = [1, 1], strides = [1, 1]} : vector<1x8xf32> to vector<1x1xf32>
    %564 = vector.extract %563[0, 0] : f32 from vector<1x1xf32>
    %565 = math.tanh %564 : f32
    %566 = vector.extract_strided_slice %4 {offsets = [1, 0], sizes = [1, 8], strides = [1, 1]} : vector<8x8xf32> to vector<1x8xf32>
    %567 = vector.broadcast %565 : f32 to vector<1x8xf32>
    %568 = arith.mulf %567, %566 : vector<1x8xf32>
    %569 = arith.addf %558, %568 : vector<1x8xf32>
    %570 = vector.extract_strided_slice %5 {offsets = [1, 0], sizes = [1, 8], strides = [1, 1]} : vector<8x8xf32> to vector<1x8xf32>
    %571 = vector.broadcast %565 : f32 to vector<1x8xf32>
    %572 = arith.mulf %571, %570 : vector<1x8xf32>
    %573 = arith.addf %562, %572 : vector<1x8xf32>
    %574 = vector.extract_strided_slice %569 {offsets = [0, 2], sizes = [1, 1], strides = [1, 1]} : vector<1x8xf32> to vector<1x1xf32>
    %575 = vector.extract %574[0, 0] : f32 from vector<1x1xf32>
    %576 = math.tanh %575 : f32
    %577 = vector.extract_strided_slice %4 {offsets = [2, 0], sizes = [1, 8], strides = [1, 1]} : vector<8x8xf32> to vector<1x8xf32>
    %578 = vector.broadcast %576 : f32 to vector<1x8xf32>
    %579 = arith.mulf %578, %577 : vector<1x8xf32>
    %580 = arith.addf %569, %579 : vector<1x8xf32>
    %581 = vector.extract_strided_slice %5 {offsets = [2, 0], sizes = [1, 8], strides = [1, 1]} : vector<8x8xf32> to vector<1x8xf32>
    %582 = vector.broadcast %576 : f32 to vector<1x8xf32>
    %583 = arith.mulf %582, %581 : vector<1x8xf32>
    %584 = arith.addf %573, %583 : vector<1x8xf32>
    %585 = vector.extract_strided_slice %580 {offsets = [0, 3], sizes = [1, 1], strides = [1, 1]} : vector<1x8xf32> to vector<1x1xf32>
    %586 = vector.extract %585[0, 0] : f32 from vector<1x1xf32>
    %587 = math.tanh %586 : f32
    %588 = vector.extract_strided_slice %4 {offsets = [3, 0], sizes = [1, 8], strides = [1, 1]} : vector<8x8xf32> to vector<1x8xf32>
    %589 = vector.broadcast %587 : f32 to vector<1x8xf32>
    %590 = arith.mulf %589, %588 : vector<1x8xf32>
    %591 = arith.addf %580, %590 : vector<1x8xf32>
    %592 = vector.extract_strided_slice %5 {offsets = [3, 0], sizes = [1, 8], strides = [1, 1]} : vector<8x8xf32> to vector<1x8xf32>
    %593 = vector.broadcast %587 : f32 to vector<1x8xf32>
    %594 = arith.mulf %593, %592 : vector<1x8xf32>
    %595 = arith.addf %584, %594 : vector<1x8xf32>
    %596 = vector.extract_strided_slice %591 {offsets = [0, 4], sizes = [1, 1], strides = [1, 1]} : vector<1x8xf32> to vector<1x1xf32>
    %597 = vector.extract %596[0, 0] : f32 from vector<1x1xf32>
    %598 = math.tanh %597 : f32
    %599 = vector.extract_strided_slice %4 {offsets = [4, 0], sizes = [1, 8], strides = [1, 1]} : vector<8x8xf32> to vector<1x8xf32>
    %600 = vector.broadcast %598 : f32 to vector<1x8xf32>
    %601 = arith.mulf %600, %599 : vector<1x8xf32>
    %602 = arith.addf %591, %601 : vector<1x8xf32>
    %603 = vector.extract_strided_slice %5 {offsets = [4, 0], sizes = [1, 8], strides = [1, 1]} : vector<8x8xf32> to vector<1x8xf32>
    %604 = vector.broadcast %598 : f32 to vector<1x8xf32>
    %605 = arith.mulf %604, %603 : vector<1x8xf32>
    %606 = arith.addf %595, %605 : vector<1x8xf32>
    %607 = vector.extract_strided_slice %602 {offsets = [0, 5], sizes = [1, 1], strides = [1, 1]} : vector<1x8xf32> to vector<1x1xf32>
    %608 = vector.extract %607[0, 0] : f32 from vector<1x1xf32>
    %609 = math.tanh %608 : f32
    %610 = vector.extract_strided_slice %4 {offsets = [5, 0], sizes = [1, 8], strides = [1, 1]} : vector<8x8xf32> to vector<1x8xf32>
    %611 = vector.broadcast %609 : f32 to vector<1x8xf32>
    %612 = arith.mulf %611, %610 : vector<1x8xf32>
    %613 = arith.addf %602, %612 : vector<1x8xf32>
    %614 = vector.extract_strided_slice %5 {offsets = [5, 0], sizes = [1, 8], strides = [1, 1]} : vector<8x8xf32> to vector<1x8xf32>
    %615 = vector.broadcast %609 : f32 to vector<1x8xf32>
    %616 = arith.mulf %615, %614 : vector<1x8xf32>
    %617 = arith.addf %606, %616 : vector<1x8xf32>
    %618 = vector.extract_strided_slice %613 {offsets = [0, 6], sizes = [1, 1], strides = [1, 1]} : vector<1x8xf32> to vector<1x1xf32>
    %619 = vector.extract %618[0, 0] : f32 from vector<1x1xf32>
    %620 = math.tanh %619 : f32
    %621 = vector.extract_strided_slice %4 {offsets = [6, 0], sizes = [1, 8], strides = [1, 1]} : vector<8x8xf32> to vector<1x8xf32>
    %622 = vector.broadcast %620 : f32 to vector<1x8xf32>
    %623 = arith.mulf %622, %621 : vector<1x8xf32>
    %624 = arith.addf %613, %623 : vector<1x8xf32>
    %625 = vector.extract_strided_slice %5 {offsets = [6, 0], sizes = [1, 8], strides = [1, 1]} : vector<8x8xf32> to vector<1x8xf32>
    %626 = vector.broadcast %620 : f32 to vector<1x8xf32>
    %627 = arith.mulf %626, %625 : vector<1x8xf32>
    %628 = arith.addf %617, %627 : vector<1x8xf32>
    %629 = vector.extract_strided_slice %624 {offsets = [0, 7], sizes = [1, 1], strides = [1, 1]} : vector<1x8xf32> to vector<1x1xf32>
    %630 = vector.extract %629[0, 0] : f32 from vector<1x1xf32>
    %631 = math.tanh %630 : f32
    %632 = vector.extract_strided_slice %5 {offsets = [7, 0], sizes = [1, 8], strides = [1, 1]} : vector<8x8xf32> to vector<1x8xf32>
    %633 = vector.broadcast %631 : f32 to vector<1x8xf32>
    %634 = arith.mulf %633, %632 : vector<1x8xf32>
    %635 = arith.addf %628, %634 : vector<1x8xf32>
    %636 = vector.extract_strided_slice %549 {offsets = [0, 8], sizes = [1, 10], strides = [1, 1]} : vector<1x18xf32> to vector<1x10xf32>
    %cst_50 = arith.constant dense<0.000000e+00> : vector<1x10xf32>
    %637 = tpu.matmul %635, %3, %cst_50 {dimension_numbers = #tpu.dot_dimension_numbers<[1], [0], [0], [1], [0, 0, 1, 1], [], []>} : vector<1x8xf32>, vector<8x10xf32>, vector<1x10xf32> -> vector<1x10xf32>
    %638 = arith.addf %636, %637 : vector<1x10xf32>
    %639 = vector.extract_strided_slice %638 {offsets = [0, 8], sizes = [1, 2], strides = [1, 1]} : vector<1x10xf32> to vector<1x2xf32>
    %640 = arith.addf %639, %6 : vector<1x2xf32>
    %641 = arith.negf %640 : vector<1x2xf32>
    %642 = math.exp %641 : vector<1x2xf32>
    %cst_51 = arith.constant 1.000000e+00 : f32
    %643 = vector.broadcast %cst_51 : f32 to vector<1x2xf32>
    %644 = arith.addf %643, %642 : vector<1x2xf32>
    %645 = arith.divf %643, %644 : vector<1x2xf32>
    %cst_52 = arith.constant 4.800000e+00 : f32
    %646 = vector.broadcast %cst_52 : f32 to vector<1x2xf32>
    %647 = arith.mulf %646, %645 : vector<1x2xf32>
    %cst_53 = arith.constant 8.000000e+00 : f32
    %648 = vector.broadcast %cst_53 : f32 to vector<1x2xf32>
    %649 = arith.addf %648, %647 : vector<1x2xf32>
    %650 = arith.index_cast %c5_i32 : i32 to index
    %c0_54 = arith.constant 0 : index
    %651 = vector.load %arg4[%650, %c0_54] : memref<8x2xf32, #tpu.memory_space<vmem>>, vector<1x2xf32>
    tpu.vector_store %arg4[%650, %c0_54], %649 {strides = array<i32>} : memref<8x2xf32, #tpu.memory_space<vmem>>, vector<1x2xf32>,
    %652 = vector.extract_strided_slice %638 {offsets = [0, 0], sizes = [1, 8], strides = [1, 1]} : vector<1x10xf32> to vector<1x8xf32>
    %c6_i32 = arith.constant 6 : i32
    %cst_55 = arith.constant dense<0.000000e+00> : vector<1x18xf32>
    %653 = tpu.matmul %652, %1, %cst_55 {dimension_numbers = #tpu.dot_dimension_numbers<[1], [0], [0], [1], [0, 0, 1, 1], [], []>} : vector<1x8xf32>, vector<8x18xf32>, vector<1x18xf32> -> vector<1x18xf32>
    %654 = arith.index_cast %c6_i32 : i32 to index
    %c0_56 = arith.constant 0 : index
    %655 = vector.load %arg6[%654, %c0_56] : memref<8x18xf32, #tpu.memory_space<vmem>>, vector<1x18xf32>
    %656 = arith.addf %653, %655 : vector<1x18xf32>
    %657 = vector.extract_strided_slice %656 {offsets = [0, 0], sizes = [1, 8], strides = [1, 1]} : vector<1x18xf32> to vector<1x8xf32>
    %cst_57 = arith.constant 0.000000e+00 : f32
    %658 = vector.broadcast %cst_57 : f32 to vector<1x8xf32>
    %659 = vector.extract_strided_slice %657 {offsets = [0, 0], sizes = [1, 1], strides = [1, 1]} : vector<1x8xf32> to vector<1x1xf32>
    %660 = vector.extract %659[0, 0] : f32 from vector<1x1xf32>
    %661 = math.tanh %660 : f32
    %662 = vector.extract_strided_slice %4 {offsets = [0, 0], sizes = [1, 8], strides = [1, 1]} : vector<8x8xf32> to vector<1x8xf32>
    %663 = vector.broadcast %661 : f32 to vector<1x8xf32>
    %664 = arith.mulf %663, %662 : vector<1x8xf32>
    %665 = arith.addf %657, %664 : vector<1x8xf32>
    %666 = vector.extract_strided_slice %5 {offsets = [0, 0], sizes = [1, 8], strides = [1, 1]} : vector<8x8xf32> to vector<1x8xf32>
    %667 = vector.broadcast %661 : f32 to vector<1x8xf32>
    %668 = arith.mulf %667, %666 : vector<1x8xf32>
    %669 = arith.addf %658, %668 : vector<1x8xf32>
    %670 = vector.extract_strided_slice %665 {offsets = [0, 1], sizes = [1, 1], strides = [1, 1]} : vector<1x8xf32> to vector<1x1xf32>
    %671 = vector.extract %670[0, 0] : f32 from vector<1x1xf32>
    %672 = math.tanh %671 : f32
    %673 = vector.extract_strided_slice %4 {offsets = [1, 0], sizes = [1, 8], strides = [1, 1]} : vector<8x8xf32> to vector<1x8xf32>
    %674 = vector.broadcast %672 : f32 to vector<1x8xf32>
    %675 = arith.mulf %674, %673 : vector<1x8xf32>
    %676 = arith.addf %665, %675 : vector<1x8xf32>
    %677 = vector.extract_strided_slice %5 {offsets = [1, 0], sizes = [1, 8], strides = [1, 1]} : vector<8x8xf32> to vector<1x8xf32>
    %678 = vector.broadcast %672 : f32 to vector<1x8xf32>
    %679 = arith.mulf %678, %677 : vector<1x8xf32>
    %680 = arith.addf %669, %679 : vector<1x8xf32>
    %681 = vector.extract_strided_slice %676 {offsets = [0, 2], sizes = [1, 1], strides = [1, 1]} : vector<1x8xf32> to vector<1x1xf32>
    %682 = vector.extract %681[0, 0] : f32 from vector<1x1xf32>
    %683 = math.tanh %682 : f32
    %684 = vector.extract_strided_slice %4 {offsets = [2, 0], sizes = [1, 8], strides = [1, 1]} : vector<8x8xf32> to vector<1x8xf32>
    %685 = vector.broadcast %683 : f32 to vector<1x8xf32>
    %686 = arith.mulf %685, %684 : vector<1x8xf32>
    %687 = arith.addf %676, %686 : vector<1x8xf32>
    %688 = vector.extract_strided_slice %5 {offsets = [2, 0], sizes = [1, 8], strides = [1, 1]} : vector<8x8xf32> to vector<1x8xf32>
    %689 = vector.broadcast %683 : f32 to vector<1x8xf32>
    %690 = arith.mulf %689, %688 : vector<1x8xf32>
    %691 = arith.addf %680, %690 : vector<1x8xf32>
    %692 = vector.extract_strided_slice %687 {offsets = [0, 3], sizes = [1, 1], strides = [1, 1]} : vector<1x8xf32> to vector<1x1xf32>
    %693 = vector.extract %692[0, 0] : f32 from vector<1x1xf32>
    %694 = math.tanh %693 : f32
    %695 = vector.extract_strided_slice %4 {offsets = [3, 0], sizes = [1, 8], strides = [1, 1]} : vector<8x8xf32> to vector<1x8xf32>
    %696 = vector.broadcast %694 : f32 to vector<1x8xf32>
    %697 = arith.mulf %696, %695 : vector<1x8xf32>
    %698 = arith.addf %687, %697 : vector<1x8xf32>
    %699 = vector.extract_strided_slice %5 {offsets = [3, 0], sizes = [1, 8], strides = [1, 1]} : vector<8x8xf32> to vector<1x8xf32>
    %700 = vector.broadcast %694 : f32 to vector<1x8xf32>
    %701 = arith.mulf %700, %699 : vector<1x8xf32>
    %702 = arith.addf %691, %701 : vector<1x8xf32>
    %703 = vector.extract_strided_slice %698 {offsets = [0, 4], sizes = [1, 1], strides = [1, 1]} : vector<1x8xf32> to vector<1x1xf32>
    %704 = vector.extract %703[0, 0] : f32 from vector<1x1xf32>
    %705 = math.tanh %704 : f32
    %706 = vector.extract_strided_slice %4 {offsets = [4, 0], sizes = [1, 8], strides = [1, 1]} : vector<8x8xf32> to vector<1x8xf32>
    %707 = vector.broadcast %705 : f32 to vector<1x8xf32>
    %708 = arith.mulf %707, %706 : vector<1x8xf32>
    %709 = arith.addf %698, %708 : vector<1x8xf32>
    %710 = vector.extract_strided_slice %5 {offsets = [4, 0], sizes = [1, 8], strides = [1, 1]} : vector<8x8xf32> to vector<1x8xf32>
    %711 = vector.broadcast %705 : f32 to vector<1x8xf32>
    %712 = arith.mulf %711, %710 : vector<1x8xf32>
    %713 = arith.addf %702, %712 : vector<1x8xf32>
    %714 = vector.extract_strided_slice %709 {offsets = [0, 5], sizes = [1, 1], strides = [1, 1]} : vector<1x8xf32> to vector<1x1xf32>
    %715 = vector.extract %714[0, 0] : f32 from vector<1x1xf32>
    %716 = math.tanh %715 : f32
    %717 = vector.extract_strided_slice %4 {offsets = [5, 0], sizes = [1, 8], strides = [1, 1]} : vector<8x8xf32> to vector<1x8xf32>
    %718 = vector.broadcast %716 : f32 to vector<1x8xf32>
    %719 = arith.mulf %718, %717 : vector<1x8xf32>
    %720 = arith.addf %709, %719 : vector<1x8xf32>
    %721 = vector.extract_strided_slice %5 {offsets = [5, 0], sizes = [1, 8], strides = [1, 1]} : vector<8x8xf32> to vector<1x8xf32>
    %722 = vector.broadcast %716 : f32 to vector<1x8xf32>
    %723 = arith.mulf %722, %721 : vector<1x8xf32>
    %724 = arith.addf %713, %723 : vector<1x8xf32>
    %725 = vector.extract_strided_slice %720 {offsets = [0, 6], sizes = [1, 1], strides = [1, 1]} : vector<1x8xf32> to vector<1x1xf32>
    %726 = vector.extract %725[0, 0] : f32 from vector<1x1xf32>
    %727 = math.tanh %726 : f32
    %728 = vector.extract_strided_slice %4 {offsets = [6, 0], sizes = [1, 8], strides = [1, 1]} : vector<8x8xf32> to vector<1x8xf32>
    %729 = vector.broadcast %727 : f32 to vector<1x8xf32>
    %730 = arith.mulf %729, %728 : vector<1x8xf32>
    %731 = arith.addf %720, %730 : vector<1x8xf32>
    %732 = vector.extract_strided_slice %5 {offsets = [6, 0], sizes = [1, 8], strides = [1, 1]} : vector<8x8xf32> to vector<1x8xf32>
    %733 = vector.broadcast %727 : f32 to vector<1x8xf32>
    %734 = arith.mulf %733, %732 : vector<1x8xf32>
    %735 = arith.addf %724, %734 : vector<1x8xf32>
    %736 = vector.extract_strided_slice %731 {offsets = [0, 7], sizes = [1, 1], strides = [1, 1]} : vector<1x8xf32> to vector<1x1xf32>
    %737 = vector.extract %736[0, 0] : f32 from vector<1x1xf32>
    %738 = math.tanh %737 : f32
    %739 = vector.extract_strided_slice %5 {offsets = [7, 0], sizes = [1, 8], strides = [1, 1]} : vector<8x8xf32> to vector<1x8xf32>
    %740 = vector.broadcast %738 : f32 to vector<1x8xf32>
    %741 = arith.mulf %740, %739 : vector<1x8xf32>
    %742 = arith.addf %735, %741 : vector<1x8xf32>
    %743 = vector.extract_strided_slice %656 {offsets = [0, 8], sizes = [1, 10], strides = [1, 1]} : vector<1x18xf32> to vector<1x10xf32>
    %cst_58 = arith.constant dense<0.000000e+00> : vector<1x10xf32>
    %744 = tpu.matmul %742, %3, %cst_58 {dimension_numbers = #tpu.dot_dimension_numbers<[1], [0], [0], [1], [0, 0, 1, 1], [], []>} : vector<1x8xf32>, vector<8x10xf32>, vector<1x10xf32> -> vector<1x10xf32>
    %745 = arith.addf %743, %744 : vector<1x10xf32>
    %746 = vector.extract_strided_slice %745 {offsets = [0, 8], sizes = [1, 2], strides = [1, 1]} : vector<1x10xf32> to vector<1x2xf32>
    %747 = arith.addf %746, %6 : vector<1x2xf32>
    %748 = arith.negf %747 : vector<1x2xf32>
    %749 = math.exp %748 : vector<1x2xf32>
    %cst_59 = arith.constant 1.000000e+00 : f32
    %750 = vector.broadcast %cst_59 : f32 to vector<1x2xf32>
    %751 = arith.addf %750, %749 : vector<1x2xf32>
    %752 = arith.divf %750, %751 : vector<1x2xf32>
    %cst_60 = arith.constant 4.800000e+00 : f32
    %753 = vector.broadcast %cst_60 : f32 to vector<1x2xf32>
    %754 = arith.mulf %753, %752 : vector<1x2xf32>
    %cst_61 = arith.constant 8.000000e+00 : f32
    %755 = vector.broadcast %cst_61 : f32 to vector<1x2xf32>
    %756 = arith.addf %755, %754 : vector<1x2xf32>
    %757 = arith.index_cast %c6_i32 : i32 to index
    %c0_62 = arith.constant 0 : index
    %758 = vector.load %arg4[%757, %c0_62] : memref<8x2xf32, #tpu.memory_space<vmem>>, vector<1x2xf32>
    tpu.vector_store %arg4[%757, %c0_62], %756 {strides = array<i32>} : memref<8x2xf32, #tpu.memory_space<vmem>>, vector<1x2xf32>,
    %759 = vector.extract_strided_slice %745 {offsets = [0, 0], sizes = [1, 8], strides = [1, 1]} : vector<1x10xf32> to vector<1x8xf32>
    %c7_i32 = arith.constant 7 : i32
    %cst_63 = arith.constant dense<0.000000e+00> : vector<1x18xf32>
    %760 = tpu.matmul %759, %1, %cst_63 {dimension_numbers = #tpu.dot_dimension_numbers<[1], [0], [0], [1], [0, 0, 1, 1], [], []>} : vector<1x8xf32>, vector<8x18xf32>, vector<1x18xf32> -> vector<1x18xf32>
    %761 = arith.index_cast %c7_i32 : i32 to index
    %c0_64 = arith.constant 0 : index
    %762 = vector.load %arg6[%761, %c0_64] : memref<8x18xf32, #tpu.memory_space<vmem>>, vector<1x18xf32>
    %763 = arith.addf %760, %762 : vector<1x18xf32>
    %764 = vector.extract_strided_slice %763 {offsets = [0, 0], sizes = [1, 8], strides = [1, 1]} : vector<1x18xf32> to vector<1x8xf32>
    %cst_65 = arith.constant 0.000000e+00 : f32
    %765 = vector.broadcast %cst_65 : f32 to vector<1x8xf32>
    %766 = vector.extract_strided_slice %764 {offsets = [0, 0], sizes = [1, 1], strides = [1, 1]} : vector<1x8xf32> to vector<1x1xf32>
    %767 = vector.extract %766[0, 0] : f32 from vector<1x1xf32>
    %768 = math.tanh %767 : f32
    %769 = vector.extract_strided_slice %4 {offsets = [0, 0], sizes = [1, 8], strides = [1, 1]} : vector<8x8xf32> to vector<1x8xf32>
    %770 = vector.broadcast %768 : f32 to vector<1x8xf32>
    %771 = arith.mulf %770, %769 : vector<1x8xf32>
    %772 = arith.addf %764, %771 : vector<1x8xf32>
    %773 = vector.extract_strided_slice %5 {offsets = [0, 0], sizes = [1, 8], strides = [1, 1]} : vector<8x8xf32> to vector<1x8xf32>
    %774 = vector.broadcast %768 : f32 to vector<1x8xf32>
    %775 = arith.mulf %774, %773 : vector<1x8xf32>
    %776 = arith.addf %765, %775 : vector<1x8xf32>
    %777 = vector.extract_strided_slice %772 {offsets = [0, 1], sizes = [1, 1], strides = [1, 1]} : vector<1x8xf32> to vector<1x1xf32>
    %778 = vector.extract %777[0, 0] : f32 from vector<1x1xf32>
    %779 = math.tanh %778 : f32
    %780 = vector.extract_strided_slice %4 {offsets = [1, 0], sizes = [1, 8], strides = [1, 1]} : vector<8x8xf32> to vector<1x8xf32>
    %781 = vector.broadcast %779 : f32 to vector<1x8xf32>
    %782 = arith.mulf %781, %780 : vector<1x8xf32>
    %783 = arith.addf %772, %782 : vector<1x8xf32>
    %784 = vector.extract_strided_slice %5 {offsets = [1, 0], sizes = [1, 8], strides = [1, 1]} : vector<8x8xf32> to vector<1x8xf32>
    %785 = vector.broadcast %779 : f32 to vector<1x8xf32>
    %786 = arith.mulf %785, %784 : vector<1x8xf32>
    %787 = arith.addf %776, %786 : vector<1x8xf32>
    %788 = vector.extract_strided_slice %783 {offsets = [0, 2], sizes = [1, 1], strides = [1, 1]} : vector<1x8xf32> to vector<1x1xf32>
    %789 = vector.extract %788[0, 0] : f32 from vector<1x1xf32>
    %790 = math.tanh %789 : f32
    %791 = vector.extract_strided_slice %4 {offsets = [2, 0], sizes = [1, 8], strides = [1, 1]} : vector<8x8xf32> to vector<1x8xf32>
    %792 = vector.broadcast %790 : f32 to vector<1x8xf32>
    %793 = arith.mulf %792, %791 : vector<1x8xf32>
    %794 = arith.addf %783, %793 : vector<1x8xf32>
    %795 = vector.extract_strided_slice %5 {offsets = [2, 0], sizes = [1, 8], strides = [1, 1]} : vector<8x8xf32> to vector<1x8xf32>
    %796 = vector.broadcast %790 : f32 to vector<1x8xf32>
    %797 = arith.mulf %796, %795 : vector<1x8xf32>
    %798 = arith.addf %787, %797 : vector<1x8xf32>
    %799 = vector.extract_strided_slice %794 {offsets = [0, 3], sizes = [1, 1], strides = [1, 1]} : vector<1x8xf32> to vector<1x1xf32>
    %800 = vector.extract %799[0, 0] : f32 from vector<1x1xf32>
    %801 = math.tanh %800 : f32
    %802 = vector.extract_strided_slice %4 {offsets = [3, 0], sizes = [1, 8], strides = [1, 1]} : vector<8x8xf32> to vector<1x8xf32>
    %803 = vector.broadcast %801 : f32 to vector<1x8xf32>
    %804 = arith.mulf %803, %802 : vector<1x8xf32>
    %805 = arith.addf %794, %804 : vector<1x8xf32>
    %806 = vector.extract_strided_slice %5 {offsets = [3, 0], sizes = [1, 8], strides = [1, 1]} : vector<8x8xf32> to vector<1x8xf32>
    %807 = vector.broadcast %801 : f32 to vector<1x8xf32>
    %808 = arith.mulf %807, %806 : vector<1x8xf32>
    %809 = arith.addf %798, %808 : vector<1x8xf32>
    %810 = vector.extract_strided_slice %805 {offsets = [0, 4], sizes = [1, 1], strides = [1, 1]} : vector<1x8xf32> to vector<1x1xf32>
    %811 = vector.extract %810[0, 0] : f32 from vector<1x1xf32>
    %812 = math.tanh %811 : f32
    %813 = vector.extract_strided_slice %4 {offsets = [4, 0], sizes = [1, 8], strides = [1, 1]} : vector<8x8xf32> to vector<1x8xf32>
    %814 = vector.broadcast %812 : f32 to vector<1x8xf32>
    %815 = arith.mulf %814, %813 : vector<1x8xf32>
    %816 = arith.addf %805, %815 : vector<1x8xf32>
    %817 = vector.extract_strided_slice %5 {offsets = [4, 0], sizes = [1, 8], strides = [1, 1]} : vector<8x8xf32> to vector<1x8xf32>
    %818 = vector.broadcast %812 : f32 to vector<1x8xf32>
    %819 = arith.mulf %818, %817 : vector<1x8xf32>
    %820 = arith.addf %809, %819 : vector<1x8xf32>
    %821 = vector.extract_strided_slice %816 {offsets = [0, 5], sizes = [1, 1], strides = [1, 1]} : vector<1x8xf32> to vector<1x1xf32>
    %822 = vector.extract %821[0, 0] : f32 from vector<1x1xf32>
    %823 = math.tanh %822 : f32
    %824 = vector.extract_strided_slice %4 {offsets = [5, 0], sizes = [1, 8], strides = [1, 1]} : vector<8x8xf32> to vector<1x8xf32>
    %825 = vector.broadcast %823 : f32 to vector<1x8xf32>
    %826 = arith.mulf %825, %824 : vector<1x8xf32>
    %827 = arith.addf %816, %826 : vector<1x8xf32>
    %828 = vector.extract_strided_slice %5 {offsets = [5, 0], sizes = [1, 8], strides = [1, 1]} : vector<8x8xf32> to vector<1x8xf32>
    %829 = vector.broadcast %823 : f32 to vector<1x8xf32>
    %830 = arith.mulf %829, %828 : vector<1x8xf32>
    %831 = arith.addf %820, %830 : vector<1x8xf32>
    %832 = vector.extract_strided_slice %827 {offsets = [0, 6], sizes = [1, 1], strides = [1, 1]} : vector<1x8xf32> to vector<1x1xf32>
    %833 = vector.extract %832[0, 0] : f32 from vector<1x1xf32>
    %834 = math.tanh %833 : f32
    %835 = vector.extract_strided_slice %4 {offsets = [6, 0], sizes = [1, 8], strides = [1, 1]} : vector<8x8xf32> to vector<1x8xf32>
    %836 = vector.broadcast %834 : f32 to vector<1x8xf32>
    %837 = arith.mulf %836, %835 : vector<1x8xf32>
    %838 = arith.addf %827, %837 : vector<1x8xf32>
    %839 = vector.extract_strided_slice %5 {offsets = [6, 0], sizes = [1, 8], strides = [1, 1]} : vector<8x8xf32> to vector<1x8xf32>
    %840 = vector.broadcast %834 : f32 to vector<1x8xf32>
    %841 = arith.mulf %840, %839 : vector<1x8xf32>
    %842 = arith.addf %831, %841 : vector<1x8xf32>
    %843 = vector.extract_strided_slice %838 {offsets = [0, 7], sizes = [1, 1], strides = [1, 1]} : vector<1x8xf32> to vector<1x1xf32>
    %844 = vector.extract %843[0, 0] : f32 from vector<1x1xf32>
    %845 = math.tanh %844 : f32
    %846 = vector.extract_strided_slice %5 {offsets = [7, 0], sizes = [1, 8], strides = [1, 1]} : vector<8x8xf32> to vector<1x8xf32>
    %847 = vector.broadcast %845 : f32 to vector<1x8xf32>
    %848 = arith.mulf %847, %846 : vector<1x8xf32>
    %849 = arith.addf %842, %848 : vector<1x8xf32>
    %850 = vector.extract_strided_slice %763 {offsets = [0, 8], sizes = [1, 10], strides = [1, 1]} : vector<1x18xf32> to vector<1x10xf32>
    %cst_66 = arith.constant dense<0.000000e+00> : vector<1x10xf32>
    %851 = tpu.matmul %849, %3, %cst_66 {dimension_numbers = #tpu.dot_dimension_numbers<[1], [0], [0], [1], [0, 0, 1, 1], [], []>} : vector<1x8xf32>, vector<8x10xf32>, vector<1x10xf32> -> vector<1x10xf32>
    %852 = arith.addf %850, %851 : vector<1x10xf32>
    %853 = vector.extract_strided_slice %852 {offsets = [0, 8], sizes = [1, 2], strides = [1, 1]} : vector<1x10xf32> to vector<1x2xf32>
    %854 = arith.addf %853, %6 : vector<1x2xf32>
    %855 = arith.negf %854 : vector<1x2xf32>
    %856 = math.exp %855 : vector<1x2xf32>
    %cst_67 = arith.constant 1.000000e+00 : f32
    %857 = vector.broadcast %cst_67 : f32 to vector<1x2xf32>
    %858 = arith.addf %857, %856 : vector<1x2xf32>
    %859 = arith.divf %857, %858 : vector<1x2xf32>
    %cst_68 = arith.constant 4.800000e+00 : f32
    %860 = vector.broadcast %cst_68 : f32 to vector<1x2xf32>
    %861 = arith.mulf %860, %859 : vector<1x2xf32>
    %cst_69 = arith.constant 8.000000e+00 : f32
    %862 = vector.broadcast %cst_69 : f32 to vector<1x2xf32>
    %863 = arith.addf %862, %861 : vector<1x2xf32>
    %864 = arith.index_cast %c7_i32 : i32 to index
    %c0_70 = arith.constant 0 : index
    %865 = vector.load %arg4[%864, %c0_70] : memref<8x2xf32, #tpu.memory_space<vmem>>, vector<1x2xf32>
    tpu.vector_store %arg4[%864, %c0_70], %863 {strides = array<i32>} : memref<8x2xf32, #tpu.memory_space<vmem>>, vector<1x2xf32>,
    %866 = vector.extract_strided_slice %852 {offsets = [0, 0], sizes = [1, 8], strides = [1, 1]} : vector<1x10xf32> to vector<1x8xf32>
    %c8_i32 = arith.constant 8 : i32
    %c0_71 = arith.constant 0 : index
    %c0_72 = arith.constant 0 : index
    %867 = vector.load %arg5[%c0_71, %c0_72] : memref<1x8xf32, #tpu.memory_space<vmem>>, vector<1x8xf32>
    tpu.vector_store %arg5[%c0_71, %c0_72], %866 {strides = array<i32>} : memref<1x8xf32, #tpu.memory_space<vmem>>, vector<1x8xf32>,
    return
  }
  func.func @transform_0(%arg0: i32) -> (i32, i32) {
    %c0_i32 = arith.constant 0 : i32
    %c0_i32_0 = arith.constant 0 : i32
    %c0_i32_1 = arith.constant 0 : i32
    return %c0_i32, %c0_i32_0 : i32, i32
  }
  func.func @transform_1(%arg0: i32) -> (i32, i32) {
    %c0_i32 = arith.constant 0 : i32
    %c0_i32_0 = arith.constant 0 : i32
    %c0_i32_1 = arith.constant 0 : i32
    return %c0_i32, %c0_i32_0 : i32, i32
  }
  func.func @transform_2(%arg0: i32) -> (i32, i32) {
    %c0_i32 = arith.constant 0 : i32
    %c0_i32_0 = arith.constant 0 : i32
    %c0_i32_1 = arith.constant 0 : i32
    return %c0_i32, %c0_i32_0 : i32, i32
  }
  func.func @transform_3(%arg0: i32) -> (i32, i32) {
    %c0_i32 = arith.constant 0 : i32
    %c0_i32_0 = arith.constant 0 : i32
    %c0_i32_1 = arith.constant 0 : i32
    return %c0_i32, %c0_i32_0 : i32, i32
  }
  func.func @transform_4(%arg0: i32) -> (i32, i32) {
    %c0_i32 = arith.constant 0 : i32
    %c0_i32_0 = arith.constant 0 : i32
    %c0_i32_1 = arith.constant 0 : i32
    return %c0_i32, %c0_i32_0 : i32, i32
  }
}

</mosaic_0001>

<llo_original>
// kernel: tpu_custom_call.1
$region0: #{tpu_custom_call.1}
  #allocation0 [shape = 'u32[]', space=smem, size = 0x4, offset = 0x4, fixed_abs, tag = 'smem constant byte address 0x4 - core index']
  #allocation1 [shape = 'u32[144,128]{1,0:T(1,128)}', space=vmem, size = 0x12000, scoped, tag = 'internal scratch']
  #allocation2 [shape = 'f32[8,18]{1,0:T(8,128)}', space=vmem, size = 0x1000, scoped, tag = 'scratch operand']
  %s0 = inlined_call_operand.vmem [shape: f32[48,18], index: 0, kind: input, shape index: {}]
  %s1 = inlined_call_operand.vmem [shape: f32[1,8], index: 1, kind: input, shape index: {}]
  %s2 = inlined_call_operand.vmem [shape: f32[8,4], index: 2, kind: input, shape index: {}]
  %s3 = inlined_call_operand.vmem [shape: f32[8,2], index: 3, kind: output, shape index: {0}]
  %s4 = inlined_call_operand.hbm [shape: f32[1,8], index: 4, kind: output, shape index: {1}]
  %5 = xla_tuple %s3, %s4
  %s6 = sld [smem:[#allocation0]]
  $region30: #{tpu_custom_call.1} parent=0
    _
  %s8 = ssub.s32 1, %s6
  %s9 = scalar_select 0, %s8, %s6
  $region1: #{tpu_custom_call.1} parent=0
    #allocation3 [shape = 'u8[512]{0}', space=vmem, size = 0x400, scoped, tag = 'output window, operand 1, single buffered']
    #allocation4 [shape = 's32[1]{0}', space=sflag, size = 0x4, scoped, tag = 'scoped memory for tpu_custom_call.1']
    %10 = vsyncpa [#allocation4], 0
    // Predicated region
    $region2: #{tpu_custom_call.1} parent=1 // pred_check
      _
    $region3: #{tpu_custom_call.1} parent=1 // pred_check_branch
      %12 = sbr.rel (0) target = $region5
    $region4: #{tpu_custom_call.1} parent=1 // pred_region
      _
    $region5: #{tpu_custom_call.1} parent=1 // pred_fallthru
      _
    // Predicated region
    $region6: #{tpu_custom_call.1} parent=1 // pred_check
      _
    $region7: #{tpu_custom_call.1} parent=1 // pred_check_branch
      %14 = sbr.rel (0) target = $region9
    $region8: #{tpu_custom_call.1} parent=1 // pred_region
      _
    $region9: #{tpu_custom_call.1} parent=1 // pred_fallthru
      _
    // Predicated region
    $region10: #{tpu_custom_call.1} parent=1 // pred_check
      _
    $region11: #{tpu_custom_call.1} parent=1 // pred_check_branch
      %16 = sbr.rel (0) target = $region13
    $region12: #{tpu_custom_call.1} parent=1 // pred_region
      _
    $region13: #{tpu_custom_call.1} parent=1 // pred_fallthru
      _
    %v17 = vld [vmem:[%s0] sm:$0xff]
    %v18 = vld [vmem:[%s0 + $0x8] sm:$0xff]
    %v19 = vld [vmem:[%s0 + $0x10] sm:$0xff]
    %v20 = vld [vmem:[%s0 + $0x18] sm:$0xff]
    %v21 = vld [vmem:[%s0 + $0x20] sm:$0xff]
    %v22 = vld [vmem:[%s0 + $0x28] sm:$0xff]
    %v23 = vld [vmem:[%s2] sm:$0xff]
    %vm24 = vcmask 31744
    %v26 = vsel %vm24, %v23, 0
    %vm28 = vcmask 1043456
    %v30 = vsel %vm28, %v18, 0
    %32 = vmatprep.subr.mxu0 0.0
    %33 = vmatpush1.msra.mxu0 0.0
    %34 = vmatprep.subr.mxu0 0.0
    %35 = vmatpush1.msra.mxu0 0.0
    %36 = vmatprep.subr.mxu0 0.0
    %37 = vmatpush1.msra.mxu0 0.0
    %38 = vmatprep.subr.mxu0 0.0
    %39 = vmatpush1.msra.mxu0 0.0
    %40 = vmatprep.subr.mxu0 0.0
    %41 = vmatpush1.msra.mxu0 0.0
    %42 = vmatprep.subr.mxu0 0.0
    %43 = vmatpush1.msra.mxu0 0.0
    %44 = vmatprep.subr.mxu0 0.0
    %45 = vmatpush1.msra.mxu0 0.0
    %46 = vmatprep.subr.mxu0 0.0
    %47 = vmatpush1.msra.mxu0 0.0
    %48 = vmatprep.subr.mxu0 0.0
    %49 = vmatpush1.msra.mxu0 0.0
    %50 = vmatprep.subr.mxu0 0.0
    %51 = vmatpush1.msra.mxu0 0.0
    %52 = vmatprep.subr.mxu0 0.0
    %53 = vmatpush1.msra.mxu0 0.0
    %54 = vmatprep.subr.mxu0 0.0
    %55 = vmatpush1.msra.mxu0 0.0
    %56 = vmatprep.subr.mxu0 0.0
    %57 = vmatpush1.msra.mxu0 0.0
    %58 = vmatprep.subr.mxu0 0.0
    %59 = vmatpush1.msra.mxu0 0.0
    %60 = vmatprep.subr.mxu0 0.0
    %61 = vmatpush1.msra.mxu0 0.0
    %62 = vmatprep.subr.mxu0 0.0
    %63 = vmatpush1.msra.mxu0 %v30
    %64 = vmatprep.subr.mxu0 0.0
    %65 = vmatpush2.msra.mxu0 0.0
    %66 = vmatprep.subr.mxu0 0.0
    %67 = vmatpush2.msra.mxu0 0.0
    %68 = vmatprep.subr.mxu0 0.0
    %69 = vmatpush2.msra.mxu0 0.0
    %70 = vmatprep.subr.mxu0 0.0
    %71 = vmatpush2.msra.mxu0 0.0
    %72 = vmatprep.subr.mxu0 0.0
    %73 = vmatpush2.msra.mxu0 0.0
    %74 = vmatprep.subr.mxu0 0.0
    %75 = vmatpush2.msra.mxu0 0.0
    %76 = vmatprep.subr.mxu0 0.0
    %77 = vmatpush2.msra.mxu0 0.0
    %78 = vmatprep.subr.mxu0 0.0
    %79 = vmatpush2.msra.mxu0 0.0
    %80 = vmatprep.subr.mxu0 0.0
    %81 = vmatpush2.msra.mxu0 0.0
    %82 = vmatprep.subr.mxu0 0.0
    %83 = vmatpush2.msra.mxu0 0.0
    %84 = vmatprep.subr.mxu0 0.0
    %85 = vmatpush2.msra.mxu0 0.0
    %86 = vmatprep.subr.mxu0 0.0
    %87 = vmatpush2.msra.mxu0 0.0
    %88 = vmatprep.subr.mxu0 0.0
    %89 = vmatpush2.msra.mxu0 0.0
    %90 = vmatprep.subr.mxu0 0.0
    %91 = vmatpush2.msra.mxu0 0.0
    %92 = vmatprep.subr.mxu0 0.0
    %93 = vmatpush2.msra.mxu0 0.0
    %94 = vmatprep.subr.mxu0 0.0
    %95 = vmatpush2.msra.mxu0 0.0
    %96 = vmatprep.mubr.f32.mxu0 0.0
    %97 = vmatmul.mubr.f32.gmra.mxu0 %v26
    %v98 = vpop.f32.mrf.mxu0
    %v99 = vadd.f32 0.0, %v98
    %v100 = vpop.f32.mrf.mxu0
    %101 = vdwg.mxu0
    %vm102 = vcmask 146432
    %103 = vst.msk [vmem:[#allocation2] sm:$0xff] %vm102, %v99
    %v104 = vld [vmem:[%s1] sm:$0x1]
    %v105 = vld [vmem:[#allocation2] sm:$0x1]
    %vm106 = vcmask 64512
    %v108 = vsel %vm106, %v104, 0
    %110 = vmatprep.subr.mxu0 0.0
    %111 = vmatpush1.msra.mxu0 0.0
    %112 = vmatprep.subr.mxu0 0.0
    %113 = vmatpush1.msra.mxu0 0.0
    %114 = vmatprep.subr.mxu0 0.0
    %115 = vmatpush1.msra.mxu0 0.0
    %116 = vmatprep.subr.mxu0 0.0
    %117 = vmatpush1.msra.mxu0 0.0
    %118 = vmatprep.subr.mxu0 0.0
    %119 = vmatpush1.msra.mxu0 0.0
    %120 = vmatprep.subr.mxu0 0.0
    %121 = vmatpush1.msra.mxu0 0.0
    %122 = vmatprep.subr.mxu0 0.0
    %123 = vmatpush1.msra.mxu0 0.0
    %124 = vmatprep.subr.mxu0 0.0
    %125 = vmatpush1.msra.mxu0 0.0
    %126 = vmatprep.subr.mxu0 0.0
    %127 = vmatpush1.msra.mxu0 0.0
    %128 = vmatprep.subr.mxu0 0.0
    %129 = vmatpush1.msra.mxu0 0.0
    %130 = vmatprep.subr.mxu0 0.0
    %131 = vmatpush1.msra.mxu0 0.0
    %132 = vmatprep.subr.mxu0 0.0
    %133 = vmatpush1.msra.mxu0 0.0
    %134 = vmatprep.subr.mxu0 0.0
    %135 = vmatpush1.msra.mxu0 0.0
    %136 = vmatprep.subr.mxu0 0.0
    %137 = vmatpush1.msra.mxu0 0.0
    %138 = vmatprep.subr.mxu0 0.0
    %139 = vmatpush1.msra.mxu0 0.0
    %140 = vmatprep.subr.mxu0 0.0
    %141 = vmatpush1.msra.mxu0 %v17
    %142 = vmatprep.subr.mxu0 0.0
    %143 = vmatpush2.msra.mxu0 0.0
    %144 = vmatprep.subr.mxu0 0.0
    %145 = vmatpush2.msra.mxu0 0.0
    %146 = vmatprep.subr.mxu0 0.0
    %147 = vmatpush2.msra.mxu0 0.0
    %148 = vmatprep.subr.mxu0 0.0
    %149 = vmatpush2.msra.mxu0 0.0
    %150 = vmatprep.subr.mxu0 0.0
    %151 = vmatpush2.msra.mxu0 0.0
    %152 = vmatprep.subr.mxu0 0.0
    %153 = vmatpush2.msra.mxu0 0.0
    %154 = vmatprep.subr.mxu0 0.0
    %155 = vmatpush2.msra.mxu0 0.0
    %156 = vmatprep.subr.mxu0 0.0
    %157 = vmatpush2.msra.mxu0 0.0
    %158 = vmatprep.subr.mxu0 0.0
    %159 = vmatpush2.msra.mxu0 0.0
    %160 = vmatprep.subr.mxu0 0.0
    %161 = vmatpush2.msra.mxu0 0.0
    %162 = vmatprep.subr.mxu0 0.0
    %163 = vmatpush2.msra.mxu0 0.0
    %164 = vmatprep.subr.mxu0 0.0
    %165 = vmatpush2.msra.mxu0 0.0
    %166 = vmatprep.subr.mxu0 0.0
    %167 = vmatpush2.msra.mxu0 0.0
    %168 = vmatprep.subr.mxu0 0.0
    %169 = vmatpush2.msra.mxu0 0.0
    %170 = vmatprep.subr.mxu0 0.0
    %171 = vmatpush2.msra.mxu0 0.0
    %172 = vmatprep.subr.mxu0 0.0
    %173 = vmatpush2.msra.mxu0 0.0
    %174 = vmatprep.mubr.f32.mxu0 0.0
    %175 = vmatmul.mubr.f32.gmra.mxu0 %v108
    %v176 = vpop.f32.mrf.mxu0
    %v177 = vadd.f32 %v105, %v176
    %v178 = vpop.f32.mrf.mxu0
    %179 = vdwg.mxu0
    %s180 = vtos %v177
    %v181 = vstv %s180
    %v182 = vtanh.pop %v181
    %s183 = vtos %v182
    %v184 = vstv %s183
    %v185 = vmul.f32 %v184, %v20
    %v186 = vadd.f32 %v177, %v185
    %v187 = vmul.f32 %v184, %v21
    %v188 = vadd.f32 %v187, 0.0
    %189 = vrot.lane.b32.xlu0 %v186, 127
    %v190 = vpop.permute.xlu0 %189
    %s191 = vtos %v190
    %v192 = vstv %s191
    %v193 = vtanh.pop %v192
    %s194 = vtos %v193
    %v195 = vstv %s194
    %v196 = vmul.f32 %v195, %v20
    %v198 = vrot.slane %v196, 1
    %v200 = vadd.f32 %v186, %v198
    %v201 = vmul.f32 %v195, %v21
    %v203 = vrot.slane %v201, 1
    %v205 = vadd.f32 %v188, %v203
    %206 = vrot.lane.b32.xlu0 %v200, 126
    %v207 = vpop.permute.xlu0 %206
    %s208 = vtos %v207
    %v209 = vstv %s208
    %v210 = vtanh.pop %v209
    %s211 = vtos %v210
    %v212 = vstv %s211
    %v213 = vmul.f32 %v212, %v20
    %v215 = vrot.slane %v213, 2
    %v217 = vadd.f32 %v200, %v215
    %v218 = vmul.f32 %v212, %v21
    %v220 = vrot.slane %v218, 2
    %v222 = vadd.f32 %v205, %v220
    %223 = vrot.lane.b32.xlu0 %v217, 125
    %v224 = vpop.permute.xlu0 %223
    %s225 = vtos %v224
    %v226 = vstv %s225
    %v227 = vtanh.pop %v226
    %s228 = vtos %v227
    %v229 = vstv %s228
    %v230 = vmul.f32 %v229, %v20
    %v232 = vrot.slane %v230, 3
    %v234 = vadd.f32 %v217, %v232
    %v235 = vmul.f32 %v229, %v21
    %v237 = vrot.slane %v235, 3
    %v239 = vadd.f32 %v222, %v237
    %240 = vrot.lane.b32.xlu0 %v234, 124
    %v241 = vpop.permute.xlu0 %240
    %s242 = vtos %v241
    %v243 = vstv %s242
    %v244 = vtanh.pop %v243
    %s245 = vtos %v244
    %v246 = vstv %s245
    %v247 = vmul.f32 %v246, %v20
    %v249 = vrot.slane %v247, 4
    %v251 = vadd.f32 %v234, %v249
    %v252 = vmul.f32 %v246, %v21
    %v254 = vrot.slane %v252, 4
    %v256 = vadd.f32 %v239, %v254
    %257 = vrot.lane.b32.xlu0 %v251, 123
    %v258 = vpop.permute.xlu0 %257
    %s259 = vtos %v258
    %v260 = vstv %s259
    %v261 = vtanh.pop %v260
    %s262 = vtos %v261
    %v263 = vstv %s262
    %v264 = vmul.f32 %v263, %v20
    %v266 = vrot.slane %v264, 5
    %v268 = vadd.f32 %v251, %v266
    %v269 = vmul.f32 %v263, %v21
    %v271 = vrot.slane %v269, 5
    %v273 = vadd.f32 %v256, %v271
    %274 = vrot.lane.b32.xlu0 %v268, 122
    %v275 = vpop.permute.xlu0 %274
    %s276 = vtos %v275
    %v277 = vstv %s276
    %v278 = vtanh.pop %v277
    %s279 = vtos %v278
    %v280 = vstv %s279
    %v281 = vmul.f32 %v280, %v20
    %v283 = vrot.slane %v281, 6
    %v285 = vadd.f32 %v268, %v283
    %v286 = vmul.f32 %v280, %v21
    %v288 = vrot.slane %v286, 6
    %v290 = vadd.f32 %v273, %v288
    %291 = vrot.lane.b32.xlu0 %v285, 121
    %v292 = vpop.permute.xlu0 %291
    %s293 = vtos %v292
    %v294 = vstv %s293
    %v295 = vtanh.pop %v294
    %s296 = vtos %v295
    %v297 = vstv %s296
    %v298 = vmul.f32 %v297, %v21
    %v300 = vrot.slane %v298, 7
    %v302 = vadd.f32 %v290, %v300
    %v304 = vsel %vm106, %v302, 0
    %306 = vmatprep.subr.mxu0 0.0
    %307 = vmatpush1.msra.mxu0 0.0
    %308 = vmatprep.subr.mxu0 0.0
    %309 = vmatpush1.msra.mxu0 0.0
    %310 = vmatprep.subr.mxu0 0.0
    %311 = vmatpush1.msra.mxu0 0.0
    %312 = vmatprep.subr.mxu0 0.0
    %313 = vmatpush1.msra.mxu0 0.0
    %314 = vmatprep.subr.mxu0 0.0
    %315 = vmatpush1.msra.mxu0 0.0
    %316 = vmatprep.subr.mxu0 0.0
    %317 = vmatpush1.msra.mxu0 0.0
    %318 = vmatprep.subr.mxu0 0.0
    %319 = vmatpush1.msra.mxu0 0.0
    %320 = vmatprep.subr.mxu0 0.0
    %321 = vmatpush1.msra.mxu0 0.0
    %322 = vmatprep.subr.mxu0 0.0
    %323 = vmatpush1.msra.mxu0 0.0
    %324 = vmatprep.subr.mxu0 0.0
    %325 = vmatpush1.msra.mxu0 0.0
    %326 = vmatprep.subr.mxu0 0.0
    %327 = vmatpush1.msra.mxu0 0.0
    %328 = vmatprep.subr.mxu0 0.0
    %329 = vmatpush1.msra.mxu0 0.0
    %330 = vmatprep.subr.mxu0 0.0
    %331 = vmatpush1.msra.mxu0 0.0
    %332 = vmatprep.subr.mxu0 0.0
    %333 = vmatpush1.msra.mxu0 0.0
    %334 = vmatprep.subr.mxu0 0.0
    %335 = vmatpush1.msra.mxu0 0.0
    %336 = vmatprep.subr.mxu0 0.0
    %337 = vmatpush1.msra.mxu0 %v19
    %338 = vmatprep.subr.mxu0 0.0
    %339 = vmatpush2.msra.mxu0 0.0
    %340 = vmatprep.subr.mxu0 0.0
    %341 = vmatpush2.msra.mxu0 0.0
    %342 = vmatprep.subr.mxu0 0.0
    %343 = vmatpush2.msra.mxu0 0.0
    %344 = vmatprep.subr.mxu0 0.0
    %345 = vmatpush2.msra.mxu0 0.0
    %346 = vmatprep.subr.mxu0 0.0
    %347 = vmatpush2.msra.mxu0 0.0
    %348 = vmatprep.subr.mxu0 0.0
    %349 = vmatpush2.msra.mxu0 0.0
    %350 = vmatprep.subr.mxu0 0.0
    %351 = vmatpush2.msra.mxu0 0.0
    %352 = vmatprep.subr.mxu0 0.0
    %353 = vmatpush2.msra.mxu0 0.0
    %354 = vmatprep.subr.mxu0 0.0
    %355 = vmatpush2.msra.mxu0 0.0
    %356 = vmatprep.subr.mxu0 0.0
    %357 = vmatpush2.msra.mxu0 0.0
    %358 = vmatprep.subr.mxu0 0.0
    %359 = vmatpush2.msra.mxu0 0.0
    %360 = vmatprep.subr.mxu0 0.0
    %361 = vmatpush2.msra.mxu0 0.0
    %362 = vmatprep.subr.mxu0 0.0
    %363 = vmatpush2.msra.mxu0 0.0
    %364 = vmatprep.subr.mxu0 0.0
    %365 = vmatpush2.msra.mxu0 0.0
    %366 = vmatprep.subr.mxu0 0.0
    %367 = vmatpush2.msra.mxu0 0.0
    %368 = vmatprep.subr.mxu0 0.0
    %369 = vmatpush2.msra.mxu0 0.0
    %370 = vmatprep.mubr.f32.mxu0 0.0
    %371 = vmatmul.mubr.f32.gmra.mxu0 %v304
    %v372 = vpop.f32.mrf.mxu0
    %v373 = vadd.f32 0.0, %v372
    %v374 = vpop.f32.mrf.mxu0
    %375 = vdwg.mxu0
    %377 = vrot.lane.b32.xlu0 %v373, 8
    %v378 = vpop.permute.xlu0 %377
    %v380 = vadd.f32 %v177, %v378
    %382 = vrot.lane.b32.xlu0 %v22, 16
    %v383 = vpop.permute.xlu0 %382
    %v385 = vadd.f32 %v380, %v383
    %v386 = vxor.u32 %v385, 2147483648
    %v387 = vmul.f32 %v386, 1.442695
    %v388 = vpow.pop %v387
    %v389 = vadd.f32 %v388, 1.0
    %v390 = vrcp.pop %v389
    %v391 = vmul.f32 1.0, %v390
    %v392 = vmul.f32 %v391, 4.8
    %v393 = vadd.f32 %v392, 8.0
    %395 = vrot.lane.b32.xlu0 %v393, 112
    %v396 = vpop.permute.xlu0 %395
    %vm398 = vcmask 8192
    %399 = vst.msk [vmem:[%s3] sm:$0x1] %vm398, %v396
    %v400 = vld [vmem:[#allocation2 + $0x1] sm:$0x1]
    %402 = vrot.lane.b32.xlu0 %v380, 120
    %v403 = vpop.permute.xlu0 %402
    %v404 = vsel %vm106, %v403, 0
    %406 = vmatprep.subr.mxu0 0.0
    %407 = vmatpush1.msra.mxu0 0.0
    %408 = vmatprep.subr.mxu0 0.0
    %409 = vmatpush1.msra.mxu0 0.0
    %410 = vmatprep.subr.mxu0 0.0
    %411 = vmatpush1.msra.mxu0 0.0
    %412 = vmatprep.subr.mxu0 0.0
    %413 = vmatpush1.msra.mxu0 0.0
    %414 = vmatprep.subr.mxu0 0.0
    %415 = vmatpush1.msra.mxu0 0.0
    %416 = vmatprep.subr.mxu0 0.0
    %417 = vmatpush1.msra.mxu0 0.0
    %418 = vmatprep.subr.mxu0 0.0
    %419 = vmatpush1.msra.mxu0 0.0
    %420 = vmatprep.subr.mxu0 0.0
    %421 = vmatpush1.msra.mxu0 0.0
    %422 = vmatprep.subr.mxu0 0.0
    %423 = vmatpush1.msra.mxu0 0.0
    %424 = vmatprep.subr.mxu0 0.0
    %425 = vmatpush1.msra.mxu0 0.0
    %426 = vmatprep.subr.mxu0 0.0
    %427 = vmatpush1.msra.mxu0 0.0
    %428 = vmatprep.subr.mxu0 0.0
    %429 = vmatpush1.msra.mxu0 0.0
    %430 = vmatprep.subr.mxu0 0.0
    %431 = vmatpush1.msra.mxu0 0.0
    %432 = vmatprep.subr.mxu0 0.0
    %433 = vmatpush1.msra.mxu0 0.0
    %434 = vmatprep.subr.mxu0 0.0
    %435 = vmatpush1.msra.mxu0 0.0
    %436 = vmatprep.subr.mxu0 0.0
    %437 = vmatpush1.msra.mxu0 %v17
    %438 = vmatprep.subr.mxu0 0.0
    %439 = vmatpush2.msra.mxu0 0.0
    %440 = vmatprep.subr.mxu0 0.0
    %441 = vmatpush2.msra.mxu0 0.0
    %442 = vmatprep.subr.mxu0 0.0
    %443 = vmatpush2.msra.mxu0 0.0
    %444 = vmatprep.subr.mxu0 0.0
    %445 = vmatpush2.msra.mxu0 0.0
    %446 = vmatprep.subr.mxu0 0.0
    %447 = vmatpush2.msra.mxu0 0.0
    %448 = vmatprep.subr.mxu0 0.0
    %449 = vmatpush2.msra.mxu0 0.0
    %450 = vmatprep.subr.mxu0 0.0
    %451 = vmatpush2.msra.mxu0 0.0
    %452 = vmatprep.subr.mxu0 0.0
    %453 = vmatpush2.msra.mxu0 0.0
    %454 = vmatprep.subr.mxu0 0.0
    %455 = vmatpush2.msra.mxu0 0.0
    %456 = vmatprep.subr.mxu0 0.0
    %457 = vmatpush2.msra.mxu0 0.0
    %458 = vmatprep.subr.mxu0 0.0
    %459 = vmatpush2.msra.mxu0 0.0
    %460 = vmatprep.subr.mxu0 0.0
    %461 = vmatpush2.msra.mxu0 0.0
    %462 = vmatprep.subr.mxu0 0.0
    %463 = vmatpush2.msra.mxu0 0.0
    %464 = vmatprep.subr.mxu0 0.0
    %465 = vmatpush2.msra.mxu0 0.0
    %466 = vmatprep.subr.mxu0 0.0
    %467 = vmatpush2.msra.mxu0 0.0
    %468 = vmatprep.subr.mxu0 0.0
    %469 = vmatpush2.msra.mxu0 0.0
    %470 = vmatprep.mubr.f32.mxu0 0.0
    %471 = vmatmul.mubr.f32.gmra.mxu0 %v404
    %v472 = vpop.f32.mrf.mxu0
    %v473 = vadd.f32 %v400, %v472
    %v474 = vpop.f32.mrf.mxu0
    %475 = vdwg.mxu0
    %s476 = vtos %v473
    %v477 = vstv %s476
    %v478 = vtanh.pop %v477
    %s479 = vtos %v478
    %v480 = vstv %s479
    %v481 = vmul.f32 %v480, %v20
    %v482 = vadd.f32 %v473, %v481
    %v483 = vmul.f32 %v480, %v21
    %v484 = vadd.f32 %v483, 0.0
    %485 = vrot.lane.b32.xlu0 %v482, 127
    %v486 = vpop.permute.xlu0 %485
    %s487 = vtos %v486
    %v488 = vstv %s487
    %v489 = vtanh.pop %v488
    %s490 = vtos %v489
    %v491 = vstv %s490
    %v492 = vmul.f32 %v491, %v20
    %v494 = vrot.slane %v492, 1
    %v496 = vadd.f32 %v482, %v494
    %v497 = vmul.f32 %v491, %v21
    %v499 = vrot.slane %v497, 1
    %v501 = vadd.f32 %v484, %v499
    %502 = vrot.lane.b32.xlu0 %v496, 126
    %v503 = vpop.permute.xlu0 %502
    %s504 = vtos %v503
    %v505 = vstv %s504
    %v506 = vtanh.pop %v505
    %s507 = vtos %v506
    %v508 = vstv %s507
    %v509 = vmul.f32 %v508, %v20
    %v511 = vrot.slane %v509, 2
    %v513 = vadd.f32 %v496, %v511
    %v514 = vmul.f32 %v508, %v21
    %v516 = vrot.slane %v514, 2
    %v518 = vadd.f32 %v501, %v516
    %519 = vrot.lane.b32.xlu0 %v513, 125
    %v520 = vpop.permute.xlu0 %519
    %s521 = vtos %v520
    %v522 = vstv %s521
    %v523 = vtanh.pop %v522
    %s524 = vtos %v523
    %v525 = vstv %s524
    %v526 = vmul.f32 %v525, %v20
    %v528 = vrot.slane %v526, 3
    %v530 = vadd.f32 %v513, %v528
    %v531 = vmul.f32 %v525, %v21
    %v533 = vrot.slane %v531, 3
    %v535 = vadd.f32 %v518, %v533
    %536 = vrot.lane.b32.xlu0 %v530, 124
    %v537 = vpop.permute.xlu0 %536
    %s538 = vtos %v537
    %v539 = vstv %s538
    %v540 = vtanh.pop %v539
    %s541 = vtos %v540
    %v542 = vstv %s541
    %v543 = vmul.f32 %v542, %v20
    %v545 = vrot.slane %v543, 4
    %v547 = vadd.f32 %v530, %v545
    %v548 = vmul.f32 %v542, %v21
    %v550 = vrot.slane %v548, 4
    %v552 = vadd.f32 %v535, %v550
    %553 = vrot.lane.b32.xlu0 %v547, 123
    %v554 = vpop.permute.xlu0 %553
    %s555 = vtos %v554
    %v556 = vstv %s555
    %v557 = vtanh.pop %v556
    %s558 = vtos %v557
    %v559 = vstv %s558
    %v560 = vmul.f32 %v559, %v20
    %v562 = vrot.slane %v560, 5
    %v564 = vadd.f32 %v547, %v562
    %v565 = vmul.f32 %v559, %v21
    %v567 = vrot.slane %v565, 5
    %v569 = vadd.f32 %v552, %v567
    %570 = vrot.lane.b32.xlu0 %v564, 122
    %v571 = vpop.permute.xlu0 %570
    %s572 = vtos %v571
    %v573 = vstv %s572
    %v574 = vtanh.pop %v573
    %s575 = vtos %v574
    %v576 = vstv %s575
    %v577 = vmul.f32 %v576, %v20
    %v579 = vrot.slane %v577, 6
    %v581 = vadd.f32 %v564, %v579
    %v582 = vmul.f32 %v576, %v21
    %v584 = vrot.slane %v582, 6
    %v586 = vadd.f32 %v569, %v584
    %587 = vrot.lane.b32.xlu0 %v581, 121
    %v588 = vpop.permute.xlu0 %587
    %s589 = vtos %v588
    %v590 = vstv %s589
    %v591 = vtanh.pop %v590
    %s592 = vtos %v591
    %v593 = vstv %s592
    %v594 = vmul.f32 %v593, %v21
    %v596 = vrot.slane %v594, 7
    %v598 = vadd.f32 %v586, %v596
    %v600 = vsel %vm106, %v598, 0
    %602 = vmatprep.subr.mxu0 0.0
    %603 = vmatpush1.msra.mxu0 0.0
    %604 = vmatprep.subr.mxu0 0.0
    %605 = vmatpush1.msra.mxu0 0.0
    %606 = vmatprep.subr.mxu0 0.0
    %607 = vmatpush1.msra.mxu0 0.0
    %608 = vmatprep.subr.mxu0 0.0
    %609 = vmatpush1.msra.mxu0 0.0
    %610 = vmatprep.subr.mxu0 0.0
    %611 = vmatpush1.msra.mxu0 0.0
    %612 = vmatprep.subr.mxu0 0.0
    %613 = vmatpush1.msra.mxu0 0.0
    %614 = vmatprep.subr.mxu0 0.0
    %615 = vmatpush1.msra.mxu0 0.0
    %616 = vmatprep.subr.mxu0 0.0
    %617 = vmatpush1.msra.mxu0 0.0
    %618 = vmatprep.subr.mxu0 0.0
    %619 = vmatpush1.msra.mxu0 0.0
    %620 = vmatprep.subr.mxu0 0.0
    %621 = vmatpush1.msra.mxu0 0.0
    %622 = vmatprep.subr.mxu0 0.0
    %623 = vmatpush1.msra.mxu0 0.0
    %624 = vmatprep.subr.mxu0 0.0
    %625 = vmatpush1.msra.mxu0 0.0
    %626 = vmatprep.subr.mxu0 0.0
    %627 = vmatpush1.msra.mxu0 0.0
    %628 = vmatprep.subr.mxu0 0.0
    %629 = vmatpush1.msra.mxu0 0.0
    %630 = vmatprep.subr.mxu0 0.0
    %631 = vmatpush1.msra.mxu0 0.0
    %632 = vmatprep.subr.mxu0 0.0
    %633 = vmatpush1.msra.mxu0 %v19
    %634 = vmatprep.subr.mxu0 0.0
    %635 = vmatpush2.msra.mxu0 0.0
    %636 = vmatprep.subr.mxu0 0.0
    %637 = vmatpush2.msra.mxu0 0.0
    %638 = vmatprep.subr.mxu0 0.0
    %639 = vmatpush2.msra.mxu0 0.0
    %640 = vmatprep.subr.mxu0 0.0
    %641 = vmatpush2.msra.mxu0 0.0
    %642 = vmatprep.subr.mxu0 0.0
    %643 = vmatpush2.msra.mxu0 0.0
    %644 = vmatprep.subr.mxu0 0.0
    %645 = vmatpush2.msra.mxu0 0.0
    %646 = vmatprep.subr.mxu0 0.0
    %647 = vmatpush2.msra.mxu0 0.0
    %648 = vmatprep.subr.mxu0 0.0
    %649 = vmatpush2.msra.mxu0 0.0
    %650 = vmatprep.subr.mxu0 0.0
    %651 = vmatpush2.msra.mxu0 0.0
    %652 = vmatprep.subr.mxu0 0.0
    %653 = vmatpush2.msra.mxu0 0.0
    %654 = vmatprep.subr.mxu0 0.0
    %655 = vmatpush2.msra.mxu0 0.0
    %656 = vmatprep.subr.mxu0 0.0
    %657 = vmatpush2.msra.mxu0 0.0
    %658 = vmatprep.subr.mxu0 0.0
    %659 = vmatpush2.msra.mxu0 0.0
    %660 = vmatprep.subr.mxu0 0.0
    %661 = vmatpush2.msra.mxu0 0.0
    %662 = vmatprep.subr.mxu0 0.0
    %663 = vmatpush2.msra.mxu0 0.0
    %664 = vmatprep.subr.mxu0 0.0
    %665 = vmatpush2.msra.mxu0 0.0
    %666 = vmatprep.mubr.f32.mxu0 0.0
    %667 = vmatmul.mubr.f32.gmra.mxu0 %v600
    %v668 = vpop.f32.mrf.mxu0
    %v669 = vadd.f32 0.0, %v668
    %v670 = vpop.f32.mrf.mxu0
    %671 = vdwg.mxu0
    %673 = vrot.lane.b32.xlu0 %v669, 8
    %v674 = vpop.permute.xlu0 %673
    %v676 = vadd.f32 %v473, %v674
    %v677 = vadd.f32 %v676, %v383
    %v678 = vxor.u32 %v677, 2147483648
    %v679 = vmul.f32 %v678, 1.442695
    %v680 = vpow.pop %v679
    %v681 = vadd.f32 %v680, 1.0
    %v682 = vrcp.pop %v681
    %v683 = vmul.f32 1.0, %v682
    %v684 = vmul.f32 %v683, 4.8
    %v685 = vadd.f32 %v684, 8.0
    %687 = vrot.lane.b32.xlu0 %v685, 112
    %v688 = vpop.permute.xlu0 %687
    %690 = vst.msk [vmem:[%s3 + $0x1] sm:$0x1] %vm398, %v688
    %v691 = vld [vmem:[#allocation2 + $0x2] sm:$0x1]
    %693 = vrot.lane.b32.xlu0 %v676, 120
    %v694 = vpop.permute.xlu0 %693
    %v695 = vsel %vm106, %v694, 0
    %697 = vmatprep.subr.mxu0 0.0
    %698 = vmatpush1.msra.mxu0 0.0
    %699 = vmatprep.subr.mxu0 0.0
    %700 = vmatpush1.msra.mxu0 0.0
    %701 = vmatprep.subr.mxu0 0.0
    %702 = vmatpush1.msra.mxu0 0.0
    %703 = vmatprep.subr.mxu0 0.0
    %704 = vmatpush1.msra.mxu0 0.0
    %705 = vmatprep.subr.mxu0 0.0
    %706 = vmatpush1.msra.mxu0 0.0
    %707 = vmatprep.subr.mxu0 0.0
    %708 = vmatpush1.msra.mxu0 0.0
    %709 = vmatprep.subr.mxu0 0.0
    %710 = vmatpush1.msra.mxu0 0.0
    %711 = vmatprep.subr.mxu0 0.0
    %712 = vmatpush1.msra.mxu0 0.0
    %713 = vmatprep.subr.mxu0 0.0
    %714 = vmatpush1.msra.mxu0 0.0
    %715 = vmatprep.subr.mxu0 0.0
    %716 = vmatpush1.msra.mxu0 0.0
    %717 = vmatprep.subr.mxu0 0.0
    %718 = vmatpush1.msra.mxu0 0.0
    %719 = vmatprep.subr.mxu0 0.0
    %720 = vmatpush1.msra.mxu0 0.0
    %721 = vmatprep.subr.mxu0 0.0
    %722 = vmatpush1.msra.mxu0 0.0
    %723 = vmatprep.subr.mxu0 0.0
    %724 = vmatpush1.msra.mxu0 0.0
    %725 = vmatprep.subr.mxu0 0.0
    %726 = vmatpush1.msra.mxu0 0.0
    %727 = vmatprep.subr.mxu0 0.0
    %728 = vmatpush1.msra.mxu0 %v17
    %729 = vmatprep.subr.mxu0 0.0
    %730 = vmatpush2.msra.mxu0 0.0
    %731 = vmatprep.subr.mxu0 0.0
    %732 = vmatpush2.msra.mxu0 0.0
    %733 = vmatprep.subr.mxu0 0.0
    %734 = vmatpush2.msra.mxu0 0.0
    %735 = vmatprep.subr.mxu0 0.0
    %736 = vmatpush2.msra.mxu0 0.0
    %737 = vmatprep.subr.mxu0 0.0
    %738 = vmatpush2.msra.mxu0 0.0
    %739 = vmatprep.subr.mxu0 0.0
    %740 = vmatpush2.msra.mxu0 0.0
    %741 = vmatprep.subr.mxu0 0.0
    %742 = vmatpush2.msra.mxu0 0.0
    %743 = vmatprep.subr.mxu0 0.0
    %744 = vmatpush2.msra.mxu0 0.0
    %745 = vmatprep.subr.mxu0 0.0
    %746 = vmatpush2.msra.mxu0 0.0
    %747 = vmatprep.subr.mxu0 0.0
    %748 = vmatpush2.msra.mxu0 0.0
    %749 = vmatprep.subr.mxu0 0.0
    %750 = vmatpush2.msra.mxu0 0.0
    %751 = vmatprep.subr.mxu0 0.0
    %752 = vmatpush2.msra.mxu0 0.0
    %753 = vmatprep.subr.mxu0 0.0
    %754 = vmatpush2.msra.mxu0 0.0
    %755 = vmatprep.subr.mxu0 0.0
    %756 = vmatpush2.msra.mxu0 0.0
    %757 = vmatprep.subr.mxu0 0.0
    %758 = vmatpush2.msra.mxu0 0.0
    %759 = vmatprep.subr.mxu0 0.0
    %760 = vmatpush2.msra.mxu0 0.0
    %761 = vmatprep.mubr.f32.mxu0 0.0
    %762 = vmatmul.mubr.f32.gmra.mxu0 %v695
    %v763 = vpop.f32.mrf.mxu0
    %v764 = vadd.f32 %v691, %v763
    %v765 = vpop.f32.mrf.mxu0
    %766 = vdwg.mxu0
    %s767 = vtos %v764
    %v768 = vstv %s767
    %v769 = vtanh.pop %v768
    %s770 = vtos %v769
    %v771 = vstv %s770
    %v772 = vmul.f32 %v771, %v20
    %v773 = vadd.f32 %v764, %v772
    %v774 = vmul.f32 %v771, %v21
    %v775 = vadd.f32 %v774, 0.0
    %776 = vrot.lane.b32.xlu0 %v773, 127
    %v777 = vpop.permute.xlu0 %776
    %s778 = vtos %v777
    %v779 = vstv %s778
    %v780 = vtanh.pop %v779
    %s781 = vtos %v780
    %v782 = vstv %s781
    %v783 = vmul.f32 %v782, %v20
    %v785 = vrot.slane %v783, 1
    %v787 = vadd.f32 %v773, %v785
    %v788 = vmul.f32 %v782, %v21
    %v790 = vrot.slane %v788, 1
    %v792 = vadd.f32 %v775, %v790
    %793 = vrot.lane.b32.xlu0 %v787, 126
    %v794 = vpop.permute.xlu0 %793
    %s795 = vtos %v794
    %v796 = vstv %s795
    %v797 = vtanh.pop %v796
    %s798 = vtos %v797
    %v799 = vstv %s798
    %v800 = vmul.f32 %v799, %v20
    %v802 = vrot.slane %v800, 2
    %v804 = vadd.f32 %v787, %v802
    %v805 = vmul.f32 %v799, %v21
    %v807 = vrot.slane %v805, 2
    %v809 = vadd.f32 %v792, %v807
    %810 = vrot.lane.b32.xlu0 %v804, 125
    %v811 = vpop.permute.xlu0 %810
    %s812 = vtos %v811
    %v813 = vstv %s812
    %v814 = vtanh.pop %v813
    %s815 = vtos %v814
    %v816 = vstv %s815
    %v817 = vmul.f32 %v816, %v20
    %v819 = vrot.slane %v817, 3
    %v821 = vadd.f32 %v804, %v819
    %v822 = vmul.f32 %v816, %v21
    %v824 = vrot.slane %v822, 3
    %v826 = vadd.f32 %v809, %v824
    %827 = vrot.lane.b32.xlu0 %v821, 124
    %v828 = vpop.permute.xlu0 %827
    %s829 = vtos %v828
    %v830 = vstv %s829
    %v831 = vtanh.pop %v830
    %s832 = vtos %v831
    %v833 = vstv %s832
    %v834 = vmul.f32 %v833, %v20
    %v836 = vrot.slane %v834, 4
    %v838 = vadd.f32 %v821, %v836
    %v839 = vmul.f32 %v833, %v21
    %v841 = vrot.slane %v839, 4
    %v843 = vadd.f32 %v826, %v841
    %844 = vrot.lane.b32.xlu0 %v838, 123
    %v845 = vpop.permute.xlu0 %844
    %s846 = vtos %v845
    %v847 = vstv %s846
    %v848 = vtanh.pop %v847
    %s849 = vtos %v848
    %v850 = vstv %s849
    %v851 = vmul.f32 %v850, %v20
    %v853 = vrot.slane %v851, 5
    %v855 = vadd.f32 %v838, %v853
    %v856 = vmul.f32 %v850, %v21
    %v858 = vrot.slane %v856, 5
    %v860 = vadd.f32 %v843, %v858
    %861 = vrot.lane.b32.xlu0 %v855, 122
    %v862 = vpop.permute.xlu0 %861
    %s863 = vtos %v862
    %v864 = vstv %s863
    %v865 = vtanh.pop %v864
    %s866 = vtos %v865
    %v867 = vstv %s866
    %v868 = vmul.f32 %v867, %v20
    %v870 = vrot.slane %v868, 6
    %v872 = vadd.f32 %v855, %v870
    %v873 = vmul.f32 %v867, %v21
    %v875 = vrot.slane %v873, 6
    %v877 = vadd.f32 %v860, %v875
    %878 = vrot.lane.b32.xlu0 %v872, 121
    %v879 = vpop.permute.xlu0 %878
    %s880 = vtos %v879
    %v881 = vstv %s880
    %v882 = vtanh.pop %v881
    %s883 = vtos %v882
    %v884 = vstv %s883
    %v885 = vmul.f32 %v884, %v21
    %v887 = vrot.slane %v885, 7
    %v889 = vadd.f32 %v877, %v887
    %v891 = vsel %vm106, %v889, 0
    %893 = vmatprep.subr.mxu0 0.0
    %894 = vmatpush1.msra.mxu0 0.0
    %895 = vmatprep.subr.mxu0 0.0
    %896 = vmatpush1.msra.mxu0 0.0
    %897 = vmatprep.subr.mxu0 0.0
    %898 = vmatpush1.msra.mxu0 0.0
    %899 = vmatprep.subr.mxu0 0.0
    %900 = vmatpush1.msra.mxu0 0.0
    %901 = vmatprep.subr.mxu0 0.0
    %902 = vmatpush1.msra.mxu0 0.0
    %903 = vmatprep.subr.mxu0 0.0
    %904 = vmatpush1.msra.mxu0 0.0
    %905 = vmatprep.subr.mxu0 0.0
    %906 = vmatpush1.msra.mxu0 0.0
    %907 = vmatprep.subr.mxu0 0.0
    %908 = vmatpush1.msra.mxu0 0.0
    %909 = vmatprep.subr.mxu0 0.0
    %910 = vmatpush1.msra.mxu0 0.0
    %911 = vmatprep.subr.mxu0 0.0
    %912 = vmatpush1.msra.mxu0 0.0
    %913 = vmatprep.subr.mxu0 0.0
    %914 = vmatpush1.msra.mxu0 0.0
    %915 = vmatprep.subr.mxu0 0.0
    %916 = vmatpush1.msra.mxu0 0.0
    %917 = vmatprep.subr.mxu0 0.0
    %918 = vmatpush1.msra.mxu0 0.0
    %919 = vmatprep.subr.mxu0 0.0
    %920 = vmatpush1.msra.mxu0 0.0
    %921 = vmatprep.subr.mxu0 0.0
    %922 = vmatpush1.msra.mxu0 0.0
    %923 = vmatprep.subr.mxu0 0.0
    %924 = vmatpush1.msra.mxu0 %v19
    %925 = vmatprep.subr.mxu0 0.0
    %926 = vmatpush2.msra.mxu0 0.0
    %927 = vmatprep.subr.mxu0 0.0
    %928 = vmatpush2.msra.mxu0 0.0
    %929 = vmatprep.subr.mxu0 0.0
    %930 = vmatpush2.msra.mxu0 0.0
    %931 = vmatprep.subr.mxu0 0.0
    %932 = vmatpush2.msra.mxu0 0.0
    %933 = vmatprep.subr.mxu0 0.0
    %934 = vmatpush2.msra.mxu0 0.0
    %935 = vmatprep.subr.mxu0 0.0
    %936 = vmatpush2.msra.mxu0 0.0
    %937 = vmatprep.subr.mxu0 0.0
    %938 = vmatpush2.msra.mxu0 0.0
    %939 = vmatprep.subr.mxu0 0.0
    %940 = vmatpush2.msra.mxu0 0.0
    %941 = vmatprep.subr.mxu0 0.0
    %942 = vmatpush2.msra.mxu0 0.0
    %943 = vmatprep.subr.mxu0 0.0
    %944 = vmatpush2.msra.mxu0 0.0
    %945 = vmatprep.subr.mxu0 0.0
    %946 = vmatpush2.msra.mxu0 0.0
    %947 = vmatprep.subr.mxu0 0.0
    %948 = vmatpush2.msra.mxu0 0.0
    %949 = vmatprep.subr.mxu0 0.0
    %950 = vmatpush2.msra.mxu0 0.0
    %951 = vmatprep.subr.mxu0 0.0
    %952 = vmatpush2.msra.mxu0 0.0
    %953 = vmatprep.subr.mxu0 0.0
    %954 = vmatpush2.msra.mxu0 0.0
    %955 = vmatprep.subr.mxu0 0.0
    %956 = vmatpush2.msra.mxu0 0.0
    %957 = vmatprep.mubr.f32.mxu0 0.0
    %958 = vmatmul.mubr.f32.gmra.mxu0 %v891
    %v959 = vpop.f32.mrf.mxu0
    %v960 = vadd.f32 0.0, %v959
    %v961 = vpop.f32.mrf.mxu0
    %962 = vdwg.mxu0
    %964 = vrot.lane.b32.xlu0 %v960, 8
    %v965 = vpop.permute.xlu0 %964
    %v967 = vadd.f32 %v764, %v965
    %v968 = vadd.f32 %v967, %v383
    %v969 = vxor.u32 %v968, 2147483648
    %v970 = vmul.f32 %v969, 1.442695
    %v971 = vpow.pop %v970
    %v972 = vadd.f32 %v971, 1.0
    %v973 = vrcp.pop %v972
    %v974 = vmul.f32 1.0, %v973
    %v975 = vmul.f32 %v974, 4.8
    %v976 = vadd.f32 %v975, 8.0
    %978 = vrot.lane.b32.xlu0 %v976, 112
    %v979 = vpop.permute.xlu0 %978
    %981 = vst.msk [vmem:[%s3 + $0x2] sm:$0x1] %vm398, %v979
    %v982 = vld [vmem:[#allocation2 + $0x3] sm:$0x1]
    %984 = vrot.lane.b32.xlu0 %v967, 120
    %v985 = vpop.permute.xlu0 %984
    %v986 = vsel %vm106, %v985, 0
    %988 = vmatprep.subr.mxu0 0.0
    %989 = vmatpush1.msra.mxu0 0.0
    %990 = vmatprep.subr.mxu0 0.0
    %991 = vmatpush1.msra.mxu0 0.0
    %992 = vmatprep.subr.mxu0 0.0
    %993 = vmatpush1.msra.mxu0 0.0
    %994 = vmatprep.subr.mxu0 0.0
    %995 = vmatpush1.msra.mxu0 0.0
    %996 = vmatprep.subr.mxu0 0.0
    %997 = vmatpush1.msra.mxu0 0.0
    %998 = vmatprep.subr.mxu0 0.0
    %999 = vmatpush1.msra.mxu0 0.0
    %1000 = vmatprep.subr.mxu0 0.0
    %1001 = vmatpush1.msra.mxu0 0.0
    %1002 = vmatprep.subr.mxu0 0.0
    %1003 = vmatpush1.msra.mxu0 0.0
    %1004 = vmatprep.subr.mxu0 0.0
    %1005 = vmatpush1.msra.mxu0 0.0
    %1006 = vmatprep.subr.mxu0 0.0
    %1007 = vmatpush1.msra.mxu0 0.0
    %1008 = vmatprep.subr.mxu0 0.0
    %1009 = vmatpush1.msra.mxu0 0.0
    %1010 = vmatprep.subr.mxu0 0.0
    %1011 = vmatpush1.msra.mxu0 0.0
    %1012 = vmatprep.subr.mxu0 0.0
    %1013 = vmatpush1.msra.mxu0 0.0
    %1014 = vmatprep.subr.mxu0 0.0
    %1015 = vmatpush1.msra.mxu0 0.0
    %1016 = vmatprep.subr.mxu0 0.0
    %1017 = vmatpush1.msra.mxu0 0.0
    %1018 = vmatprep.subr.mxu0 0.0
    %1019 = vmatpush1.msra.mxu0 %v17
    %1020 = vmatprep.subr.mxu0 0.0
    %1021 = vmatpush2.msra.mxu0 0.0
    %1022 = vmatprep.subr.mxu0 0.0
    %1023 = vmatpush2.msra.mxu0 0.0
    %1024 = vmatprep.subr.mxu0 0.0
    %1025 = vmatpush2.msra.mxu0 0.0
    %1026 = vmatprep.subr.mxu0 0.0
    %1027 = vmatpush2.msra.mxu0 0.0
    %1028 = vmatprep.subr.mxu0 0.0
    %1029 = vmatpush2.msra.mxu0 0.0
    %1030 = vmatprep.subr.mxu0 0.0
    %1031 = vmatpush2.msra.mxu0 0.0
    %1032 = vmatprep.subr.mxu0 0.0
    %1033 = vmatpush2.msra.mxu0 0.0
    %1034 = vmatprep.subr.mxu0 0.0
    %1035 = vmatpush2.msra.mxu0 0.0
    %1036 = vmatprep.subr.mxu0 0.0
    %1037 = vmatpush2.msra.mxu0 0.0
    %1038 = vmatprep.subr.mxu0 0.0
    %1039 = vmatpush2.msra.mxu0 0.0
    %1040 = vmatprep.subr.mxu0 0.0
    %1041 = vmatpush2.msra.mxu0 0.0
    %1042 = vmatprep.subr.mxu0 0.0
    %1043 = vmatpush2.msra.mxu0 0.0
    %1044 = vmatprep.subr.mxu0 0.0
    %1045 = vmatpush2.msra.mxu0 0.0
    %1046 = vmatprep.subr.mxu0 0.0
    %1047 = vmatpush2.msra.mxu0 0.0
    %1048 = vmatprep.subr.mxu0 0.0
    %1049 = vmatpush2.msra.mxu0 0.0
    %1050 = vmatprep.subr.mxu0 0.0
    %1051 = vmatpush2.msra.mxu0 0.0
    %1052 = vmatprep.mubr.f32.mxu0 0.0
    %1053 = vmatmul.mubr.f32.gmra.mxu0 %v986
    %v1054 = vpop.f32.mrf.mxu0
    %v1055 = vadd.f32 %v982, %v1054
    %v1056 = vpop.f32.mrf.mxu0
    %1057 = vdwg.mxu0
    %s1058 = vtos %v1055
    %v1059 = vstv %s1058
    %v1060 = vtanh.pop %v1059
    %s1061 = vtos %v1060
    %v1062 = vstv %s1061
    %v1063 = vmul.f32 %v1062, %v20
    %v1064 = vadd.f32 %v1055, %v1063
    %v1065 = vmul.f32 %v1062, %v21
    %v1066 = vadd.f32 %v1065, 0.0
    %1067 = vrot.lane.b32.xlu0 %v1064, 127
    %v1068 = vpop.permute.xlu0 %1067
    %s1069 = vtos %v1068
    %v1070 = vstv %s1069
    %v1071 = vtanh.pop %v1070
    %s1072 = vtos %v1071
    %v1073 = vstv %s1072
    %v1074 = vmul.f32 %v1073, %v20
    %v1076 = vrot.slane %v1074, 1
    %v1078 = vadd.f32 %v1064, %v1076
    %v1079 = vmul.f32 %v1073, %v21
    %v1081 = vrot.slane %v1079, 1
    %v1083 = vadd.f32 %v1066, %v1081
    %1084 = vrot.lane.b32.xlu0 %v1078, 126
    %v1085 = vpop.permute.xlu0 %1084
    %s1086 = vtos %v1085
    %v1087 = vstv %s1086
    %v1088 = vtanh.pop %v1087
    %s1089 = vtos %v1088
    %v1090 = vstv %s1089
    %v1091 = vmul.f32 %v1090, %v20
    %v1093 = vrot.slane %v1091, 2
    %v1095 = vadd.f32 %v1078, %v1093
    %v1096 = vmul.f32 %v1090, %v21
    %v1098 = vrot.slane %v1096, 2
    %v1100 = vadd.f32 %v1083, %v1098
    %1101 = vrot.lane.b32.xlu0 %v1095, 125
    %v1102 = vpop.permute.xlu0 %1101
    %s1103 = vtos %v1102
    %v1104 = vstv %s1103
    %v1105 = vtanh.pop %v1104
    %s1106 = vtos %v1105
    %v1107 = vstv %s1106
    %v1108 = vmul.f32 %v1107, %v20
    %v1110 = vrot.slane %v1108, 3
    %v1112 = vadd.f32 %v1095, %v1110
    %v1113 = vmul.f32 %v1107, %v21
    %v1115 = vrot.slane %v1113, 3
    %v1117 = vadd.f32 %v1100, %v1115
    %1118 = vrot.lane.b32.xlu0 %v1112, 124
    %v1119 = vpop.permute.xlu0 %1118
    %s1120 = vtos %v1119
    %v1121 = vstv %s1120
    %v1122 = vtanh.pop %v1121
    %s1123 = vtos %v1122
    %v1124 = vstv %s1123
    %v1125 = vmul.f32 %v1124, %v20
    %v1127 = vrot.slane %v1125, 4
    %v1129 = vadd.f32 %v1112, %v1127
    %v1130 = vmul.f32 %v1124, %v21
    %v1132 = vrot.slane %v1130, 4
    %v1134 = vadd.f32 %v1117, %v1132
    %1135 = vrot.lane.b32.xlu0 %v1129, 123
    %v1136 = vpop.permute.xlu0 %1135
    %s1137 = vtos %v1136
    %v1138 = vstv %s1137
    %v1139 = vtanh.pop %v1138
    %s1140 = vtos %v1139
    %v1141 = vstv %s1140
    %v1142 = vmul.f32 %v1141, %v20
    %v1144 = vrot.slane %v1142, 5
    %v1146 = vadd.f32 %v1129, %v1144
    %v1147 = vmul.f32 %v1141, %v21
    %v1149 = vrot.slane %v1147, 5
    %v1151 = vadd.f32 %v1134, %v1149
    %1152 = vrot.lane.b32.xlu0 %v1146, 122
    %v1153 = vpop.permute.xlu0 %1152
    %s1154 = vtos %v1153
    %v1155 = vstv %s1154
    %v1156 = vtanh.pop %v1155
    %s1157 = vtos %v1156
    %v1158 = vstv %s1157
    %v1159 = vmul.f32 %v1158, %v20
    %v1161 = vrot.slane %v1159, 6
    %v1163 = vadd.f32 %v1146, %v1161
    %v1164 = vmul.f32 %v1158, %v21
    %v1166 = vrot.slane %v1164, 6
    %v1168 = vadd.f32 %v1151, %v1166
    %1169 = vrot.lane.b32.xlu0 %v1163, 121
    %v1170 = vpop.permute.xlu0 %1169
    %s1171 = vtos %v1170
    %v1172 = vstv %s1171
    %v1173 = vtanh.pop %v1172
    %s1174 = vtos %v1173
    %v1175 = vstv %s1174
    %v1176 = vmul.f32 %v1175, %v21
    %v1178 = vrot.slane %v1176, 7
    %v1180 = vadd.f32 %v1168, %v1178
    %v1182 = vsel %vm106, %v1180, 0
    %1184 = vmatprep.subr.mxu0 0.0
    %1185 = vmatpush1.msra.mxu0 0.0
    %1186 = vmatprep.subr.mxu0 0.0
    %1187 = vmatpush1.msra.mxu0 0.0
    %1188 = vmatprep.subr.mxu0 0.0
    %1189 = vmatpush1.msra.mxu0 0.0
    %1190 = vmatprep.subr.mxu0 0.0
    %1191 = vmatpush1.msra.mxu0 0.0
    %1192 = vmatprep.subr.mxu0 0.0
    %1193 = vmatpush1.msra.mxu0 0.0
    %1194 = vmatprep.subr.mxu0 0.0
    %1195 = vmatpush1.msra.mxu0 0.0
    %1196 = vmatprep.subr.mxu0 0.0
    %1197 = vmatpush1.msra.mxu0 0.0
    %1198 = vmatprep.subr.mxu0 0.0
    %1199 = vmatpush1.msra.mxu0 0.0
    %1200 = vmatprep.subr.mxu0 0.0
    %1201 = vmatpush1.msra.mxu0 0.0
    %1202 = vmatprep.subr.mxu0 0.0
    %1203 = vmatpush1.msra.mxu0 0.0
    %1204 = vmatprep.subr.mxu0 0.0
    %1205 = vmatpush1.msra.mxu0 0.0
    %1206 = vmatprep.subr.mxu0 0.0
    %1207 = vmatpush1.msra.mxu0 0.0
    %1208 = vmatprep.subr.mxu0 0.0
    %1209 = vmatpush1.msra.mxu0 0.0
    %1210 = vmatprep.subr.mxu0 0.0
    %1211 = vmatpush1.msra.mxu0 0.0
    %1212 = vmatprep.subr.mxu0 0.0
    %1213 = vmatpush1.msra.mxu0 0.0
    %1214 = vmatprep.subr.mxu0 0.0
    %1215 = vmatpush1.msra.mxu0 %v19
    %1216 = vmatprep.subr.mxu0 0.0
    %1217 = vmatpush2.msra.mxu0 0.0
    %1218 = vmatprep.subr.mxu0 0.0
    %1219 = vmatpush2.msra.mxu0 0.0
    %1220 = vmatprep.subr.mxu0 0.0
    %1221 = vmatpush2.msra.mxu0 0.0
    %1222 = vmatprep.subr.mxu0 0.0
    %1223 = vmatpush2.msra.mxu0 0.0
    %1224 = vmatprep.subr.mxu0 0.0
    %1225 = vmatpush2.msra.mxu0 0.0
    %1226 = vmatprep.subr.mxu0 0.0
    %1227 = vmatpush2.msra.mxu0 0.0
    %1228 = vmatprep.subr.mxu0 0.0
    %1229 = vmatpush2.msra.mxu0 0.0
    %1230 = vmatprep.subr.mxu0 0.0
    %1231 = vmatpush2.msra.mxu0 0.0
    %1232 = vmatprep.subr.mxu0 0.0
    %1233 = vmatpush2.msra.mxu0 0.0
    %1234 = vmatprep.subr.mxu0 0.0
    %1235 = vmatpush2.msra.mxu0 0.0
    %1236 = vmatprep.subr.mxu0 0.0
    %1237 = vmatpush2.msra.mxu0 0.0
    %1238 = vmatprep.subr.mxu0 0.0
    %1239 = vmatpush2.msra.mxu0 0.0
    %1240 = vmatprep.subr.mxu0 0.0
    %1241 = vmatpush2.msra.mxu0 0.0
    %1242 = vmatprep.subr.mxu0 0.0
    %1243 = vmatpush2.msra.mxu0 0.0
    %1244 = vmatprep.subr.mxu0 0.0
    %1245 = vmatpush2.msra.mxu0 0.0
    %1246 = vmatprep.subr.mxu0 0.0
    %1247 = vmatpush2.msra.mxu0 0.0
    %1248 = vmatprep.mubr.f32.mxu0 0.0
    %1249 = vmatmul.mubr.f32.gmra.mxu0 %v1182
    %v1250 = vpop.f32.mrf.mxu0
    %v1251 = vadd.f32 0.0, %v1250
    %v1252 = vpop.f32.mrf.mxu0
    %1253 = vdwg.mxu0
    %1255 = vrot.lane.b32.xlu0 %v1251, 8
    %v1256 = vpop.permute.xlu0 %1255
    %v1258 = vadd.f32 %v1055, %v1256
    %v1259 = vadd.f32 %v1258, %v383
    %v1260 = vxor.u32 %v1259, 2147483648
    %v1261 = vmul.f32 %v1260, 1.442695
    %v1262 = vpow.pop %v1261
    %v1263 = vadd.f32 %v1262, 1.0
    %v1264 = vrcp.pop %v1263
    %v1265 = vmul.f32 1.0, %v1264
    %v1266 = vmul.f32 %v1265, 4.8
    %v1267 = vadd.f32 %v1266, 8.0
    %1269 = vrot.lane.b32.xlu0 %v1267, 112
    %v1270 = vpop.permute.xlu0 %1269
    %1272 = vst.msk [vmem:[%s3 + $0x3] sm:$0x1] %vm398, %v1270
    %v1273 = vld [vmem:[#allocation2 + $0x4] sm:$0x1]
    %1275 = vrot.lane.b32.xlu0 %v1258, 120
    %v1276 = vpop.permute.xlu0 %1275
    %v1277 = vsel %vm106, %v1276, 0
    %1279 = vmatprep.subr.mxu0 0.0
    %1280 = vmatpush1.msra.mxu0 0.0
    %1281 = vmatprep.subr.mxu0 0.0
    %1282 = vmatpush1.msra.mxu0 0.0
    %1283 = vmatprep.subr.mxu0 0.0
    %1284 = vmatpush1.msra.mxu0 0.0
    %1285 = vmatprep.subr.mxu0 0.0
    %1286 = vmatpush1.msra.mxu0 0.0
    %1287 = vmatprep.subr.mxu0 0.0
    %1288 = vmatpush1.msra.mxu0 0.0
    %1289 = vmatprep.subr.mxu0 0.0
    %1290 = vmatpush1.msra.mxu0 0.0
    %1291 = vmatprep.subr.mxu0 0.0
    %1292 = vmatpush1.msra.mxu0 0.0
    %1293 = vmatprep.subr.mxu0 0.0
    %1294 = vmatpush1.msra.mxu0 0.0
    %1295 = vmatprep.subr.mxu0 0.0
    %1296 = vmatpush1.msra.mxu0 0.0
    %1297 = vmatprep.subr.mxu0 0.0
    %1298 = vmatpush1.msra.mxu0 0.0
    %1299 = vmatprep.subr.mxu0 0.0
    %1300 = vmatpush1.msra.mxu0 0.0
    %1301 = vmatprep.subr.mxu0 0.0
    %1302 = vmatpush1.msra.mxu0 0.0
    %1303 = vmatprep.subr.mxu0 0.0
    %1304 = vmatpush1.msra.mxu0 0.0
    %1305 = vmatprep.subr.mxu0 0.0
    %1306 = vmatpush1.msra.mxu0 0.0
    %1307 = vmatprep.subr.mxu0 0.0
    %1308 = vmatpush1.msra.mxu0 0.0
    %1309 = vmatprep.subr.mxu0 0.0
    %1310 = vmatpush1.msra.mxu0 %v17
    %1311 = vmatprep.subr.mxu0 0.0
    %1312 = vmatpush2.msra.mxu0 0.0
    %1313 = vmatprep.subr.mxu0 0.0
    %1314 = vmatpush2.msra.mxu0 0.0
    %1315 = vmatprep.subr.mxu0 0.0
    %1316 = vmatpush2.msra.mxu0 0.0
    %1317 = vmatprep.subr.mxu0 0.0
    %1318 = vmatpush2.msra.mxu0 0.0
    %1319 = vmatprep.subr.mxu0 0.0
    %1320 = vmatpush2.msra.mxu0 0.0
    %1321 = vmatprep.subr.mxu0 0.0
    %1322 = vmatpush2.msra.mxu0 0.0
    %1323 = vmatprep.subr.mxu0 0.0
    %1324 = vmatpush2.msra.mxu0 0.0
    %1325 = vmatprep.subr.mxu0 0.0
    %1326 = vmatpush2.msra.mxu0 0.0
    %1327 = vmatprep.subr.mxu0 0.0
    %1328 = vmatpush2.msra.mxu0 0.0
    %1329 = vmatprep.subr.mxu0 0.0
    %1330 = vmatpush2.msra.mxu0 0.0
    %1331 = vmatprep.subr.mxu0 0.0
    %1332 = vmatpush2.msra.mxu0 0.0
    %1333 = vmatprep.subr.mxu0 0.0
    %1334 = vmatpush2.msra.mxu0 0.0
    %1335 = vmatprep.subr.mxu0 0.0
    %1336 = vmatpush2.msra.mxu0 0.0
    %1337 = vmatprep.subr.mxu0 0.0
    %1338 = vmatpush2.msra.mxu0 0.0
    %1339 = vmatprep.subr.mxu0 0.0
    %1340 = vmatpush2.msra.mxu0 0.0
    %1341 = vmatprep.subr.mxu0 0.0
    %1342 = vmatpush2.msra.mxu0 0.0
    %1343 = vmatprep.mubr.f32.mxu0 0.0
    %1344 = vmatmul.mubr.f32.gmra.mxu0 %v1277
    %v1345 = vpop.f32.mrf.mxu0
    %v1346 = vadd.f32 %v1273, %v1345
    %v1347 = vpop.f32.mrf.mxu0
    %1348 = vdwg.mxu0
    %s1349 = vtos %v1346
    %v1350 = vstv %s1349
    %v1351 = vtanh.pop %v1350
    %s1352 = vtos %v1351
    %v1353 = vstv %s1352
    %v1354 = vmul.f32 %v1353, %v20
    %v1355 = vadd.f32 %v1346, %v1354
    %v1356 = vmul.f32 %v1353, %v21
    %v1357 = vadd.f32 %v1356, 0.0
    %1358 = vrot.lane.b32.xlu0 %v1355, 127
    %v1359 = vpop.permute.xlu0 %1358
    %s1360 = vtos %v1359
    %v1361 = vstv %s1360
    %v1362 = vtanh.pop %v1361
    %s1363 = vtos %v1362
    %v1364 = vstv %s1363
    %v1365 = vmul.f32 %v1364, %v20
    %v1367 = vrot.slane %v1365, 1
    %v1369 = vadd.f32 %v1355, %v1367
    %v1370 = vmul.f32 %v1364, %v21
    %v1372 = vrot.slane %v1370, 1
    %v1374 = vadd.f32 %v1357, %v1372
    %1375 = vrot.lane.b32.xlu0 %v1369, 126
    %v1376 = vpop.permute.xlu0 %1375
    %s1377 = vtos %v1376
    %v1378 = vstv %s1377
    %v1379 = vtanh.pop %v1378
    %s1380 = vtos %v1379
    %v1381 = vstv %s1380
    %v1382 = vmul.f32 %v1381, %v20
    %v1384 = vrot.slane %v1382, 2
    %v1386 = vadd.f32 %v1369, %v1384
    %v1387 = vmul.f32 %v1381, %v21
    %v1389 = vrot.slane %v1387, 2
    %v1391 = vadd.f32 %v1374, %v1389
    %1392 = vrot.lane.b32.xlu0 %v1386, 125
    %v1393 = vpop.permute.xlu0 %1392
    %s1394 = vtos %v1393
    %v1395 = vstv %s1394
    %v1396 = vtanh.pop %v1395
    %s1397 = vtos %v1396
    %v1398 = vstv %s1397
    %v1399 = vmul.f32 %v1398, %v20
    %v1401 = vrot.slane %v1399, 3
    %v1403 = vadd.f32 %v1386, %v1401
    %v1404 = vmul.f32 %v1398, %v21
    %v1406 = vrot.slane %v1404, 3
    %v1408 = vadd.f32 %v1391, %v1406
    %1409 = vrot.lane.b32.xlu0 %v1403, 124
    %v1410 = vpop.permute.xlu0 %1409
    %s1411 = vtos %v1410
    %v1412 = vstv %s1411
    %v1413 = vtanh.pop %v1412
    %s1414 = vtos %v1413
    %v1415 = vstv %s1414
    %v1416 = vmul.f32 %v1415, %v20
    %v1418 = vrot.slane %v1416, 4
    %v1420 = vadd.f32 %v1403, %v1418
    %v1421 = vmul.f32 %v1415, %v21
    %v1423 = vrot.slane %v1421, 4
    %v1425 = vadd.f32 %v1408, %v1423
    %1426 = vrot.lane.b32.xlu0 %v1420, 123
    %v1427 = vpop.permute.xlu0 %1426
    %s1428 = vtos %v1427
    %v1429 = vstv %s1428
    %v1430 = vtanh.pop %v1429
    %s1431 = vtos %v1430
    %v1432 = vstv %s1431
    %v1433 = vmul.f32 %v1432, %v20
    %v1435 = vrot.slane %v1433, 5
    %v1437 = vadd.f32 %v1420, %v1435
    %v1438 = vmul.f32 %v1432, %v21
    %v1440 = vrot.slane %v1438, 5
    %v1442 = vadd.f32 %v1425, %v1440
    %1443 = vrot.lane.b32.xlu0 %v1437, 122
    %v1444 = vpop.permute.xlu0 %1443
    %s1445 = vtos %v1444
    %v1446 = vstv %s1445
    %v1447 = vtanh.pop %v1446
    %s1448 = vtos %v1447
    %v1449 = vstv %s1448
    %v1450 = vmul.f32 %v1449, %v20
    %v1452 = vrot.slane %v1450, 6
    %v1454 = vadd.f32 %v1437, %v1452
    %v1455 = vmul.f32 %v1449, %v21
    %v1457 = vrot.slane %v1455, 6
    %v1459 = vadd.f32 %v1442, %v1457
    %1460 = vrot.lane.b32.xlu0 %v1454, 121
    %v1461 = vpop.permute.xlu0 %1460
    %s1462 = vtos %v1461
    %v1463 = vstv %s1462
    %v1464 = vtanh.pop %v1463
    %s1465 = vtos %v1464
    %v1466 = vstv %s1465
    %v1467 = vmul.f32 %v1466, %v21
    %v1469 = vrot.slane %v1467, 7
    %v1471 = vadd.f32 %v1459, %v1469
    %v1473 = vsel %vm106, %v1471, 0
    %1475 = vmatprep.subr.mxu0 0.0
    %1476 = vmatpush1.msra.mxu0 0.0
    %1477 = vmatprep.subr.mxu0 0.0
    %1478 = vmatpush1.msra.mxu0 0.0
    %1479 = vmatprep.subr.mxu0 0.0
    %1480 = vmatpush1.msra.mxu0 0.0
    %1481 = vmatprep.subr.mxu0 0.0
    %1482 = vmatpush1.msra.mxu0 0.0
    %1483 = vmatprep.subr.mxu0 0.0
    %1484 = vmatpush1.msra.mxu0 0.0
    %1485 = vmatprep.subr.mxu0 0.0
    %1486 = vmatpush1.msra.mxu0 0.0
    %1487 = vmatprep.subr.mxu0 0.0
    %1488 = vmatpush1.msra.mxu0 0.0
    %1489 = vmatprep.subr.mxu0 0.0
    %1490 = vmatpush1.msra.mxu0 0.0
    %1491 = vmatprep.subr.mxu0 0.0
    %1492 = vmatpush1.msra.mxu0 0.0
    %1493 = vmatprep.subr.mxu0 0.0
    %1494 = vmatpush1.msra.mxu0 0.0
    %1495 = vmatprep.subr.mxu0 0.0
    %1496 = vmatpush1.msra.mxu0 0.0
    %1497 = vmatprep.subr.mxu0 0.0
    %1498 = vmatpush1.msra.mxu0 0.0
    %1499 = vmatprep.subr.mxu0 0.0
    %1500 = vmatpush1.msra.mxu0 0.0
    %1501 = vmatprep.subr.mxu0 0.0
    %1502 = vmatpush1.msra.mxu0 0.0
    %1503 = vmatprep.subr.mxu0 0.0
    %1504 = vmatpush1.msra.mxu0 0.0
    %1505 = vmatprep.subr.mxu0 0.0
    %1506 = vmatpush1.msra.mxu0 %v19
    %1507 = vmatprep.subr.mxu0 0.0
    %1508 = vmatpush2.msra.mxu0 0.0
    %1509 = vmatprep.subr.mxu0 0.0
    %1510 = vmatpush2.msra.mxu0 0.0
    %1511 = vmatprep.subr.mxu0 0.0
    %1512 = vmatpush2.msra.mxu0 0.0
    %1513 = vmatprep.subr.mxu0 0.0
    %1514 = vmatpush2.msra.mxu0 0.0
    %1515 = vmatprep.subr.mxu0 0.0
    %1516 = vmatpush2.msra.mxu0 0.0
    %1517 = vmatprep.subr.mxu0 0.0
    %1518 = vmatpush2.msra.mxu0 0.0
    %1519 = vmatprep.subr.mxu0 0.0
    %1520 = vmatpush2.msra.mxu0 0.0
    %1521 = vmatprep.subr.mxu0 0.0
    %1522 = vmatpush2.msra.mxu0 0.0
    %1523 = vmatprep.subr.mxu0 0.0
    %1524 = vmatpush2.msra.mxu0 0.0
    %1525 = vmatprep.subr.mxu0 0.0
    %1526 = vmatpush2.msra.mxu0 0.0
    %1527 = vmatprep.subr.mxu0 0.0
    %1528 = vmatpush2.msra.mxu0 0.0
    %1529 = vmatprep.subr.mxu0 0.0
    %1530 = vmatpush2.msra.mxu0 0.0
    %1531 = vmatprep.subr.mxu0 0.0
    %1532 = vmatpush2.msra.mxu0 0.0
    %1533 = vmatprep.subr.mxu0 0.0
    %1534 = vmatpush2.msra.mxu0 0.0
    %1535 = vmatprep.subr.mxu0 0.0
    %1536 = vmatpush2.msra.mxu0 0.0
    %1537 = vmatprep.subr.mxu0 0.0
    %1538 = vmatpush2.msra.mxu0 0.0
    %1539 = vmatprep.mubr.f32.mxu0 0.0
    %1540 = vmatmul.mubr.f32.gmra.mxu0 %v1473
    %v1541 = vpop.f32.mrf.mxu0
    %v1542 = vadd.f32 0.0, %v1541
    %v1543 = vpop.f32.mrf.mxu0
    %1544 = vdwg.mxu0
    %1546 = vrot.lane.b32.xlu0 %v1542, 8
    %v1547 = vpop.permute.xlu0 %1546
    %v1549 = vadd.f32 %v1346, %v1547
    %v1550 = vadd.f32 %v1549, %v383
    %v1551 = vxor.u32 %v1550, 2147483648
    %v1552 = vmul.f32 %v1551, 1.442695
    %v1553 = vpow.pop %v1552
    %v1554 = vadd.f32 %v1553, 1.0
    %v1555 = vrcp.pop %v1554
    %v1556 = vmul.f32 1.0, %v1555
    %v1557 = vmul.f32 %v1556, 4.8
    %v1558 = vadd.f32 %v1557, 8.0
    %1560 = vrot.lane.b32.xlu0 %v1558, 112
    %v1561 = vpop.permute.xlu0 %1560
    %1563 = vst.msk [vmem:[%s3 + $0x4] sm:$0x1] %vm398, %v1561
    %v1564 = vld [vmem:[#allocation2 + $0x5] sm:$0x1]
    %1566 = vrot.lane.b32.xlu0 %v1549, 120
    %v1567 = vpop.permute.xlu0 %1566
    %v1568 = vsel %vm106, %v1567, 0
    %1570 = vmatprep.subr.mxu0 0.0
    %1571 = vmatpush1.msra.mxu0 0.0
    %1572 = vmatprep.subr.mxu0 0.0
    %1573 = vmatpush1.msra.mxu0 0.0
    %1574 = vmatprep.subr.mxu0 0.0
    %1575 = vmatpush1.msra.mxu0 0.0
    %1576 = vmatprep.subr.mxu0 0.0
    %1577 = vmatpush1.msra.mxu0 0.0
    %1578 = vmatprep.subr.mxu0 0.0
    %1579 = vmatpush1.msra.mxu0 0.0
    %1580 = vmatprep.subr.mxu0 0.0
    %1581 = vmatpush1.msra.mxu0 0.0
    %1582 = vmatprep.subr.mxu0 0.0
    %1583 = vmatpush1.msra.mxu0 0.0
    %1584 = vmatprep.subr.mxu0 0.0
    %1585 = vmatpush1.msra.mxu0 0.0
    %1586 = vmatprep.subr.mxu0 0.0
    %1587 = vmatpush1.msra.mxu0 0.0
    %1588 = vmatprep.subr.mxu0 0.0
    %1589 = vmatpush1.msra.mxu0 0.0
    %1590 = vmatprep.subr.mxu0 0.0
    %1591 = vmatpush1.msra.mxu0 0.0
    %1592 = vmatprep.subr.mxu0 0.0
    %1593 = vmatpush1.msra.mxu0 0.0
    %1594 = vmatprep.subr.mxu0 0.0
    %1595 = vmatpush1.msra.mxu0 0.0
    %1596 = vmatprep.subr.mxu0 0.0
    %1597 = vmatpush1.msra.mxu0 0.0
    %1598 = vmatprep.subr.mxu0 0.0
    %1599 = vmatpush1.msra.mxu0 0.0
    %1600 = vmatprep.subr.mxu0 0.0
    %1601 = vmatpush1.msra.mxu0 %v17
    %1602 = vmatprep.subr.mxu0 0.0
    %1603 = vmatpush2.msra.mxu0 0.0
    %1604 = vmatprep.subr.mxu0 0.0
    %1605 = vmatpush2.msra.mxu0 0.0
    %1606 = vmatprep.subr.mxu0 0.0
    %1607 = vmatpush2.msra.mxu0 0.0
    %1608 = vmatprep.subr.mxu0 0.0
    %1609 = vmatpush2.msra.mxu0 0.0
    %1610 = vmatprep.subr.mxu0 0.0
    %1611 = vmatpush2.msra.mxu0 0.0
    %1612 = vmatprep.subr.mxu0 0.0
    %1613 = vmatpush2.msra.mxu0 0.0
    %1614 = vmatprep.subr.mxu0 0.0
    %1615 = vmatpush2.msra.mxu0 0.0
    %1616 = vmatprep.subr.mxu0 0.0
    %1617 = vmatpush2.msra.mxu0 0.0
    %1618 = vmatprep.subr.mxu0 0.0
    %1619 = vmatpush2.msra.mxu0 0.0
    %1620 = vmatprep.subr.mxu0 0.0
    %1621 = vmatpush2.msra.mxu0 0.0
    %1622 = vmatprep.subr.mxu0 0.0
    %1623 = vmatpush2.msra.mxu0 0.0
    %1624 = vmatprep.subr.mxu0 0.0
    %1625 = vmatpush2.msra.mxu0 0.0
    %1626 = vmatprep.subr.mxu0 0.0
    %1627 = vmatpush2.msra.mxu0 0.0
    %1628 = vmatprep.subr.mxu0 0.0
    %1629 = vmatpush2.msra.mxu0 0.0
    %1630 = vmatprep.subr.mxu0 0.0
    %1631 = vmatpush2.msra.mxu0 0.0
    %1632 = vmatprep.subr.mxu0 0.0
    %1633 = vmatpush2.msra.mxu0 0.0
    %1634 = vmatprep.mubr.f32.mxu0 0.0
    %1635 = vmatmul.mubr.f32.gmra.mxu0 %v1568
    %v1636 = vpop.f32.mrf.mxu0
    %v1637 = vadd.f32 %v1564, %v1636
    %v1638 = vpop.f32.mrf.mxu0
    %1639 = vdwg.mxu0
    %s1640 = vtos %v1637
    %v1641 = vstv %s1640
    %v1642 = vtanh.pop %v1641
    %s1643 = vtos %v1642
    %v1644 = vstv %s1643
    %v1645 = vmul.f32 %v1644, %v20
    %v1646 = vadd.f32 %v1637, %v1645
    %v1647 = vmul.f32 %v1644, %v21
    %v1648 = vadd.f32 %v1647, 0.0
    %1649 = vrot.lane.b32.xlu0 %v1646, 127
    %v1650 = vpop.permute.xlu0 %1649
    %s1651 = vtos %v1650
    %v1652 = vstv %s1651
    %v1653 = vtanh.pop %v1652
    %s1654 = vtos %v1653
    %v1655 = vstv %s1654
    %v1656 = vmul.f32 %v1655, %v20
    %v1658 = vrot.slane %v1656, 1
    %v1660 = vadd.f32 %v1646, %v1658
    %v1661 = vmul.f32 %v1655, %v21
    %v1663 = vrot.slane %v1661, 1
    %v1665 = vadd.f32 %v1648, %v1663
    %1666 = vrot.lane.b32.xlu0 %v1660, 126
    %v1667 = vpop.permute.xlu0 %1666
    %s1668 = vtos %v1667
    %v1669 = vstv %s1668
    %v1670 = vtanh.pop %v1669
    %s1671 = vtos %v1670
    %v1672 = vstv %s1671
    %v1673 = vmul.f32 %v1672, %v20
    %v1675 = vrot.slane %v1673, 2
    %v1677 = vadd.f32 %v1660, %v1675
    %v1678 = vmul.f32 %v1672, %v21
    %v1680 = vrot.slane %v1678, 2
    %v1682 = vadd.f32 %v1665, %v1680
    %1683 = vrot.lane.b32.xlu0 %v1677, 125
    %v1684 = vpop.permute.xlu0 %1683
    %s1685 = vtos %v1684
    %v1686 = vstv %s1685
    %v1687 = vtanh.pop %v1686
    %s1688 = vtos %v1687
    %v1689 = vstv %s1688
    %v1690 = vmul.f32 %v1689, %v20
    %v1692 = vrot.slane %v1690, 3
    %v1694 = vadd.f32 %v1677, %v1692
    %v1695 = vmul.f32 %v1689, %v21
    %v1697 = vrot.slane %v1695, 3
    %v1699 = vadd.f32 %v1682, %v1697
    %1700 = vrot.lane.b32.xlu0 %v1694, 124
    %v1701 = vpop.permute.xlu0 %1700
    %s1702 = vtos %v1701
    %v1703 = vstv %s1702
    %v1704 = vtanh.pop %v1703
    %s1705 = vtos %v1704
    %v1706 = vstv %s1705
    %v1707 = vmul.f32 %v1706, %v20
    %v1709 = vrot.slane %v1707, 4
    %v1711 = vadd.f32 %v1694, %v1709
    %v1712 = vmul.f32 %v1706, %v21
    %v1714 = vrot.slane %v1712, 4
    %v1716 = vadd.f32 %v1699, %v1714
    %1717 = vrot.lane.b32.xlu0 %v1711, 123
    %v1718 = vpop.permute.xlu0 %1717
    %s1719 = vtos %v1718
    %v1720 = vstv %s1719
    %v1721 = vtanh.pop %v1720
    %s1722 = vtos %v1721
    %v1723 = vstv %s1722
    %v1724 = vmul.f32 %v1723, %v20
    %v1726 = vrot.slane %v1724, 5
    %v1728 = vadd.f32 %v1711, %v1726
    %v1729 = vmul.f32 %v1723, %v21
    %v1731 = vrot.slane %v1729, 5
    %v1733 = vadd.f32 %v1716, %v1731
    %1734 = vrot.lane.b32.xlu0 %v1728, 122
    %v1735 = vpop.permute.xlu0 %1734
    %s1736 = vtos %v1735
    %v1737 = vstv %s1736
    %v1738 = vtanh.pop %v1737
    %s1739 = vtos %v1738
    %v1740 = vstv %s1739
    %v1741 = vmul.f32 %v1740, %v20
    %v1743 = vrot.slane %v1741, 6
    %v1745 = vadd.f32 %v1728, %v1743
    %v1746 = vmul.f32 %v1740, %v21
    %v1748 = vrot.slane %v1746, 6
    %v1750 = vadd.f32 %v1733, %v1748
    %1751 = vrot.lane.b32.xlu0 %v1745, 121
    %v1752 = vpop.permute.xlu0 %1751
    %s1753 = vtos %v1752
    %v1754 = vstv %s1753
    %v1755 = vtanh.pop %v1754
    %s1756 = vtos %v1755
    %v1757 = vstv %s1756
    %v1758 = vmul.f32 %v1757, %v21
    %v1760 = vrot.slane %v1758, 7
    %v1762 = vadd.f32 %v1750, %v1760
    %v1764 = vsel %vm106, %v1762, 0
    %1766 = vmatprep.subr.mxu0 0.0
    %1767 = vmatpush1.msra.mxu0 0.0
    %1768 = vmatprep.subr.mxu0 0.0
    %1769 = vmatpush1.msra.mxu0 0.0
    %1770 = vmatprep.subr.mxu0 0.0
    %1771 = vmatpush1.msra.mxu0 0.0
    %1772 = vmatprep.subr.mxu0 0.0
    %1773 = vmatpush1.msra.mxu0 0.0
    %1774 = vmatprep.subr.mxu0 0.0
    %1775 = vmatpush1.msra.mxu0 0.0
    %1776 = vmatprep.subr.mxu0 0.0
    %1777 = vmatpush1.msra.mxu0 0.0
    %1778 = vmatprep.subr.mxu0 0.0
    %1779 = vmatpush1.msra.mxu0 0.0
    %1780 = vmatprep.subr.mxu0 0.0
    %1781 = vmatpush1.msra.mxu0 0.0
    %1782 = vmatprep.subr.mxu0 0.0
    %1783 = vmatpush1.msra.mxu0 0.0
    %1784 = vmatprep.subr.mxu0 0.0
    %1785 = vmatpush1.msra.mxu0 0.0
    %1786 = vmatprep.subr.mxu0 0.0
    %1787 = vmatpush1.msra.mxu0 0.0
    %1788 = vmatprep.subr.mxu0 0.0
    %1789 = vmatpush1.msra.mxu0 0.0
    %1790 = vmatprep.subr.mxu0 0.0
    %1791 = vmatpush1.msra.mxu0 0.0
    %1792 = vmatprep.subr.mxu0 0.0
    %1793 = vmatpush1.msra.mxu0 0.0
    %1794 = vmatprep.subr.mxu0 0.0
    %1795 = vmatpush1.msra.mxu0 0.0
    %1796 = vmatprep.subr.mxu0 0.0
    %1797 = vmatpush1.msra.mxu0 %v19
    %1798 = vmatprep.subr.mxu0 0.0
    %1799 = vmatpush2.msra.mxu0 0.0
    %1800 = vmatprep.subr.mxu0 0.0
    %1801 = vmatpush2.msra.mxu0 0.0
    %1802 = vmatprep.subr.mxu0 0.0
    %1803 = vmatpush2.msra.mxu0 0.0
    %1804 = vmatprep.subr.mxu0 0.0
    %1805 = vmatpush2.msra.mxu0 0.0
    %1806 = vmatprep.subr.mxu0 0.0
    %1807 = vmatpush2.msra.mxu0 0.0
    %1808 = vmatprep.subr.mxu0 0.0
    %1809 = vmatpush2.msra.mxu0 0.0
    %1810 = vmatprep.subr.mxu0 0.0
    %1811 = vmatpush2.msra.mxu0 0.0
    %1812 = vmatprep.subr.mxu0 0.0
    %1813 = vmatpush2.msra.mxu0 0.0
    %1814 = vmatprep.subr.mxu0 0.0
    %1815 = vmatpush2.msra.mxu0 0.0
    %1816 = vmatprep.subr.mxu0 0.0
    %1817 = vmatpush2.msra.mxu0 0.0
    %1818 = vmatprep.subr.mxu0 0.0
    %1819 = vmatpush2.msra.mxu0 0.0
    %1820 = vmatprep.subr.mxu0 0.0
    %1821 = vmatpush2.msra.mxu0 0.0
    %1822 = vmatprep.subr.mxu0 0.0
    %1823 = vmatpush2.msra.mxu0 0.0
    %1824 = vmatprep.subr.mxu0 0.0
    %1825 = vmatpush2.msra.mxu0 0.0
    %1826 = vmatprep.subr.mxu0 0.0
    %1827 = vmatpush2.msra.mxu0 0.0
    %1828 = vmatprep.subr.mxu0 0.0
    %1829 = vmatpush2.msra.mxu0 0.0
    %1830 = vmatprep.mubr.f32.mxu0 0.0
    %1831 = vmatmul.mubr.f32.gmra.mxu0 %v1764
    %v1832 = vpop.f32.mrf.mxu0
    %v1833 = vadd.f32 0.0, %v1832
    %v1834 = vpop.f32.mrf.mxu0
    %1835 = vdwg.mxu0
    %1837 = vrot.lane.b32.xlu0 %v1833, 8
    %v1838 = vpop.permute.xlu0 %1837
    %v1840 = vadd.f32 %v1637, %v1838
    %v1841 = vadd.f32 %v1840, %v383
    %v1842 = vxor.u32 %v1841, 2147483648
    %v1843 = vmul.f32 %v1842, 1.442695
    %v1844 = vpow.pop %v1843
    %v1845 = vadd.f32 %v1844, 1.0
    %v1846 = vrcp.pop %v1845
    %v1847 = vmul.f32 1.0, %v1846
    %v1848 = vmul.f32 %v1847, 4.8
    %v1849 = vadd.f32 %v1848, 8.0
    %1851 = vrot.lane.b32.xlu0 %v1849, 112
    %v1852 = vpop.permute.xlu0 %1851
    %1854 = vst.msk [vmem:[%s3 + $0x5] sm:$0x1] %vm398, %v1852
    %v1855 = vld [vmem:[#allocation2 + $0x6] sm:$0x1]
    %1857 = vrot.lane.b32.xlu0 %v1840, 120
    %v1858 = vpop.permute.xlu0 %1857
    %v1859 = vsel %vm106, %v1858, 0
    %1861 = vmatprep.subr.mxu0 0.0
    %1862 = vmatpush1.msra.mxu0 0.0
    %1863 = vmatprep.subr.mxu0 0.0
    %1864 = vmatpush1.msra.mxu0 0.0
    %1865 = vmatprep.subr.mxu0 0.0
    %1866 = vmatpush1.msra.mxu0 0.0
    %1867 = vmatprep.subr.mxu0 0.0
    %1868 = vmatpush1.msra.mxu0 0.0
    %1869 = vmatprep.subr.mxu0 0.0
    %1870 = vmatpush1.msra.mxu0 0.0
    %1871 = vmatprep.subr.mxu0 0.0
    %1872 = vmatpush1.msra.mxu0 0.0
    %1873 = vmatprep.subr.mxu0 0.0
    %1874 = vmatpush1.msra.mxu0 0.0
    %1875 = vmatprep.subr.mxu0 0.0
    %1876 = vmatpush1.msra.mxu0 0.0
    %1877 = vmatprep.subr.mxu0 0.0
    %1878 = vmatpush1.msra.mxu0 0.0
    %1879 = vmatprep.subr.mxu0 0.0
    %1880 = vmatpush1.msra.mxu0 0.0
    %1881 = vmatprep.subr.mxu0 0.0
    %1882 = vmatpush1.msra.mxu0 0.0
    %1883 = vmatprep.subr.mxu0 0.0
    %1884 = vmatpush1.msra.mxu0 0.0
    %1885 = vmatprep.subr.mxu0 0.0
    %1886 = vmatpush1.msra.mxu0 0.0
    %1887 = vmatprep.subr.mxu0 0.0
    %1888 = vmatpush1.msra.mxu0 0.0
    %1889 = vmatprep.subr.mxu0 0.0
    %1890 = vmatpush1.msra.mxu0 0.0
    %1891 = vmatprep.subr.mxu0 0.0
    %1892 = vmatpush1.msra.mxu0 %v17
    %1893 = vmatprep.subr.mxu0 0.0
    %1894 = vmatpush2.msra.mxu0 0.0
    %1895 = vmatprep.subr.mxu0 0.0
    %1896 = vmatpush2.msra.mxu0 0.0
    %1897 = vmatprep.subr.mxu0 0.0
    %1898 = vmatpush2.msra.mxu0 0.0
    %1899 = vmatprep.subr.mxu0 0.0
    %1900 = vmatpush2.msra.mxu0 0.0
    %1901 = vmatprep.subr.mxu0 0.0
    %1902 = vmatpush2.msra.mxu0 0.0
    %1903 = vmatprep.subr.mxu0 0.0
    %1904 = vmatpush2.msra.mxu0 0.0
    %1905 = vmatprep.subr.mxu0 0.0
    %1906 = vmatpush2.msra.mxu0 0.0
    %1907 = vmatprep.subr.mxu0 0.0
    %1908 = vmatpush2.msra.mxu0 0.0
    %1909 = vmatprep.subr.mxu0 0.0
    %1910 = vmatpush2.msra.mxu0 0.0
    %1911 = vmatprep.subr.mxu0 0.0
    %1912 = vmatpush2.msra.mxu0 0.0
    %1913 = vmatprep.subr.mxu0 0.0
    %1914 = vmatpush2.msra.mxu0 0.0
    %1915 = vmatprep.subr.mxu0 0.0
    %1916 = vmatpush2.msra.mxu0 0.0
    %1917 = vmatprep.subr.mxu0 0.0
    %1918 = vmatpush2.msra.mxu0 0.0
    %1919 = vmatprep.subr.mxu0 0.0
    %1920 = vmatpush2.msra.mxu0 0.0
    %1921 = vmatprep.subr.mxu0 0.0
    %1922 = vmatpush2.msra.mxu0 0.0
    %1923 = vmatprep.subr.mxu0 0.0
    %1924 = vmatpush2.msra.mxu0 0.0
    %1925 = vmatprep.mubr.f32.mxu0 0.0
    %1926 = vmatmul.mubr.f32.gmra.mxu0 %v1859
    %v1927 = vpop.f32.mrf.mxu0
    %v1928 = vadd.f32 %v1855, %v1927
    %v1929 = vpop.f32.mrf.mxu0
    %1930 = vdwg.mxu0
    %s1931 = vtos %v1928
    %v1932 = vstv %s1931
    %v1933 = vtanh.pop %v1932
    %s1934 = vtos %v1933
    %v1935 = vstv %s1934
    %v1936 = vmul.f32 %v1935, %v20
    %v1937 = vadd.f32 %v1928, %v1936
    %v1938 = vmul.f32 %v1935, %v21
    %v1939 = vadd.f32 %v1938, 0.0
    %1940 = vrot.lane.b32.xlu0 %v1937, 127
    %v1941 = vpop.permute.xlu0 %1940
    %s1942 = vtos %v1941
    %v1943 = vstv %s1942
    %v1944 = vtanh.pop %v1943
    %s1945 = vtos %v1944
    %v1946 = vstv %s1945
    %v1947 = vmul.f32 %v1946, %v20
    %v1949 = vrot.slane %v1947, 1
    %v1951 = vadd.f32 %v1937, %v1949
    %v1952 = vmul.f32 %v1946, %v21
    %v1954 = vrot.slane %v1952, 1
    %v1956 = vadd.f32 %v1939, %v1954
    %1957 = vrot.lane.b32.xlu0 %v1951, 126
    %v1958 = vpop.permute.xlu0 %1957
    %s1959 = vtos %v1958
    %v1960 = vstv %s1959
    %v1961 = vtanh.pop %v1960
    %s1962 = vtos %v1961
    %v1963 = vstv %s1962
    %v1964 = vmul.f32 %v1963, %v20
    %v1966 = vrot.slane %v1964, 2
    %v1968 = vadd.f32 %v1951, %v1966
    %v1969 = vmul.f32 %v1963, %v21
    %v1971 = vrot.slane %v1969, 2
    %v1973 = vadd.f32 %v1956, %v1971
    %1974 = vrot.lane.b32.xlu0 %v1968, 125
    %v1975 = vpop.permute.xlu0 %1974
    %s1976 = vtos %v1975
    %v1977 = vstv %s1976
    %v1978 = vtanh.pop %v1977
    %s1979 = vtos %v1978
    %v1980 = vstv %s1979
    %v1981 = vmul.f32 %v1980, %v20
    %v1983 = vrot.slane %v1981, 3
    %v1985 = vadd.f32 %v1968, %v1983
    %v1986 = vmul.f32 %v1980, %v21
    %v1988 = vrot.slane %v1986, 3
    %v1990 = vadd.f32 %v1973, %v1988
    %1991 = vrot.lane.b32.xlu0 %v1985, 124
    %v1992 = vpop.permute.xlu0 %1991
    %s1993 = vtos %v1992
    %v1994 = vstv %s1993
    %v1995 = vtanh.pop %v1994
    %s1996 = vtos %v1995
    %v1997 = vstv %s1996
    %v1998 = vmul.f32 %v1997, %v20
    %v2000 = vrot.slane %v1998, 4
    %v2002 = vadd.f32 %v1985, %v2000
    %v2003 = vmul.f32 %v1997, %v21
    %v2005 = vrot.slane %v2003, 4
    %v2007 = vadd.f32 %v1990, %v2005
    %2008 = vrot.lane.b32.xlu0 %v2002, 123
    %v2009 = vpop.permute.xlu0 %2008
    %s2010 = vtos %v2009
    %v2011 = vstv %s2010
    %v2012 = vtanh.pop %v2011
    %s2013 = vtos %v2012
    %v2014 = vstv %s2013
    %v2015 = vmul.f32 %v2014, %v20
    %v2017 = vrot.slane %v2015, 5
    %v2019 = vadd.f32 %v2002, %v2017
    %v2020 = vmul.f32 %v2014, %v21
    %v2022 = vrot.slane %v2020, 5
    %v2024 = vadd.f32 %v2007, %v2022
    %2025 = vrot.lane.b32.xlu0 %v2019, 122
    %v2026 = vpop.permute.xlu0 %2025
    %s2027 = vtos %v2026
    %v2028 = vstv %s2027
    %v2029 = vtanh.pop %v2028
    %s2030 = vtos %v2029
    %v2031 = vstv %s2030
    %v2032 = vmul.f32 %v2031, %v20
    %v2034 = vrot.slane %v2032, 6
    %v2036 = vadd.f32 %v2019, %v2034
    %v2037 = vmul.f32 %v2031, %v21
    %v2039 = vrot.slane %v2037, 6
    %v2041 = vadd.f32 %v2024, %v2039
    %2042 = vrot.lane.b32.xlu0 %v2036, 121
    %v2043 = vpop.permute.xlu0 %2042
    %s2044 = vtos %v2043
    %v2045 = vstv %s2044
    %v2046 = vtanh.pop %v2045
    %s2047 = vtos %v2046
    %v2048 = vstv %s2047
    %v2049 = vmul.f32 %v2048, %v21
    %v2051 = vrot.slane %v2049, 7
    %v2053 = vadd.f32 %v2041, %v2051
    %v2055 = vsel %vm106, %v2053, 0
    %2057 = vmatprep.subr.mxu0 0.0
    %2058 = vmatpush1.msra.mxu0 0.0
    %2059 = vmatprep.subr.mxu0 0.0
    %2060 = vmatpush1.msra.mxu0 0.0
    %2061 = vmatprep.subr.mxu0 0.0
    %2062 = vmatpush1.msra.mxu0 0.0
    %2063 = vmatprep.subr.mxu0 0.0
    %2064 = vmatpush1.msra.mxu0 0.0
    %2065 = vmatprep.subr.mxu0 0.0
    %2066 = vmatpush1.msra.mxu0 0.0
    %2067 = vmatprep.subr.mxu0 0.0
    %2068 = vmatpush1.msra.mxu0 0.0
    %2069 = vmatprep.subr.mxu0 0.0
    %2070 = vmatpush1.msra.mxu0 0.0
    %2071 = vmatprep.subr.mxu0 0.0
    %2072 = vmatpush1.msra.mxu0 0.0
    %2073 = vmatprep.subr.mxu0 0.0
    %2074 = vmatpush1.msra.mxu0 0.0
    %2075 = vmatprep.subr.mxu0 0.0
    %2076 = vmatpush1.msra.mxu0 0.0
    %2077 = vmatprep.subr.mxu0 0.0
    %2078 = vmatpush1.msra.mxu0 0.0
    %2079 = vmatprep.subr.mxu0 0.0
    %2080 = vmatpush1.msra.mxu0 0.0
    %2081 = vmatprep.subr.mxu0 0.0
    %2082 = vmatpush1.msra.mxu0 0.0
    %2083 = vmatprep.subr.mxu0 0.0
    %2084 = vmatpush1.msra.mxu0 0.0
    %2085 = vmatprep.subr.mxu0 0.0
    %2086 = vmatpush1.msra.mxu0 0.0
    %2087 = vmatprep.subr.mxu0 0.0
    %2088 = vmatpush1.msra.mxu0 %v19
    %2089 = vmatprep.subr.mxu0 0.0
    %2090 = vmatpush2.msra.mxu0 0.0
    %2091 = vmatprep.subr.mxu0 0.0
    %2092 = vmatpush2.msra.mxu0 0.0
    %2093 = vmatprep.subr.mxu0 0.0
    %2094 = vmatpush2.msra.mxu0 0.0
    %2095 = vmatprep.subr.mxu0 0.0
    %2096 = vmatpush2.msra.mxu0 0.0
    %2097 = vmatprep.subr.mxu0 0.0
    %2098 = vmatpush2.msra.mxu0 0.0
    %2099 = vmatprep.subr.mxu0 0.0
    %2100 = vmatpush2.msra.mxu0 0.0
    %2101 = vmatprep.subr.mxu0 0.0
    %2102 = vmatpush2.msra.mxu0 0.0
    %2103 = vmatprep.subr.mxu0 0.0
    %2104 = vmatpush2.msra.mxu0 0.0
    %2105 = vmatprep.subr.mxu0 0.0
    %2106 = vmatpush2.msra.mxu0 0.0
    %2107 = vmatprep.subr.mxu0 0.0
    %2108 = vmatpush2.msra.mxu0 0.0
    %2109 = vmatprep.subr.mxu0 0.0
    %2110 = vmatpush2.msra.mxu0 0.0
    %2111 = vmatprep.subr.mxu0 0.0
    %2112 = vmatpush2.msra.mxu0 0.0
    %2113 = vmatprep.subr.mxu0 0.0
    %2114 = vmatpush2.msra.mxu0 0.0
    %2115 = vmatprep.subr.mxu0 0.0
    %2116 = vmatpush2.msra.mxu0 0.0
    %2117 = vmatprep.subr.mxu0 0.0
    %2118 = vmatpush2.msra.mxu0 0.0
    %2119 = vmatprep.subr.mxu0 0.0
    %2120 = vmatpush2.msra.mxu0 0.0
    %2121 = vmatprep.mubr.f32.mxu0 0.0
    %2122 = vmatmul.mubr.f32.gmra.mxu0 %v2055
    %v2123 = vpop.f32.mrf.mxu0
    %v2124 = vadd.f32 0.0, %v2123
    %v2125 = vpop.f32.mrf.mxu0
    %2126 = vdwg.mxu0
    %2128 = vrot.lane.b32.xlu0 %v2124, 8
    %v2129 = vpop.permute.xlu0 %2128
    %v2131 = vadd.f32 %v1928, %v2129
    %v2132 = vadd.f32 %v2131, %v383
    %v2133 = vxor.u32 %v2132, 2147483648
    %v2134 = vmul.f32 %v2133, 1.442695
    %v2135 = vpow.pop %v2134
    %v2136 = vadd.f32 %v2135, 1.0
    %v2137 = vrcp.pop %v2136
    %v2138 = vmul.f32 1.0, %v2137
    %v2139 = vmul.f32 %v2138, 4.8
    %v2140 = vadd.f32 %v2139, 8.0
    %2142 = vrot.lane.b32.xlu0 %v2140, 112
    %v2143 = vpop.permute.xlu0 %2142
    %2145 = vst.msk [vmem:[%s3 + $0x6] sm:$0x1] %vm398, %v2143
    %v2146 = vld [vmem:[#allocation2 + $0x7] sm:$0x1]
    %2148 = vrot.lane.b32.xlu0 %v2131, 120
    %v2149 = vpop.permute.xlu0 %2148
    %v2150 = vsel %vm106, %v2149, 0
    %2152 = vmatprep.subr.mxu0 0.0
    %2153 = vmatpush1.msra.mxu0 0.0
    %2154 = vmatprep.subr.mxu0 0.0
    %2155 = vmatpush1.msra.mxu0 0.0
    %2156 = vmatprep.subr.mxu0 0.0
    %2157 = vmatpush1.msra.mxu0 0.0
    %2158 = vmatprep.subr.mxu0 0.0
    %2159 = vmatpush1.msra.mxu0 0.0
    %2160 = vmatprep.subr.mxu0 0.0
    %2161 = vmatpush1.msra.mxu0 0.0
    %2162 = vmatprep.subr.mxu0 0.0
    %2163 = vmatpush1.msra.mxu0 0.0
    %2164 = vmatprep.subr.mxu0 0.0
    %2165 = vmatpush1.msra.mxu0 0.0
    %2166 = vmatprep.subr.mxu0 0.0
    %2167 = vmatpush1.msra.mxu0 0.0
    %2168 = vmatprep.subr.mxu0 0.0
    %2169 = vmatpush1.msra.mxu0 0.0
    %2170 = vmatprep.subr.mxu0 0.0
    %2171 = vmatpush1.msra.mxu0 0.0
    %2172 = vmatprep.subr.mxu0 0.0
    %2173 = vmatpush1.msra.mxu0 0.0
    %2174 = vmatprep.subr.mxu0 0.0
    %2175 = vmatpush1.msra.mxu0 0.0
    %2176 = vmatprep.subr.mxu0 0.0
    %2177 = vmatpush1.msra.mxu0 0.0
    %2178 = vmatprep.subr.mxu0 0.0
    %2179 = vmatpush1.msra.mxu0 0.0
    %2180 = vmatprep.subr.mxu0 0.0
    %2181 = vmatpush1.msra.mxu0 0.0
    %2182 = vmatprep.subr.mxu0 0.0
    %2183 = vmatpush1.msra.mxu0 %v17
    %2184 = vmatprep.subr.mxu0 0.0
    %2185 = vmatpush2.msra.mxu0 0.0
    %2186 = vmatprep.subr.mxu0 0.0
    %2187 = vmatpush2.msra.mxu0 0.0
    %2188 = vmatprep.subr.mxu0 0.0
    %2189 = vmatpush2.msra.mxu0 0.0
    %2190 = vmatprep.subr.mxu0 0.0
    %2191 = vmatpush2.msra.mxu0 0.0
    %2192 = vmatprep.subr.mxu0 0.0
    %2193 = vmatpush2.msra.mxu0 0.0
    %2194 = vmatprep.subr.mxu0 0.0
    %2195 = vmatpush2.msra.mxu0 0.0
    %2196 = vmatprep.subr.mxu0 0.0
    %2197 = vmatpush2.msra.mxu0 0.0
    %2198 = vmatprep.subr.mxu0 0.0
    %2199 = vmatpush2.msra.mxu0 0.0
    %2200 = vmatprep.subr.mxu0 0.0
    %2201 = vmatpush2.msra.mxu0 0.0
    %2202 = vmatprep.subr.mxu0 0.0
    %2203 = vmatpush2.msra.mxu0 0.0
    %2204 = vmatprep.subr.mxu0 0.0
    %2205 = vmatpush2.msra.mxu0 0.0
    %2206 = vmatprep.subr.mxu0 0.0
    %2207 = vmatpush2.msra.mxu0 0.0
    %2208 = vmatprep.subr.mxu0 0.0
    %2209 = vmatpush2.msra.mxu0 0.0
    %2210 = vmatprep.subr.mxu0 0.0
    %2211 = vmatpush2.msra.mxu0 0.0
    %2212 = vmatprep.subr.mxu0 0.0
    %2213 = vmatpush2.msra.mxu0 0.0
    %2214 = vmatprep.subr.mxu0 0.0
    %2215 = vmatpush2.msra.mxu0 0.0
    %2216 = vmatprep.mubr.f32.mxu0 0.0
    %2217 = vmatmul.mubr.f32.gmra.mxu0 %v2150
    %v2218 = vpop.f32.mrf.mxu0
    %v2219 = vadd.f32 %v2146, %v2218
    %v2220 = vpop.f32.mrf.mxu0
    %2221 = vdwg.mxu0
    %s2222 = vtos %v2219
    %v2223 = vstv %s2222
    %v2224 = vtanh.pop %v2223
    %s2225 = vtos %v2224
    %v2226 = vstv %s2225
    %v2227 = vmul.f32 %v2226, %v20
    %v2228 = vadd.f32 %v2219, %v2227
    %v2229 = vmul.f32 %v2226, %v21
    %v2230 = vadd.f32 %v2229, 0.0
    %2231 = vrot.lane.b32.xlu0 %v2228, 127
    %v2232 = vpop.permute.xlu0 %2231
    %s2233 = vtos %v2232
    %v2234 = vstv %s2233
    %v2235 = vtanh.pop %v2234
    %s2236 = vtos %v2235
    %v2237 = vstv %s2236
    %v2238 = vmul.f32 %v2237, %v20
    %v2240 = vrot.slane %v2238, 1
    %v2242 = vadd.f32 %v2228, %v2240
    %v2243 = vmul.f32 %v2237, %v21
    %v2245 = vrot.slane %v2243, 1
    %v2247 = vadd.f32 %v2230, %v2245
    %2248 = vrot.lane.b32.xlu0 %v2242, 126
    %v2249 = vpop.permute.xlu0 %2248
    %s2250 = vtos %v2249
    %v2251 = vstv %s2250
    %v2252 = vtanh.pop %v2251
    %s2253 = vtos %v2252
    %v2254 = vstv %s2253
    %v2255 = vmul.f32 %v2254, %v20
    %v2257 = vrot.slane %v2255, 2
    %v2259 = vadd.f32 %v2242, %v2257
    %v2260 = vmul.f32 %v2254, %v21
    %v2262 = vrot.slane %v2260, 2
    %v2264 = vadd.f32 %v2247, %v2262
    %2265 = vrot.lane.b32.xlu0 %v2259, 125
    %v2266 = vpop.permute.xlu0 %2265
    %s2267 = vtos %v2266
    %v2268 = vstv %s2267
    %v2269 = vtanh.pop %v2268
    %s2270 = vtos %v2269
    %v2271 = vstv %s2270
    %v2272 = vmul.f32 %v2271, %v20
    %v2274 = vrot.slane %v2272, 3
    %v2276 = vadd.f32 %v2259, %v2274
    %v2277 = vmul.f32 %v2271, %v21
    %v2279 = vrot.slane %v2277, 3
    %v2281 = vadd.f32 %v2264, %v2279
    %2282 = vrot.lane.b32.xlu0 %v2276, 124
    %v2283 = vpop.permute.xlu0 %2282
    %s2284 = vtos %v2283
    %v2285 = vstv %s2284
    %v2286 = vtanh.pop %v2285
    %s2287 = vtos %v2286
    %v2288 = vstv %s2287
    %v2289 = vmul.f32 %v2288, %v20
    %v2291 = vrot.slane %v2289, 4
    %v2293 = vadd.f32 %v2276, %v2291
    %v2294 = vmul.f32 %v2288, %v21
    %v2296 = vrot.slane %v2294, 4
    %v2298 = vadd.f32 %v2281, %v2296
    %2299 = vrot.lane.b32.xlu0 %v2293, 123
    %v2300 = vpop.permute.xlu0 %2299
    %s2301 = vtos %v2300
    %v2302 = vstv %s2301
    %v2303 = vtanh.pop %v2302
    %s2304 = vtos %v2303
    %v2305 = vstv %s2304
    %v2306 = vmul.f32 %v2305, %v20
    %v2308 = vrot.slane %v2306, 5
    %v2310 = vadd.f32 %v2293, %v2308
    %v2311 = vmul.f32 %v2305, %v21
    %v2313 = vrot.slane %v2311, 5
    %v2315 = vadd.f32 %v2298, %v2313
    %2316 = vrot.lane.b32.xlu0 %v2310, 122
    %v2317 = vpop.permute.xlu0 %2316
    %s2318 = vtos %v2317
    %v2319 = vstv %s2318
    %v2320 = vtanh.pop %v2319
    %s2321 = vtos %v2320
    %v2322 = vstv %s2321
    %v2323 = vmul.f32 %v2322, %v20
    %v2325 = vrot.slane %v2323, 6
    %v2327 = vadd.f32 %v2310, %v2325
    %v2328 = vmul.f32 %v2322, %v21
    %v2330 = vrot.slane %v2328, 6
    %v2332 = vadd.f32 %v2315, %v2330
    %2333 = vrot.lane.b32.xlu0 %v2327, 121
    %v2334 = vpop.permute.xlu0 %2333
    %s2335 = vtos %v2334
    %v2336 = vstv %s2335
    %v2337 = vtanh.pop %v2336
    %s2338 = vtos %v2337
    %v2339 = vstv %s2338
    %v2340 = vmul.f32 %v2339, %v21
    %v2342 = vrot.slane %v2340, 7
    %v2344 = vadd.f32 %v2332, %v2342
    %v2346 = vsel %vm106, %v2344, 0
    %2348 = vmatprep.subr.mxu0 0.0
    %2349 = vmatpush1.msra.mxu0 0.0
    %2350 = vmatprep.subr.mxu0 0.0
    %2351 = vmatpush1.msra.mxu0 0.0
    %2352 = vmatprep.subr.mxu0 0.0
    %2353 = vmatpush1.msra.mxu0 0.0
    %2354 = vmatprep.subr.mxu0 0.0
    %2355 = vmatpush1.msra.mxu0 0.0
    %2356 = vmatprep.subr.mxu0 0.0
    %2357 = vmatpush1.msra.mxu0 0.0
    %2358 = vmatprep.subr.mxu0 0.0
    %2359 = vmatpush1.msra.mxu0 0.0
    %2360 = vmatprep.subr.mxu0 0.0
    %2361 = vmatpush1.msra.mxu0 0.0
    %2362 = vmatprep.subr.mxu0 0.0
    %2363 = vmatpush1.msra.mxu0 0.0
    %2364 = vmatprep.subr.mxu0 0.0
    %2365 = vmatpush1.msra.mxu0 0.0
    %2366 = vmatprep.subr.mxu0 0.0
    %2367 = vmatpush1.msra.mxu0 0.0
    %2368 = vmatprep.subr.mxu0 0.0
    %2369 = vmatpush1.msra.mxu0 0.0
    %2370 = vmatprep.subr.mxu0 0.0
    %2371 = vmatpush1.msra.mxu0 0.0
    %2372 = vmatprep.subr.mxu0 0.0
    %2373 = vmatpush1.msra.mxu0 0.0
    %2374 = vmatprep.subr.mxu0 0.0
    %2375 = vmatpush1.msra.mxu0 0.0
    %2376 = vmatprep.subr.mxu0 0.0
    %2377 = vmatpush1.msra.mxu0 0.0
    %2378 = vmatprep.subr.mxu0 0.0
    %2379 = vmatpush1.msra.mxu0 %v19
    %2380 = vmatprep.subr.mxu0 0.0
    %2381 = vmatpush2.msra.mxu0 0.0
    %2382 = vmatprep.subr.mxu0 0.0
    %2383 = vmatpush2.msra.mxu0 0.0
    %2384 = vmatprep.subr.mxu0 0.0
    %2385 = vmatpush2.msra.mxu0 0.0
    %2386 = vmatprep.subr.mxu0 0.0
    %2387 = vmatpush2.msra.mxu0 0.0
    %2388 = vmatprep.subr.mxu0 0.0
    %2389 = vmatpush2.msra.mxu0 0.0
    %2390 = vmatprep.subr.mxu0 0.0
    %2391 = vmatpush2.msra.mxu0 0.0
    %2392 = vmatprep.subr.mxu0 0.0
    %2393 = vmatpush2.msra.mxu0 0.0
    %2394 = vmatprep.subr.mxu0 0.0
    %2395 = vmatpush2.msra.mxu0 0.0
    %2396 = vmatprep.subr.mxu0 0.0
    %2397 = vmatpush2.msra.mxu0 0.0
    %2398 = vmatprep.subr.mxu0 0.0
    %2399 = vmatpush2.msra.mxu0 0.0
    %2400 = vmatprep.subr.mxu0 0.0
    %2401 = vmatpush2.msra.mxu0 0.0
    %2402 = vmatprep.subr.mxu0 0.0
    %2403 = vmatpush2.msra.mxu0 0.0
    %2404 = vmatprep.subr.mxu0 0.0
    %2405 = vmatpush2.msra.mxu0 0.0
    %2406 = vmatprep.subr.mxu0 0.0
    %2407 = vmatpush2.msra.mxu0 0.0
    %2408 = vmatprep.subr.mxu0 0.0
    %2409 = vmatpush2.msra.mxu0 0.0
    %2410 = vmatprep.subr.mxu0 0.0
    %2411 = vmatpush2.msra.mxu0 0.0
    %2412 = vmatprep.mubr.f32.mxu0 0.0
    %2413 = vmatmul.mubr.f32.gmra.mxu0 %v2346
    %v2414 = vpop.f32.mrf.mxu0
    %v2415 = vadd.f32 0.0, %v2414
    %v2416 = vpop.f32.mrf.mxu0
    %2417 = vdwg.mxu0
    %2419 = vrot.lane.b32.xlu0 %v2415, 8
    %v2420 = vpop.permute.xlu0 %2419
    %v2422 = vadd.f32 %v2219, %v2420
    %v2423 = vadd.f32 %v2422, %v383
    %v2424 = vxor.u32 %v2423, 2147483648
    %v2425 = vmul.f32 %v2424, 1.442695
    %v2426 = vpow.pop %v2425
    %v2427 = vadd.f32 %v2426, 1.0
    %v2428 = vrcp.pop %v2427
    %v2429 = vmul.f32 1.0, %v2428
    %v2430 = vmul.f32 %v2429, 4.8
    %v2431 = vadd.f32 %v2430, 8.0
    %2433 = vrot.lane.b32.xlu0 %v2431, 112
    %v2434 = vpop.permute.xlu0 %2433
    %2436 = vst.msk [vmem:[%s3 + $0x7] sm:$0x1] %vm398, %v2434
    %2438 = vrot.lane.b32.xlu0 %v2422, 120
    %v2439 = vpop.permute.xlu0 %2438
    %vm2441 = vcmask 57344
    %2442 = vst.msk [vmem:[#allocation3] sm:$0x1] %vm2441, %v2439
    // Predicated region
    $region14: #{tpu_custom_call.1} parent=1 // pred_check
      _
    $region15: #{tpu_custom_call.1} parent=1 // pred_check_branch
      %2444 = sbr.rel (0) target = $region17
    $region16: #{tpu_custom_call.1} parent=1 // pred_region
      _
    $region17: #{tpu_custom_call.1} parent=1 // pred_fallthru
      _
    // Predicated region
    $region18: #{tpu_custom_call.1} parent=1 // pred_check
      _
    $region19: #{tpu_custom_call.1} parent=1 // pred_check_branch
      %2446 = sbr.rel (0) target = $region21
    $region20: #{tpu_custom_call.1} parent=1 // pred_region
      %s2448 = ssub.s32 16, 16
      %2449 = vsyncadd [#allocation4], %s2448
      %s2451 = sshll.u32 [#allocation3], 4
      %s2452 = int_to_ptr.vmem [resolvable:$true] %s2451
      %2454 = dma.vmem_to_hbm [thread:$0]  %s2452, 16, %s4, [#allocation4]
    $region21: #{tpu_custom_call.1} parent=1 // pred_fallthru
      _
    // Predicated region
    $region22: #{tpu_custom_call.1} parent=1 // pred_check
      _
    $region23: #{tpu_custom_call.1} parent=1 // pred_check_branch
      %2456 = sbr.rel (0) target = $region25
    $region24: #{tpu_custom_call.1} parent=1 // pred_region
      _
    $region25: #{tpu_custom_call.1} parent=1 // pred_fallthru
      _
    // Predicated region
    $region26: #{tpu_custom_call.1} parent=1 // pred_check
      _
    $region27: #{tpu_custom_call.1} parent=1 // pred_check_branch
      %2458 = sbr.rel (0) target = $region29
    $region28: #{tpu_custom_call.1} parent=1 // pred_region
      %2459 = dma.done [#allocation4], 16
    $region29: #{tpu_custom_call.1} parent=1 // pred_fallthru
      _
    %2460 = vsyncpa [#allocation4], 1

</llo_original>
